<compile_context>
chip_gen: v6e
topology: v6e:2x2x1
jax: 0.10.0
libtpu: 0.0.40
codegen_flags: <defaults>
</compile_context>

<pallas_src>
import numpy as np
import jax
import jax.numpy as jnp
from jax.experimental import pallas as pl
from jax.experimental.pallas import tpu as pltpu


# ----------------------------------------------------------------------------
# Helpers
# ----------------------------------------------------------------------------

def _choose_tile(n):
    """Largest friendly divisor of n for the point (sublane) axis."""
    for t in (512, 256, 128, 64, 32, 16):
        if n % t == 0:
            return t
    return n  # fall back to a full-extent block


def _w_spec(w):
    """BlockSpec for a weight: shared (Cin,Cout) or per-batch (B,Cin,Cout)."""
    if w.ndim == 3:
        return pl.BlockSpec((1,) + tuple(w.shape[1:]), lambda b, n: (b, 0, 0))
    return pl.BlockSpec(tuple(w.shape), lambda b, n: (0, 0))


# ----------------------------------------------------------------------------
# Fused per-point MLP -> channel max (-> FC head) kernel
# ----------------------------------------------------------------------------

def _make_fused_kernel(n_conv, has_fc):
    """Kernel: (linear+ReLU) x n_conv per point, running channel-max over the
    N grid axis, optional 3-layer FC head applied on the last N tile."""

    def kernel(*refs):
        x_ref = refs[0]
        pos = 1
        conv = [(refs[pos + 2 * i], refs[pos + 2 * i + 1]) for i in range(n_conv)]
        pos += 2 * n_conv
        fc = []
        if has_fc:
            fc = [(refs[pos + 2 * i], refs[pos + 2 * i + 1]) for i in range(3)]
            pos += 6
        o_ref = refs[pos]
        max_ref = refs[pos + 1]

        ni = pl.program_id(1)

        @pl.when(ni == 0)
        def _init():
            max_ref[...] = jnp.full(max_ref.shape, -jnp.inf, max_ref.dtype)

        # Per-point MLP on this tile of points (matmuls bf16, epilogue f32).
        h = x_ref[0].astype(jnp.bfloat16)                      # (TN, Cin)
        act = None
        for w_ref, b_ref in conv:
            w = w_ref[0] if len(w_ref.shape) == 3 else w_ref[...]
            y = jnp.dot(h, w, preferred_element_type=jnp.float32) + b_ref[...]
            act = jnp.maximum(y, 0.0)                          # f32 (TN, Cout)
            h = act.astype(jnp.bfloat16)

        # Running channel-wise max over point tiles.
        max_ref[...] = jnp.maximum(max_ref[...],
                                   jnp.max(act, axis=0, keepdims=True))

        @pl.when(ni == pl.num_programs(1) - 1)
        def _finalize():
            g = max_ref[...]                                   # (1, C_last) f32
            if has_fc:
                hh = g.astype(jnp.bfloat16)
                out = g
                for li, (w_ref, b_ref) in enumerate(fc):
                    out = (jnp.dot(hh, w_ref[...],
                                   preferred_element_type=jnp.float32)
                           + b_ref[...])
                    if li < 2:
                        out = jnp.maximum(out, 0.0)
                    hh = out.astype(jnp.bfloat16)
                o_ref[0] = out
            else:
                o_ref[0] = g

    return kernel


def fused_point_mlp_max(x, conv_layers, fc_layers=None):
    """x: (B, N, Cin).  conv_layers: [(W, b)] with W (Cin,Cout) shared or
    (B,Cin,Cout) per-batch (bf16), b (1,Cout) f32.  Applies linear+ReLU per
    point for each conv layer, channel-wise max over all N points, then
    optionally a 3-layer FC head (ReLU on the first two).  Returns (B, C_out)
    f32."""
    B, N, cin = x.shape
    tn = _choose_tile(N)
    n_tiles = N // tn

    c_last = conv_layers[-1][0].shape[-1]
    c_out = fc_layers[-1][0].shape[-1] if fc_layers else c_last

    in_specs = [pl.BlockSpec((1, tn, cin), lambda b, n: (b, n, 0))]
    operands = [x]
    for w, bias in list(conv_layers) + list(fc_layers or []):
        in_specs.append(_w_spec(w))
        in_specs.append(pl.BlockSpec(tuple(bias.shape), lambda b, n: (0, 0)))
        operands.extend([w, bias])

    out = pl.pallas_call(
        _make_fused_kernel(len(conv_layers), fc_layers is not None),
        out_shape=jax.ShapeDtypeStruct((B, 1, c_out), jnp.float32),
        grid=(B, n_tiles),
        in_specs=in_specs,
        out_specs=pl.BlockSpec((1, 1, c_out), lambda b, n: (b, 0, 0)),
        scratch_shapes=[pltpu.VMEM((1, c_last), jnp.float32)],
        compiler_params=pltpu.CompilerParams(
            dimension_semantics=("parallel", "arbitrary")),
    )(*operands)
    return out[:, 0, :]


# ----------------------------------------------------------------------------
# Small kernels only needed on the non-global (per-point feature) path
# ----------------------------------------------------------------------------

def _pointwise_kernel(x_ref, w_ref, b_ref, o_ref):
    w = w_ref[0] if len(w_ref.shape) == 3 else w_ref[...]
    y = jnp.dot(x_ref[0].astype(jnp.bfloat16), w,
                preferred_element_type=jnp.float32) + b_ref[...]
    o_ref[0] = jnp.maximum(y, 0.0).astype(o_ref.dtype)


def pointwise_linear_relu(x, w, bias, out_dtype=jnp.bfloat16):
    """x: (B,N,Cin); w: (Cin,Cout) or (B,Cin,Cout); bias: (1,Cout)."""
    B, N, cin = x.shape
    cout = w.shape[-1]
    tn = _choose_tile(N)
    return pl.pallas_call(
        _pointwise_kernel,
        out_shape=jax.ShapeDtypeStruct((B, N, cout), out_dtype),
        grid=(B, N // tn),
        in_specs=[
            pl.BlockSpec((1, tn, cin), lambda b, n: (b, n, 0)),
            _w_spec(w),
            pl.BlockSpec(tuple(bias.shape), lambda b, n: (0, 0)),
        ],
        out_specs=pl.BlockSpec((1, tn, cout), lambda b, n: (b, n, 0)),
        compiler_params=pltpu.CompilerParams(
            dimension_semantics=("parallel", "parallel")),
    )(x, w, bias)


def _bmm_kernel(x_ref, m_ref, o_ref):
    o_ref[0] = jnp.dot(x_ref[0], m_ref[0],
                       preferred_element_type=jnp.float32).astype(o_ref.dtype)


def bmm(x, m, out_dtype=jnp.float32):
    """x: (B,N,K) ; m: (B,K,K2) -> (B,N,K2)."""
    B, N, K = x.shape
    K2 = m.shape[2]
    tn = _choose_tile(N)
    return pl.pallas_call(
        _bmm_kernel,
        out_shape=jax.ShapeDtypeStruct((B, N, K2), out_dtype),
        grid=(B, N // tn),
        in_specs=[
            pl.BlockSpec((1, tn, K), lambda b, n: (b, n, 0)),
            pl.BlockSpec((1, K, K2), lambda b, n: (b, 0, 0)),
        ],
        out_specs=pl.BlockSpec((1, tn, K2), lambda b, n: (b, n, 0)),
        compiler_params=pltpu.CompilerParams(
            dimension_semantics=("parallel", "parallel")),
    )(x, m)


# ----------------------------------------------------------------------------
# Parameters (deterministic synthetic init; BatchNorm folded, eval mode)
# ----------------------------------------------------------------------------

def _fold_bn(W, b, gamma, beta, mean, var, eps=1e-5):
    s = gamma / jnp.sqrt(var + eps)
    return W * s[None, :], s * (b - mean) + beta


def init_mlp(key, channels, last_no_bn=False):
    """Returns list of (W (Cin,Cout) bf16, b (1,Cout) f32) with BN folded."""
    params = []
    for i in range(1, len(channels)):
        key, k1, k2 = jax.random.split(key, 3)
        cin, cout = channels[i - 1], channels[i]
        W = jax.random.normal(k1, (cin, cout), jnp.float32) * (1.0 / np.sqrt(cin))
        b = jax.random.normal(k2, (cout,), jnp.float32) * 0.01
        is_last = i == len(channels) - 1
        if not (last_no_bn and is_last):
            gamma = jnp.ones((cout,), jnp.float32)
            beta = jnp.zeros((cout,), jnp.float32)
            mean = jnp.zeros((cout,), jnp.float32)
            var = jnp.ones((cout,), jnp.float32)
            W, b = _fold_bn(W, b, gamma, beta, mean, var)
        params.append((W.astype(jnp.bfloat16), b.reshape(1, cout)))
    return params, key


def init_params(key, cfg, in_c):
    stn_in = 6 if cfg.use_normals else 3
    params = {}
    params["stn_conv"], key = init_mlp(key, [stn_in, 64, 128, 1024])
    params["stn_fc"], key = init_mlp(key, [1024, 512, 256, 9], last_no_bn=True)
    params["conv"], key = init_mlp(key, [in_c, 64, 128, 1024])
    if cfg.feature_transform:
        params["fstn_conv"], key = init_mlp(key, [64, 64, 128, 1024])
        params["fstn_fc"], key = init_mlp(key, [1024, 512, 256, 64 * 64],
                                          last_no_bn=True)
    return params


# ----------------------------------------------------------------------------
# Module forward passes
# ----------------------------------------------------------------------------

def stn_forward(x_bnc, conv_params, fc_params, k):
    """STN3d / STNkd: ONE fused kernel (conv stack + max pool + FC head),
    then add identity in XLA (tiny)."""
    flat = fused_point_mlp_max(x_bnc, conv_params, fc_params)   # (B, k*k)
    eye = jnp.eye(k, dtype=jnp.float32).reshape(1, k * k)
    return (flat + eye).reshape(-1, k, k)                       # (B, k, k)


def pointnet_encoder_forward(x_bcn, params, cfg):
    """x_bcn: (B, C, N) in PyTorch Conv1d layout."""
    B, C, N = x_bcn.shape
    x_bnc = jnp.transpose(x_bcn, (0, 2, 1)).astype(jnp.bfloat16)   # (B, N, C)

    # Input spatial transform network (single fused kernel).
    trans = stn_forward(x_bnc, params["stn_conv"], params["stn_fc"], 3)

    # Fold bmm(coords, trans) into conv1's weight: per-batch W1'.
    w1, b1 = params["conv"][0]                      # (C,64) bf16, (1,64) f32
    w1f = w1.astype(jnp.float32)
    w1_coords = jnp.einsum("bij,jk->bik", trans, w1f[:3])          # (B,3,64)
    if cfg.use_normals:
        w1_rest = jnp.broadcast_to(w1f[3:][None], (B, C - 3, w1f.shape[1]))
        w1p = jnp.concatenate([w1_coords, w1_rest], axis=1)
    else:
        w1p = w1_coords
    w1p = w1p.astype(jnp.bfloat16)                  # (B, C, 64)

    w2, b2 = params["conv"][1]
    w3, b3 = params["conv"][2]
    trans_feat = None

    if cfg.global_feature:
        if cfg.feature_transform:
            # fstn recomputes h1 = relu(x @ W1' + b1) in-kernel (K<=6 matmul)
            # so the (B,N,64) activation never touches HBM.
            fstn_conv = [(w1p, b1)] + list(params["fstn_conv"])
            trans_feat = stn_forward(x_bnc, fstn_conv, params["fstn_fc"], 64)
            # Fold bmm(h1, trans_feat) into conv2's weight (per batch).
            w2_eff = jnp.einsum("bij,jk->bik", trans_feat,
                                w2.astype(jnp.float32)).astype(jnp.bfloat16)
        else:
            w2_eff = w2
        tail = [(w1p, b1), (w2_eff, b2), (w3, b3)]
        gmax = fused_point_mlp_max(x_bnc, tail)                 # (B, 1024)
        return gmax, trans, trans_feat

    # Non-global path: per-point features must be materialized.
    h1 = pointwise_linear_relu(x_bnc, w1p, b1)                  # (B, N, 64) bf16
    if cfg.feature_transform:
        trans_feat = stn_forward(h1, params["fstn_conv"], params["fstn_fc"], 64)
        pointfeat = bmm(h1, trans_feat.astype(jnp.bfloat16))    # (B, N, 64) f32
    else:
        pointfeat = h1.astype(jnp.float32)
    gmax = fused_point_mlp_max(pointfeat, [(w2, b2), (w3, b3)])  # (B, 1024)
    rep = jnp.broadcast_to(gmax[:, None, :], (B, N, gmax.shape[-1]))
    cat = jnp.concatenate([rep, pointfeat], axis=2)              # (B, N, 1088)
    # TODO(synk): emit the concatenated (B,1088,N) slab lane-dense from a
    # Pallas kernel instead of XLA concat+transpose.
    return jnp.transpose(cat, (0, 2, 1)), trans, trans_feat      # (B, 1088, N)


# ----------------------------------------------------------------------------
# Demo
# ----------------------------------------------------------------------------

class Cfg:
    def __init__(self, **kw):
        self.__dict__.update(kw)


if __name__ == "__main__":
    cfg = Cfg(use_normals=False, feature_transform=True,
              global_feature=True, inplace=True)

    B, in_c, N = 2, 3, 128
    key = jax.random.PRNGKey(0)
    key, kx = jax.random.split(key)
    params = init_params(key, cfg, in_c)
    x = jax.random.normal(kx, (B, in_c, N), jnp.float32)   # PyTorch NCL layout

    global_feat, trans, trans_feat = pointnet_encoder_forward(x, params, cfg)
    jax.block_until_ready((global_feat, trans, trans_feat))

    assert global_feat.shape == (B, 1024)
    assert trans.shape == (B, 3, 3)
    assert trans_feat.shape == (B, 64, 64)
    print("KERNEL_OK")
</pallas_src>

<mosaic_0001>
module attributes {stable_mosaic.version = 11 : i64} {
  func.func @kernel(%arg0: i32, %arg1: i32, %arg2: memref<1x128x3xbf16, #tpu.memory_space<vmem>>, %arg3: memref<3x64xbf16, #tpu.memory_space<vmem>>, %arg4: memref<1x64xf32, #tpu.memory_space<vmem>>, %arg5: memref<64x128xbf16, #tpu.memory_space<vmem>>, %arg6: memref<1x128xf32, #tpu.memory_space<vmem>>, %arg7: memref<128x1024xbf16, #tpu.memory_space<vmem>>, %arg8: memref<1x1024xf32, #tpu.memory_space<vmem>>, %arg9: memref<1024x512xbf16, #tpu.memory_space<vmem>>, %arg10: memref<1x512xf32, #tpu.memory_space<vmem>>, %arg11: memref<512x256xbf16, #tpu.memory_space<vmem>>, %arg12: memref<1x256xf32, #tpu.memory_space<vmem>>, %arg13: memref<256x9xbf16, #tpu.memory_space<vmem>>, %arg14: memref<1x9xf32, #tpu.memory_space<vmem>>, %arg15: memref<1x1x9xf32, #tpu.memory_space<vmem>>, %arg16: memref<1x1024xf32, #tpu.memory_space<vmem>>) attributes {dimension_semantics = [#tpu.dimension_semantics<parallel>, #tpu.dimension_semantics<arbitrary>], iteration_bounds = array<i64: 2, 1>, scalar_prefetch = 0 : i64, scratch_operands = 1 : i64, tpu.core_type = #tpu.core_type<tc>, window_params = [{transform_indices = @transform_0, window_bounds = array<i64: 1, 128, 3>}, {pipeline_mode = #tpu.pipeline_mode<synchronous>, transform_indices = @transform_1, window_bounds = array<i64: 3, 64>}, {pipeline_mode = #tpu.pipeline_mode<synchronous>, transform_indices = @transform_2, window_bounds = array<i64: 1, 64>}, {pipeline_mode = #tpu.pipeline_mode<synchronous>, transform_indices = @transform_3, window_bounds = array<i64: 64, 128>}, {pipeline_mode = #tpu.pipeline_mode<synchronous>, transform_indices = @transform_4, window_bounds = array<i64: 1, 128>}, {pipeline_mode = #tpu.pipeline_mode<synchronous>, transform_indices = @transform_5, window_bounds = array<i64: 128, 1024>}, {pipeline_mode = #tpu.pipeline_mode<synchronous>, transform_indices = @transform_6, window_bounds = array<i64: 1, 1024>}, {pipeline_mode = #tpu.pipeline_mode<synchronous>, transform_indices = @transform_7, window_bounds = array<i64: 1024, 512>}, {pipeline_mode = #tpu.pipeline_mode<synchronous>, transform_indices = @transform_8, window_bounds = array<i64: 1, 512>}, {pipeline_mode = #tpu.pipeline_mode<synchronous>, transform_indices = @transform_9, window_bounds = array<i64: 512, 256>}, {pipeline_mode = #tpu.pipeline_mode<synchronous>, transform_indices = @transform_10, window_bounds = array<i64: 1, 256>}, {pipeline_mode = #tpu.pipeline_mode<synchronous>, transform_indices = @transform_11, window_bounds = array<i64: 256, 9>}, {pipeline_mode = #tpu.pipeline_mode<synchronous>, transform_indices = @transform_12, window_bounds = array<i64: 1, 9>}, {transform_indices = @transform_13, window_bounds = array<i64: 1, 1, 9>}]} {
    %c0_i32 = arith.constant 0 : i32
    %0 = arith.cmpi eq, %arg1, %c0_i32 : i32
    %1 = arith.extui %0 : i1 to i32
    %c0_i32_0 = arith.constant 0 : i32
    %2 = arith.cmpi ne, %1, %c0_i32_0 : i32
    scf.if %2 {
      %cst_27 = arith.constant 0xFF800000 : f32
      %36 = vector.broadcast %cst_27 : f32 to vector<1x1024xf32>
      %c0_28 = arith.constant 0 : index
      %c0_29 = arith.constant 0 : index
      %37 = vector.load %arg16[%c0_28, %c0_29] : memref<1x1024xf32, #tpu.memory_space<vmem>>, vector<1x1024xf32>
      tpu.vector_store %arg16[%c0_28, %c0_29], %36 {strides = array<i32>} : memref<1x1024xf32, #tpu.memory_space<vmem>>, vector<1x1024xf32>,
    } else {
    }
    %c0 = arith.constant 0 : index
    %c0_1 = arith.constant 0 : index
    %c0_2 = arith.constant 0 : index
    %3 = vector.load %arg2[%c0, %c0_1, %c0_2] : memref<1x128x3xbf16, #tpu.memory_space<vmem>>, vector<1x128x3xbf16>
    %4 = vector.shape_cast %3 : vector<1x128x3xbf16> to vector<128x3xbf16>
    %c0_3 = arith.constant 0 : index
    %c0_4 = arith.constant 0 : index
    %5 = vector.load %arg3[%c0_3, %c0_4] : memref<3x64xbf16, #tpu.memory_space<vmem>>, vector<3x64xbf16>
    %cst = arith.constant dense<0.000000e+00> : vector<128x64xf32>
    %6 = tpu.matmul %4, %5, %cst {dimension_numbers = #tpu.dot_dimension_numbers<[1], [0], [0], [1], [0, 0, 1, 1], [], []>} : vector<128x3xbf16>, vector<3x64xbf16>, vector<128x64xf32> -> vector<128x64xf32>
    %c0_5 = arith.constant 0 : index
    %c0_6 = arith.constant 0 : index
    %7 = vector.load %arg4[%c0_5, %c0_6] : memref<1x64xf32, #tpu.memory_space<vmem>>, vector<1x64xf32>
    %8 = vector.broadcast %7 : vector<1x64xf32> to vector<128x64xf32>
    %9 = arith.addf %6, %8 : vector<128x64xf32>
    %cst_7 = arith.constant 0.000000e+00 : f32
    %10 = vector.broadcast %cst_7 : f32 to vector<128x64xf32>
    %11 = arith.maximumf %9, %10 : vector<128x64xf32>
    %12 = arith.truncf %11 : vector<128x64xf32> to vector<128x64xbf16>
    %c0_8 = arith.constant 0 : index
    %c0_9 = arith.constant 0 : index
    %13 = vector.load %arg5[%c0_8, %c0_9] : memref<64x128xbf16, #tpu.memory_space<vmem>>, vector<64x128xbf16>
    %cst_10 = arith.constant dense<0.000000e+00> : vector<128x128xf32>
    %14 = tpu.matmul %12, %13, %cst_10 {dimension_numbers = #tpu.dot_dimension_numbers<[1], [0], [0], [1], [0, 0, 1, 1], [], []>} : vector<128x64xbf16>, vector<64x128xbf16>, vector<128x128xf32> -> vector<128x128xf32>
    %c0_11 = arith.constant 0 : index
    %c0_12 = arith.constant 0 : index
    %15 = vector.load %arg6[%c0_11, %c0_12] : memref<1x128xf32, #tpu.memory_space<vmem>>, vector<1x128xf32>
    %16 = vector.broadcast %15 : vector<1x128xf32> to vector<128x128xf32>
    %17 = arith.addf %14, %16 : vector<128x128xf32>
    %cst_13 = arith.constant 0.000000e+00 : f32
    %18 = vector.broadcast %cst_13 : f32 to vector<128x128xf32>
    %19 = arith.maximumf %17, %18 : vector<128x128xf32>
    %20 = arith.truncf %19 : vector<128x128xf32> to vector<128x128xbf16>
    %c0_14 = arith.constant 0 : index
    %c0_15 = arith.constant 0 : index
    %21 = vector.load %arg7[%c0_14, %c0_15] : memref<128x1024xbf16, #tpu.memory_space<vmem>>, vector<128x1024xbf16>
    %cst_16 = arith.constant dense<0.000000e+00> : vector<128x1024xf32>
    %22 = tpu.matmul %20, %21, %cst_16 {dimension_numbers = #tpu.dot_dimension_numbers<[1], [0], [0], [1], [0, 0, 1, 1], [], []>} : vector<128x128xbf16>, vector<128x1024xbf16>, vector<128x1024xf32> -> vector<128x1024xf32>
    %c0_17 = arith.constant 0 : index
    %c0_18 = arith.constant 0 : index
    %23 = vector.load %arg8[%c0_17, %c0_18] : memref<1x1024xf32, #tpu.memory_space<vmem>>, vector<1x1024xf32>
    %24 = vector.broadcast %23 : vector<1x1024xf32> to vector<128x1024xf32>
    %25 = arith.addf %22, %24 : vector<128x1024xf32>
    %cst_19 = arith.constant 0.000000e+00 : f32
    %26 = vector.broadcast %cst_19 : f32 to vector<128x1024xf32>
    %27 = arith.maximumf %25, %26 : vector<128x1024xf32>
    %c0_20 = arith.constant 0 : index
    %c0_21 = arith.constant 0 : index
    %28 = vector.load %arg16[%c0_20, %c0_21] : memref<1x1024xf32, #tpu.memory_space<vmem>>, vector<1x1024xf32>
    %cst_22 = arith.constant dense<0xFF800000> : vector<1024xf32>
    %29 = vector.multi_reduction <maximumf>, %27, %cst_22 [0] : vector<128x1024xf32> to vector<1024xf32>
    %30 = vector.shape_cast %29 : vector<1024xf32> to vector<1x1024xf32>
    %31 = arith.maximumf %28, %30 : vector<1x1024xf32>
    %c0_23 = arith.constant 0 : index
    %c0_24 = arith.constant 0 : index
    %32 = vector.load %arg16[%c0_23, %c0_24] : memref<1x1024xf32, #tpu.memory_space<vmem>>, vector<1x1024xf32>
    tpu.vector_store %arg16[%c0_23, %c0_24], %31 {strides = array<i32>} : memref<1x1024xf32, #tpu.memory_space<vmem>>, vector<1x1024xf32>,
    %c0_i32_25 = arith.constant 0 : i32
    %33 = arith.cmpi eq, %arg1, %c0_i32_25 : i32
    %34 = arith.extui %33 : i1 to i32
    %c0_i32_26 = arith.constant 0 : i32
    %35 = arith.cmpi ne, %34, %c0_i32_26 : i32
    scf.if %35 {
      %c0_27 = arith.constant 0 : index
      %c0_28 = arith.constant 0 : index
      %36 = vector.load %arg16[%c0_27, %c0_28] : memref<1x1024xf32, #tpu.memory_space<vmem>>, vector<1x1024xf32>
      %37 = arith.truncf %36 : vector<1x1024xf32> to vector<1x1024xbf16>
      %c0_29 = arith.constant 0 : index
      %c0_30 = arith.constant 0 : index
      %38 = vector.load %arg9[%c0_29, %c0_30] : memref<1024x512xbf16, #tpu.memory_space<vmem>>, vector<1024x512xbf16>
      %cst_31 = arith.constant dense<0.000000e+00> : vector<1x512xf32>
      %39 = tpu.matmul %37, %38, %cst_31 {dimension_numbers = #tpu.dot_dimension_numbers<[1], [0], [0], [1], [0, 0, 1, 1], [], []>} : vector<1x1024xbf16>, vector<1024x512xbf16>, vector<1x512xf32> -> vector<1x512xf32>
      %c0_32 = arith.constant 0 : index
      %c0_33 = arith.constant 0 : index
      %40 = vector.load %arg10[%c0_32, %c0_33] : memref<1x512xf32, #tpu.memory_space<vmem>>, vector<1x512xf32>
      %41 = arith.addf %39, %40 : vector<1x512xf32>
      %cst_34 = arith.constant 0.000000e+00 : f32
      %42 = vector.broadcast %cst_34 : f32 to vector<1x512xf32>
      %43 = arith.maximumf %41, %42 : vector<1x512xf32>
      %44 = arith.truncf %43 : vector<1x512xf32> to vector<1x512xbf16>
      %c0_35 = arith.constant 0 : index
      %c0_36 = arith.constant 0 : index
      %45 = vector.load %arg11[%c0_35, %c0_36] : memref<512x256xbf16, #tpu.memory_space<vmem>>, vector<512x256xbf16>
      %cst_37 = arith.constant dense<0.000000e+00> : vector<1x256xf32>
      %46 = tpu.matmul %44, %45, %cst_37 {dimension_numbers = #tpu.dot_dimension_numbers<[1], [0], [0], [1], [0, 0, 1, 1], [], []>} : vector<1x512xbf16>, vector<512x256xbf16>, vector<1x256xf32> -> vector<1x256xf32>
      %c0_38 = arith.constant 0 : index
      %c0_39 = arith.constant 0 : index
      %47 = vector.load %arg12[%c0_38, %c0_39] : memref<1x256xf32, #tpu.memory_space<vmem>>, vector<1x256xf32>
      %48 = arith.addf %46, %47 : vector<1x256xf32>
      %cst_40 = arith.constant 0.000000e+00 : f32
      %49 = vector.broadcast %cst_40 : f32 to vector<1x256xf32>
      %50 = arith.maximumf %48, %49 : vector<1x256xf32>
      %51 = arith.truncf %50 : vector<1x256xf32> to vector<1x256xbf16>
      %c0_41 = arith.constant 0 : index
      %c0_42 = arith.constant 0 : index
      %52 = vector.load %arg13[%c0_41, %c0_42] : memref<256x9xbf16, #tpu.memory_space<vmem>>, vector<256x9xbf16>
      %cst_43 = arith.constant dense<0.000000e+00> : vector<1x9xf32>
      %53 = tpu.matmul %51, %52, %cst_43 {dimension_numbers = #tpu.dot_dimension_numbers<[1], [0], [0], [1], [0, 0, 1, 1], [], []>} : vector<1x256xbf16>, vector<256x9xbf16>, vector<1x9xf32> -> vector<1x9xf32>
      %c0_44 = arith.constant 0 : index
      %c0_45 = arith.constant 0 : index
      %54 = vector.load %arg14[%c0_44, %c0_45] : memref<1x9xf32, #tpu.memory_space<vmem>>, vector<1x9xf32>
      %55 = arith.addf %53, %54 : vector<1x9xf32>
      %c0_46 = arith.constant 0 : index
      %c0_47 = arith.constant 0 : index
      %c0_48 = arith.constant 0 : index
      %56 = vector.load %arg15[%c0_46, %c0_47, %c0_48] : memref<1x1x9xf32, #tpu.memory_space<vmem>>, vector<1x1x9xf32>
      %57 = vector.shape_cast %56 : vector<1x1x9xf32> to vector<1x9xf32>
      %58 = vector.shape_cast %55 : vector<1x9xf32> to vector<1x1x9xf32>
      tpu.vector_store %arg15[%c0_46, %c0_47, %c0_48], %58 {strides = array<i32>} : memref<1x1x9xf32, #tpu.memory_space<vmem>>, vector<1x1x9xf32>,
    } else {
    }
    return
  }
  func.func @transform_0(%arg0: i32, %arg1: i32) -> (i32, i32, i32) {
    %c0_i32 = arith.constant 0 : i32
    %c0_i32_0 = arith.constant 0 : i32
    return %arg0, %arg1, %c0_i32 : i32, i32, i32
  }
  func.func @transform_1(%arg0: i32, %arg1: i32) -> (i32, i32) {
    %c0_i32 = arith.constant 0 : i32
    %c0_i32_0 = arith.constant 0 : i32
    %c0_i32_1 = arith.constant 0 : i32
    return %c0_i32, %c0_i32_0 : i32, i32
  }
  func.func @transform_2(%arg0: i32, %arg1: i32) -> (i32, i32) {
    %c0_i32 = arith.constant 0 : i32
    %c0_i32_0 = arith.constant 0 : i32
    %c0_i32_1 = arith.constant 0 : i32
    return %c0_i32, %c0_i32_0 : i32, i32
  }
  func.func @transform_3(%arg0: i32, %arg1: i32) -> (i32, i32) {
    %c0_i32 = arith.constant 0 : i32
    %c0_i32_0 = arith.constant 0 : i32
    %c0_i32_1 = arith.constant 0 : i32
    return %c0_i32, %c0_i32_0 : i32, i32
  }
  func.func @transform_4(%arg0: i32, %arg1: i32) -> (i32, i32) {
    %c0_i32 = arith.constant 0 : i32
    %c0_i32_0 = arith.constant 0 : i32
    %c0_i32_1 = arith.constant 0 : i32
    return %c0_i32, %c0_i32_0 : i32, i32
  }
  func.func @transform_5(%arg0: i32, %arg1: i32) -> (i32, i32) {
    %c0_i32 = arith.constant 0 : i32
    %c0_i32_0 = arith.constant 0 : i32
    %c0_i32_1 = arith.constant 0 : i32
    return %c0_i32, %c0_i32_0 : i32, i32
  }
  func.func @transform_6(%arg0: i32, %arg1: i32) -> (i32, i32) {
    %c0_i32 = arith.constant 0 : i32
    %c0_i32_0 = arith.constant 0 : i32
    %c0_i32_1 = arith.constant 0 : i32
    return %c0_i32, %c0_i32_0 : i32, i32
  }
  func.func @transform_7(%arg0: i32, %arg1: i32) -> (i32, i32) {
    %c0_i32 = arith.constant 0 : i32
    %c0_i32_0 = arith.constant 0 : i32
    %c0_i32_1 = arith.constant 0 : i32
    return %c0_i32, %c0_i32_0 : i32, i32
  }
  func.func @transform_8(%arg0: i32, %arg1: i32) -> (i32, i32) {
    %c0_i32 = arith.constant 0 : i32
    %c0_i32_0 = arith.constant 0 : i32
    %c0_i32_1 = arith.constant 0 : i32
    return %c0_i32, %c0_i32_0 : i32, i32
  }
  func.func @transform_9(%arg0: i32, %arg1: i32) -> (i32, i32) {
    %c0_i32 = arith.constant 0 : i32
    %c0_i32_0 = arith.constant 0 : i32
    %c0_i32_1 = arith.constant 0 : i32
    return %c0_i32, %c0_i32_0 : i32, i32
  }
  func.func @transform_10(%arg0: i32, %arg1: i32) -> (i32, i32) {
    %c0_i32 = arith.constant 0 : i32
    %c0_i32_0 = arith.constant 0 : i32
    %c0_i32_1 = arith.constant 0 : i32
    return %c0_i32, %c0_i32_0 : i32, i32
  }
  func.func @transform_11(%arg0: i32, %arg1: i32) -> (i32, i32) {
    %c0_i32 = arith.constant 0 : i32
    %c0_i32_0 = arith.constant 0 : i32
    %c0_i32_1 = arith.constant 0 : i32
    return %c0_i32, %c0_i32_0 : i32, i32
  }
  func.func @transform_12(%arg0: i32, %arg1: i32) -> (i32, i32) {
    %c0_i32 = arith.constant 0 : i32
    %c0_i32_0 = arith.constant 0 : i32
    %c0_i32_1 = arith.constant 0 : i32
    return %c0_i32, %c0_i32_0 : i32, i32
  }
  func.func @transform_13(%arg0: i32, %arg1: i32) -> (i32, i32, i32) {
    %c0_i32 = arith.constant 0 : i32
    %c0_i32_0 = arith.constant 0 : i32
    %c0_i32_1 = arith.constant 0 : i32
    return %arg0, %c0_i32, %c0_i32_0 : i32, i32, i32
  }
}

</mosaic_0001>

<llo_original>
// kernel: tpu_custom_call.1
$region0: #{tpu_custom_call.1}
  #allocation0 [shape = 'u32[]', space=smem, size = 0x4, offset = 0x4, fixed_abs, tag = 'smem constant byte address 0x4 - core index']
  #allocation1 [shape = 'u32[144,128]{1,0:T(1,128)}', space=vmem, size = 0x12000, scoped, tag = 'internal scratch']
  #allocation2 [shape = 'f32[1,1024]{1,0:T(1,128)}', space=vmem, size = 0x1000, scoped, tag = 'scratch operand']
  %s0 = inlined_call_operand.vmem [shape: bf16[2,128,3], index: 0, kind: input, shape index: {}]
  %s1 = inlined_call_operand.vmem [shape: bf16[3,64], index: 1, kind: input, shape index: {}]
  %s2 = inlined_call_operand.vmem [shape: f32[1,64], index: 2, kind: input, shape index: {}]
  %s3 = inlined_call_operand.vmem [shape: bf16[64,128], index: 3, kind: input, shape index: {}]
  %s4 = inlined_call_operand.vmem [shape: f32[1,128], index: 4, kind: input, shape index: {}]
  %s5 = inlined_call_operand.hbm [shape: bf16[128,1024], index: 5, kind: input, shape index: {}]
  %s6 = inlined_call_operand.vmem [shape: f32[1,1024], index: 6, kind: input, shape index: {}]
  %s7 = inlined_call_operand.hbm [shape: bf16[1024,512], index: 7, kind: input, shape index: {}]
  %s8 = inlined_call_operand.vmem [shape: f32[1,512], index: 8, kind: input, shape index: {}]
  %s9 = inlined_call_operand.hbm [shape: bf16[512,256], index: 9, kind: input, shape index: {}]
  %s10 = inlined_call_operand.vmem [shape: f32[1,256], index: 10, kind: input, shape index: {}]
  %s11 = inlined_call_operand.vmem [shape: bf16[256,9], index: 11, kind: input, shape index: {}]
  %s12 = inlined_call_operand.vmem [shape: f32[1,9], index: 12, kind: input, shape index: {}]
  %s13 = inlined_call_operand.hbm [shape: f32[2,1,9], index: 13, kind: output, shape index: {}]
  %s14 = sld [smem:[#allocation0]]
  $region105: #{tpu_custom_call.1} parent=0
    _
  %s16 = ssub.s32 1, %s14
  %s17 = scalar_select 0, %s16, %s14
  $region1: #{tpu_custom_call.1} parent=0
    #allocation3 [shape = 'u8[262144]{0}', space=vmem, size = 0x40000, scoped, tag = 'input window, operand 5, single buffered']
    #allocation4 [shape = 's32[2]{0}', space=sflag, size = 0x8, scoped, tag = 'scoped memory for tpu_custom_call.1']
    #allocation5 [shape = 's32[2]{0}', space=sflag, size = 0x8, scoped, tag = 'scoped memory for tpu_custom_call.1']
    #allocation6 [shape = 'u8[1048576]{0}', space=vmem, size = 0x100000, scoped, tag = 'input window, operand 7, single buffered']
    #allocation7 [shape = 's32[1]{0}', space=sflag, size = 0x4, scoped, tag = 'scoped memory for tpu_custom_call.1']
    #allocation8 [shape = 'u8[262144]{0}', space=vmem, size = 0x40000, scoped, tag = 'input window, operand 9, single buffered']
    #allocation9 [shape = 'u8[1024]{0}', space=vmem, size = 0x400, scoped, tag = 'output window, operand 0']
    %18 = vsyncpa [#allocation4], 0
    %19 = vsyncpa [#allocation7], 0
    %20 = vsyncpa [#allocation5], 0
    %s21 = scalar_lea.sflag [#allocation5], 1
    %22 = vsyncpa %s21, 0
    loop: start=0, step=1, limit=4
    $region2: #{tpu_custom_call.1} parent=1 // loop_pre_header
      _
    $region3: #{tpu_custom_call.1} parent=1 // loop_header
      %s24 = sphi 0, %s28
      %p25 = scmp.ge.s32.totalorder %s24, 4
      %s31 = sphi 0, %s43
      %s32 = sphi 0, %s39
      %s33 = sphi 0, %s31
      %s34 = sphi 0, %s32
      %s35 = sphi 0, %s33
      %s36 = sphi 0, %s34
      %s48 = sphi 0, %s50
      %s51 = sphi 0, %s48
      %s52 = sphi 0, %s51
      %s68 = sphi 0, %s52
      %s72 = sphi 0, %s72
      %s74 = sphi 0, %s72
      %s75 = sphi 0, %s74
      %s89 = sphi 0, %s75
      %s93 = sphi 0, %s93
      %s95 = sphi 0, %s93
      %s96 = sphi 0, %s95
      %s110 = sphi 0, %s96
      %s114 = sphi 0, %s114
      %s116 = sphi 0, %s114
      %s117 = sphi 0, %s116
      %s131 = sphi 0, %s117
      %s135 = sphi 0, %s135
      %s137 = sphi 0, %s135
      %s138 = sphi 0, %s137
      %s152 = sphi 0, %s138
      %s156 = sphi 0, %s156
      %s158 = sphi 0, %s156
      %s159 = sphi 0, %s158
      %s173 = sphi 0, %s159
      %s177 = sphi 0, %s177
      %s179 = sphi 0, %s177
      %s180 = sphi 0, %s179
      %s194 = sphi 0, %s180
      %s198 = sphi 0, %s198
      %s200 = sphi 0, %s198
      %s201 = sphi 0, %s200
      %s215 = sphi 0, %s201
      %s219 = sphi 0, %s219
      %s221 = sphi 0, %s219
      %s222 = sphi 0, %s221
      %s236 = sphi 0, %s222
      %s240 = sphi 0, %s240
      %s242 = sphi 0, %s240
      %s243 = sphi 0, %s242
      %s257 = sphi 0, %s243
      %s261 = sphi 0, %s261
      %s263 = sphi 0, %s261
      %s264 = sphi 0, %s263
      %s278 = sphi 0, %s264
      %s282 = sphi 0, %s282
      %s284 = sphi 0, %s282
      %s285 = sphi 0, %s284
      %s299 = sphi 0, %s285
      %s303 = sphi 0, %s303
      %s305 = sphi 0, %s303
      %s306 = sphi 0, %s305
      %s320 = sphi 0, %s306
      %s326 = sphi 0, %s328
      %s329 = sphi 0, %s326
      %s330 = sphi 0, %s329
      %s346 = sphi 0, %s330
    $region4: #{tpu_custom_call.1} parent=1 // loop_header_branch
      %27 = sbr.rel (%p25) target = $region8
    $region5: #{tpu_custom_call.1} parent=1 // loop_body
      %s29 = ssub.s32 %s24, 1
      %s30 = ssub.s32 %s24, 2
      %s37 = sadd.s32 1, %s32
      %p38 = scmp.ge.s32.totalorder %s37, 1
      %s39 = scalar_select %p38, 0, %s37
      %s40 = sadd.s32 1, %s31
      %s41 = scalar_select %p38, %s40, %s31
      %p42 = scmp.ge.s32.totalorder %s41, 2
      %s43 = scalar_select %p42, 0, %s41
      %s44 = ssub.s32 %s31, %s43
      %s45 = ssub.s32 %s32, %s39
      %s46 = sor.u32 %s44, %s45
      %p47 = scmp.eq.s32.totalorder %s46, 0
      %s49 = sadd.s32 %s48, 1
      %s50 = scalar_select %p47, %s48, %s49
      %p53 = pneg %p47
      %p54 = scmp.eq.s32.totalorder %s24, 1
      %p55 = por %p53, %p54
      %p56 = scmp.ne.s32.totalorder %s48, %s51
      %p57 = scmp.eq.s32.totalorder %s24, 0
      %p58 = por %p56, %p57
      %p59 = scmp.ne.s32.totalorder %s48, %s51
      %p60 = scmp.eq.s32.totalorder %s29, 1
      %p61 = por %p59, %p60
      %p62 = scmp.ne.s32.totalorder %s51, %s52
      %p63 = scmp.eq.s32.totalorder %s29, 0
      %p64 = por %p62, %p63
      %p65 = scmp.ne.s32.totalorder %s51, %s52
      %p66 = scmp.eq.s32.totalorder %s30, 1
      %p67 = por %p65, %p66
      %p69 = scmp.ne.s32.totalorder %s52, %s68
      %p70 = scmp.eq.s32.totalorder %s30, 0
      %p71 = por %p69, %p70
      %s73 = sadd.s32 %s72, 1
      %p76 = scmp.eq.s32.totalorder %s24, 1
      %p77 = scmp.ne.s32.totalorder %s72, %s74
      %p78 = scmp.eq.s32.totalorder %s24, 0
      %p79 = por %p77, %p78
      %p80 = scmp.ne.s32.totalorder %s72, %s74
      %p81 = scmp.eq.s32.totalorder %s29, 1
      %p82 = por %p80, %p81
      %p83 = scmp.ne.s32.totalorder %s74, %s75
      %p84 = scmp.eq.s32.totalorder %s29, 0
      %p85 = por %p83, %p84
      %p86 = scmp.ne.s32.totalorder %s74, %s75
      %p87 = scmp.eq.s32.totalorder %s30, 1
      %p88 = por %p86, %p87
      %p90 = scmp.ne.s32.totalorder %s75, %s89
      %p91 = scmp.eq.s32.totalorder %s30, 0
      %p92 = por %p90, %p91
      %s94 = sadd.s32 %s93, 1
      %p97 = scmp.eq.s32.totalorder %s24, 1
      %p98 = scmp.ne.s32.totalorder %s93, %s95
      %p99 = scmp.eq.s32.totalorder %s24, 0
      %p100 = por %p98, %p99
      %p101 = scmp.ne.s32.totalorder %s93, %s95
      %p102 = scmp.eq.s32.totalorder %s29, 1
      %p103 = por %p101, %p102
      %p104 = scmp.ne.s32.totalorder %s95, %s96
      %p105 = scmp.eq.s32.totalorder %s29, 0
      %p106 = por %p104, %p105
      %p107 = scmp.ne.s32.totalorder %s95, %s96
      %p108 = scmp.eq.s32.totalorder %s30, 1
      %p109 = por %p107, %p108
      %p111 = scmp.ne.s32.totalorder %s96, %s110
      %p112 = scmp.eq.s32.totalorder %s30, 0
      %p113 = por %p111, %p112
      %s115 = sadd.s32 %s114, 1
      %p118 = scmp.eq.s32.totalorder %s24, 1
      %p119 = scmp.ne.s32.totalorder %s114, %s116
      %p120 = scmp.eq.s32.totalorder %s24, 0
      %p121 = por %p119, %p120
      %p122 = scmp.ne.s32.totalorder %s114, %s116
      %p123 = scmp.eq.s32.totalorder %s29, 1
      %p124 = por %p122, %p123
      %p125 = scmp.ne.s32.totalorder %s116, %s117
      %p126 = scmp.eq.s32.totalorder %s29, 0
      %p127 = por %p125, %p126
      %p128 = scmp.ne.s32.totalorder %s116, %s117
      %p129 = scmp.eq.s32.totalorder %s30, 1
      %p130 = por %p128, %p129
      %p132 = scmp.ne.s32.totalorder %s117, %s131
      %p133 = scmp.eq.s32.totalorder %s30, 0
      %p134 = por %p132, %p133
      %s136 = sadd.s32 %s135, 1
      %p139 = scmp.eq.s32.totalorder %s24, 1
      %p140 = scmp.ne.s32.totalorder %s135, %s137
      %p141 = scmp.eq.s32.totalorder %s24, 0
      %p142 = por %p140, %p141
      %p143 = scmp.ne.s32.totalorder %s135, %s137
      %p144 = scmp.eq.s32.totalorder %s29, 1
      %p145 = por %p143, %p144
      %p146 = scmp.ne.s32.totalorder %s137, %s138
      %p147 = scmp.eq.s32.totalorder %s29, 0
      %p148 = por %p146, %p147
      %p149 = scmp.ne.s32.totalorder %s137, %s138
      %p150 = scmp.eq.s32.totalorder %s30, 1
      %p151 = por %p149, %p150
      %p153 = scmp.ne.s32.totalorder %s138, %s152
      %p154 = scmp.eq.s32.totalorder %s30, 0
      %p155 = por %p153, %p154
      %s157 = sadd.s32 %s156, 1
      %p160 = scmp.eq.s32.totalorder %s24, 1
      %p161 = scmp.ne.s32.totalorder %s156, %s158
      %p162 = scmp.eq.s32.totalorder %s24, 0
      %p163 = por %p161, %p162
      %p164 = scmp.ne.s32.totalorder %s156, %s158
      %p165 = scmp.eq.s32.totalorder %s29, 1
      %p166 = por %p164, %p165
      %p167 = scmp.ne.s32.totalorder %s158, %s159
      %p168 = scmp.eq.s32.totalorder %s29, 0
      %p169 = por %p167, %p168
      %p170 = scmp.ne.s32.totalorder %s158, %s159
      %p171 = scmp.eq.s32.totalorder %s30, 1
      %p172 = por %p170, %p171
      %p174 = scmp.ne.s32.totalorder %s159, %s173
      %p175 = scmp.eq.s32.totalorder %s30, 0
      %p176 = por %p174, %p175
      %s178 = sadd.s32 %s177, 1
      %p181 = scmp.eq.s32.totalorder %s24, 1
      %p182 = scmp.ne.s32.totalorder %s177, %s179
      %p183 = scmp.eq.s32.totalorder %s24, 0
      %p184 = por %p182, %p183
      %p185 = scmp.ne.s32.totalorder %s177, %s179
      %p186 = scmp.eq.s32.totalorder %s29, 1
      %p187 = por %p185, %p186
      %p188 = scmp.ne.s32.totalorder %s179, %s180
      %p189 = scmp.eq.s32.totalorder %s29, 0
      %p190 = por %p188, %p189
      %p191 = scmp.ne.s32.totalorder %s179, %s180
      %p192 = scmp.eq.s32.totalorder %s30, 1
      %p193 = por %p191, %p192
      %p195 = scmp.ne.s32.totalorder %s180, %s194
      %p196 = scmp.eq.s32.totalorder %s30, 0
      %p197 = por %p195, %p196
      %s199 = sadd.s32 %s198, 1
      %p202 = scmp.eq.s32.totalorder %s24, 1
      %p203 = scmp.ne.s32.totalorder %s198, %s200
      %p204 = scmp.eq.s32.totalorder %s24, 0
      %p205 = por %p203, %p204
      %p206 = scmp.ne.s32.totalorder %s198, %s200
      %p207 = scmp.eq.s32.totalorder %s29, 1
      %p208 = por %p206, %p207
      %p209 = scmp.ne.s32.totalorder %s200, %s201
      %p210 = scmp.eq.s32.totalorder %s29, 0
      %p211 = por %p209, %p210
      %p212 = scmp.ne.s32.totalorder %s200, %s201
      %p213 = scmp.eq.s32.totalorder %s30, 1
      %p214 = por %p212, %p213
      %p216 = scmp.ne.s32.totalorder %s201, %s215
      %p217 = scmp.eq.s32.totalorder %s30, 0
      %p218 = por %p216, %p217
      %s220 = sadd.s32 %s219, 1
      %p223 = scmp.eq.s32.totalorder %s24, 1
      %p224 = scmp.ne.s32.totalorder %s219, %s221
      %p225 = scmp.eq.s32.totalorder %s24, 0
      %p226 = por %p224, %p225
      %p227 = scmp.ne.s32.totalorder %s219, %s221
      %p228 = scmp.eq.s32.totalorder %s29, 1
      %p229 = por %p227, %p228
      %p230 = scmp.ne.s32.totalorder %s221, %s222
      %p231 = scmp.eq.s32.totalorder %s29, 0
      %p232 = por %p230, %p231
      %p233 = scmp.ne.s32.totalorder %s221, %s222
      %p234 = scmp.eq.s32.totalorder %s30, 1
      %p235 = por %p233, %p234
      %p237 = scmp.ne.s32.totalorder %s222, %s236
      %p238 = scmp.eq.s32.totalorder %s30, 0
      %p239 = por %p237, %p238
      %s241 = sadd.s32 %s240, 1
      %p244 = scmp.eq.s32.totalorder %s24, 1
      %p245 = scmp.ne.s32.totalorder %s240, %s242
      %p246 = scmp.eq.s32.totalorder %s24, 0
      %p247 = por %p245, %p246
      %p248 = scmp.ne.s32.totalorder %s240, %s242
      %p249 = scmp.eq.s32.totalorder %s29, 1
      %p250 = por %p248, %p249
      %p251 = scmp.ne.s32.totalorder %s242, %s243
      %p252 = scmp.eq.s32.totalorder %s29, 0
      %p253 = por %p251, %p252
      %p254 = scmp.ne.s32.totalorder %s242, %s243
      %p255 = scmp.eq.s32.totalorder %s30, 1
      %p256 = por %p254, %p255
      %p258 = scmp.ne.s32.totalorder %s243, %s257
      %p259 = scmp.eq.s32.totalorder %s30, 0
      %p260 = por %p258, %p259
      %s262 = sadd.s32 %s261, 1
      %p265 = scmp.eq.s32.totalorder %s24, 1
      %p266 = scmp.ne.s32.totalorder %s261, %s263
      %p267 = scmp.eq.s32.totalorder %s24, 0
      %p268 = por %p266, %p267
      %p269 = scmp.ne.s32.totalorder %s261, %s263
      %p270 = scmp.eq.s32.totalorder %s29, 1
      %p271 = por %p269, %p270
      %p272 = scmp.ne.s32.totalorder %s263, %s264
      %p273 = scmp.eq.s32.totalorder %s29, 0
      %p274 = por %p272, %p273
      %p275 = scmp.ne.s32.totalorder %s263, %s264
      %p276 = scmp.eq.s32.totalorder %s30, 1
      %p277 = por %p275, %p276
      %p279 = scmp.ne.s32.totalorder %s264, %s278
      %p280 = scmp.eq.s32.totalorder %s30, 0
      %p281 = por %p279, %p280
      %s283 = sadd.s32 %s282, 1
      %p286 = scmp.eq.s32.totalorder %s24, 1
      %p287 = scmp.ne.s32.totalorder %s282, %s284
      %p288 = scmp.eq.s32.totalorder %s24, 0
      %p289 = por %p287, %p288
      %p290 = scmp.ne.s32.totalorder %s282, %s284
      %p291 = scmp.eq.s32.totalorder %s29, 1
      %p292 = por %p290, %p291
      %p293 = scmp.ne.s32.totalorder %s284, %s285
      %p294 = scmp.eq.s32.totalorder %s29, 0
      %p295 = por %p293, %p294
      %p296 = scmp.ne.s32.totalorder %s284, %s285
      %p297 = scmp.eq.s32.totalorder %s30, 1
      %p298 = por %p296, %p297
      %p300 = scmp.ne.s32.totalorder %s285, %s299
      %p301 = scmp.eq.s32.totalorder %s30, 0
      %p302 = por %p300, %p301
      %s304 = sadd.s32 %s303, 1
      %p307 = scmp.eq.s32.totalorder %s24, 1
      %p308 = scmp.ne.s32.totalorder %s303, %s305
      %p309 = scmp.eq.s32.totalorder %s24, 0
      %p310 = por %p308, %p309
      %p311 = scmp.ne.s32.totalorder %s303, %s305
      %p312 = scmp.eq.s32.totalorder %s29, 1
      %p313 = por %p311, %p312
      %p314 = scmp.ne.s32.totalorder %s305, %s306
      %p315 = scmp.eq.s32.totalorder %s29, 0
      %p316 = por %p314, %p315
      %p317 = scmp.ne.s32.totalorder %s305, %s306
      %p318 = scmp.eq.s32.totalorder %s30, 1
      %p319 = por %p317, %p318
      %p321 = scmp.ne.s32.totalorder %s306, %s320
      %p322 = scmp.eq.s32.totalorder %s30, 0
      %p323 = por %p321, %p322
      %s324 = ssub.s32 %s31, %s43
      %p325 = scmp.eq.s32.totalorder %s324, 0
      %s327 = sadd.s32 %s326, 1
      %s328 = scalar_select %p325, %s326, %s327
      %p331 = pneg %p325
      %p332 = scmp.eq.s32.totalorder %s24, 1
      %p333 = por %p331, %p332
      %p334 = scmp.ne.s32.totalorder %s326, %s329
      %p335 = scmp.eq.s32.totalorder %s24, 0
      %p336 = por %p334, %p335
      %p337 = scmp.ne.s32.totalorder %s326, %s329
      %p338 = scmp.eq.s32.totalorder %s29, 1
      %p339 = por %p337, %p338
      %p340 = scmp.ne.s32.totalorder %s329, %s330
      %p341 = scmp.eq.s32.totalorder %s29, 0
      %p342 = por %p340, %p341
      %p343 = scmp.ne.s32.totalorder %s329, %s330
      %p344 = scmp.eq.s32.totalorder %s30, 1
      %p345 = por %p343, %p344
      %p347 = scmp.ne.s32.totalorder %s330, %s346
      %p348 = scmp.eq.s32.totalorder %s30, 0
      %p349 = por %p347, %p348
      %p350 = scmp.le.s32.totalorder 1, %s24
      %p351 = scmp.lt.s32.totalorder %s24, 3
      %p352 = pnand %p350, %p351
      %p353 = pneg %p352
      // Predicated region
      $region9: #{tpu_custom_call.1} parent=5 // pred_check
        _
      $region10: #{tpu_custom_call.1} parent=5 // pred_check_branch
        %355 = sbr.rel (%p352) target = $region12
      $region11: #{tpu_custom_call.1} parent=5 // pred_region
        %s356 = ssub.s32 %s24, 1
        // Predicated region
        $region13: #{tpu_custom_call.1} parent=11 // pred_check
          %p357 = pneg %p85
        $region14: #{tpu_custom_call.1} parent=11 // pred_check_branch
          %359 = sbr.rel (%p357) target = $region16
        $region15: #{tpu_custom_call.1} parent=11 // pred_region
          _
        $region16: #{tpu_custom_call.1} parent=11 // pred_fallthru
          _
        // Predicated region
        $region17: #{tpu_custom_call.1} parent=11 // pred_check
          %p360 = pneg %p106
        $region18: #{tpu_custom_call.1} parent=11 // pred_check_branch
          %362 = sbr.rel (%p360) target = $region20
        $region19: #{tpu_custom_call.1} parent=11 // pred_region
          _
        $region20: #{tpu_custom_call.1} parent=11 // pred_fallthru
          _
        // Predicated region
        $region21: #{tpu_custom_call.1} parent=11 // pred_check
          %p363 = pneg %p127
        $region22: #{tpu_custom_call.1} parent=11 // pred_check_branch
          %365 = sbr.rel (%p363) target = $region24
        $region23: #{tpu_custom_call.1} parent=11 // pred_region
          _
        $region24: #{tpu_custom_call.1} parent=11 // pred_fallthru
          _
        // Predicated region
        $region25: #{tpu_custom_call.1} parent=11 // pred_check
          %p366 = pneg %p148
        $region26: #{tpu_custom_call.1} parent=11 // pred_check_branch
          %368 = sbr.rel (%p366) target = $region28
        $region27: #{tpu_custom_call.1} parent=11 // pred_region
          _
        $region28: #{tpu_custom_call.1} parent=11 // pred_fallthru
          _
        // Predicated region
        $region29: #{tpu_custom_call.1} parent=11 // pred_check
          %p369 = pneg %p169
        $region30: #{tpu_custom_call.1} parent=11 // pred_check_branch
          %371 = sbr.rel (%p369) target = $region32
        $region31: #{tpu_custom_call.1} parent=11 // pred_region
          %s373 = ssub.s32 8192, 8192
          %374 = vsyncadd [#allocation4], %s373
          %s375 = sshll.u32 [#allocation3], 4
          %s376 = int_to_ptr.vmem [resolvable:$true] %s375
          %381 = dma.hbm_to_vmem [thread:$0]  %s5, 8192, %s376, [#allocation4], 512, 512, 32
        $region32: #{tpu_custom_call.1} parent=11 // pred_fallthru
          _
        // Predicated region
        $region33: #{tpu_custom_call.1} parent=11 // pred_check
          %p382 = pneg %p190
        $region34: #{tpu_custom_call.1} parent=11 // pred_check_branch
          %384 = sbr.rel (%p382) target = $region36
        $region35: #{tpu_custom_call.1} parent=11 // pred_region
          _
        $region36: #{tpu_custom_call.1} parent=11 // pred_fallthru
          _
        // Predicated region
        $region37: #{tpu_custom_call.1} parent=11 // pred_check
          %p385 = pneg %p211
        $region38: #{tpu_custom_call.1} parent=11 // pred_check_branch
          %387 = sbr.rel (%p385) target = $region40
        $region39: #{tpu_custom_call.1} parent=11 // pred_region
          %s389 = ssub.s32 32768, 32768
          %390 = vsyncadd [#allocation7], %s389
          %s391 = sshll.u32 [#allocation6], 4
          %s392 = int_to_ptr.vmem [resolvable:$true] %s391
          %397 = dma.hbm_to_vmem [thread:$0]  %s7, 32768, %s392, [#allocation7], 256, 256, 16
        $region40: #{tpu_custom_call.1} parent=11 // pred_fallthru
          _
        // Predicated region
        $region41: #{tpu_custom_call.1} parent=11 // pred_check
          %p398 = pneg %p232
        $region42: #{tpu_custom_call.1} parent=11 // pred_check_branch
          %400 = sbr.rel (%p398) target = $region44
        $region43: #{tpu_custom_call.1} parent=11 // pred_region
          _
        $region44: #{tpu_custom_call.1} parent=11 // pred_fallthru
          _
        // Predicated region
        $region45: #{tpu_custom_call.1} parent=11 // pred_check
          %p401 = pneg %p253
        $region46: #{tpu_custom_call.1} parent=11 // pred_check_branch
          %403 = sbr.rel (%p401) target = $region48
        $region47: #{tpu_custom_call.1} parent=11 // pred_region
          %s405 = ssub.s32 8192, 8192
          %406 = vsyncadd [#allocation7], %s405
          %s407 = sshll.u32 [#allocation8], 4
          %s408 = int_to_ptr.vmem [resolvable:$true] %s407
          %413 = dma.hbm_to_vmem [thread:$0]  %s9, 8192, %s408, [#allocation7], 128, 128, 8
        $region48: #{tpu_custom_call.1} parent=11 // pred_fallthru
          _
        // Predicated region
        $region49: #{tpu_custom_call.1} parent=11 // pred_check
          %p414 = pneg %p274
        $region50: #{tpu_custom_call.1} parent=11 // pred_check_branch
          %416 = sbr.rel (%p414) target = $region52
        $region51: #{tpu_custom_call.1} parent=11 // pred_region
          _
        $region52: #{tpu_custom_call.1} parent=11 // pred_fallthru
          _
        // Predicated region
        $region53: #{tpu_custom_call.1} parent=11 // pred_check
          %p417 = pneg %p295
        $region54: #{tpu_custom_call.1} parent=11 // pred_check_branch
          %419 = sbr.rel (%p417) target = $region56
        $region55: #{tpu_custom_call.1} parent=11 // pred_region
          _
        $region56: #{tpu_custom_call.1} parent=11 // pred_fallthru
          _
        // Predicated region
        $region57: #{tpu_custom_call.1} parent=11 // pred_check
          %p420 = pneg %p316
        $region58: #{tpu_custom_call.1} parent=11 // pred_check_branch
          %422 = sbr.rel (%p420) target = $region60
        $region59: #{tpu_custom_call.1} parent=11 // pred_region
          _
        $region60: #{tpu_custom_call.1} parent=11 // pred_fallthru
          _
      $region12: #{tpu_custom_call.1} parent=5 // pred_fallthru
        _
      %p423 = scmp.lt.s32.totalorder %s24, 2
      // Predicated region
      $region61: #{tpu_custom_call.1} parent=5 // pred_check
        %p424 = pneg %p423
      $region62: #{tpu_custom_call.1} parent=5 // pred_check_branch
        %426 = sbr.rel (%p424) target = $region64
      $region63: #{tpu_custom_call.1} parent=5 // pred_region
        // Predicated region
        $region65: #{tpu_custom_call.1} parent=63 // pred_check
          %p427 = pneg %p58
        $region66: #{tpu_custom_call.1} parent=63 // pred_check_branch
          %429 = sbr.rel (%p427) target = $region68
        $region67: #{tpu_custom_call.1} parent=63 // pred_region
          %s430 = smul.u32 16, %s32
          %p431 = scmp.lt.s32.totalorder %s31, 1
          %s432 = scalar_select %p431, %s31, 1
          %p433 = scmp.lt.s32.totalorder %s430, 15
          %s434 = scalar_select %p433, %s430, 15
          %s435 = smul.addr %s432, 16
          %s436 = sadd.s32 %s434, %s435
          %s437 = smul.addr %s436, 4
          %s438 = scalar_lea.vmem %s0, %s437
          %s439 = smul.u32 16, %s32
        $region68: #{tpu_custom_call.1} parent=63 // pred_fallthru
          _
      $region64: #{tpu_custom_call.1} parent=5 // pred_fallthru
        _
      %p440 = scmp.le.s32.totalorder 1, %s24
      %p441 = scmp.lt.s32.totalorder %s24, 3
      %p442 = pnand %p440, %p441
      %p443 = pneg %p442
      // Predicated region
      $region69: #{tpu_custom_call.1} parent=5 // pred_check
        _
      $region70: #{tpu_custom_call.1} parent=5 // pred_check_branch
        %445 = sbr.rel (%p442) target = $region72
      $region71: #{tpu_custom_call.1} parent=5 // pred_region
        %s446 = ssub.s32 %s24, 1
        // Predicated region
        $region73: #{tpu_custom_call.1} parent=71 // pred_check
          %p447 = pneg %p169
        $region74: #{tpu_custom_call.1} parent=71 // pred_check_branch
          %449 = sbr.rel (%p447) target = $region76
        $region75: #{tpu_custom_call.1} parent=71 // pred_region
          %450 = dma.done [#allocation4], 8192
        $region76: #{tpu_custom_call.1} parent=71 // pred_fallthru
          _
        // Predicated region
        $region77: #{tpu_custom_call.1} parent=71 // pred_check
          %p451 = pneg %p211
        $region78: #{tpu_custom_call.1} parent=71 // pred_check_branch
          %453 = sbr.rel (%p451) target = $region80
        $region79: #{tpu_custom_call.1} parent=71 // pred_region
          %454 = dma.done [#allocation7], 32768
        $region80: #{tpu_custom_call.1} parent=71 // pred_fallthru
          _
        // Predicated region
        $region81: #{tpu_custom_call.1} parent=71 // pred_check
          %p455 = pneg %p253
        $region82: #{tpu_custom_call.1} parent=71 // pred_check_branch
          %457 = sbr.rel (%p455) target = $region84
        $region83: #{tpu_custom_call.1} parent=71 // pred_region
          %458 = dma.done [#allocation7], 8192
        $region84: #{tpu_custom_call.1} parent=71 // pred_fallthru
          _
        %s459 = smul.u32 16, %s34
        %p460 = scmp.lt.s32.totalorder %s33, 1
        %s461 = scalar_select %p460, %s33, 1
        %p462 = scmp.lt.s32.totalorder %s459, 15
        %s463 = scalar_select %p462, %s459, 15
        %s464 = smul.addr %s461, 16
        %s465 = sadd.s32 %s463, %s464
        %s466 = smul.addr %s465, 4
        %s467 = scalar_lea.vmem %s0, %s466
        %p468 = pneg %p64
        %p469 = pneg %p61
        %p470 = pneg %p85
        %p471 = pneg %p82
        %p472 = pneg %p106
        %p473 = pneg %p103
        %p474 = pneg %p127
        %p475 = pneg %p124
        %p476 = pneg %p148
        %p477 = pneg %p145
        %p478 = pneg %p169
        %p479 = pneg %p166
        %p480 = pneg %p190
        %p481 = pneg %p187
        %p482 = pneg %p211
        %p483 = pneg %p208
        %p484 = pneg %p232
        %p485 = pneg %p229
        %p486 = pneg %p253
        %p487 = pneg %p250
        %p488 = pneg %p274
        %p489 = pneg %p271
        %p490 = pneg %p295
        %p491 = pneg %p292
        %p492 = pneg %p316
        %p493 = pneg %p313
        %p494 = pneg %p342
        %p495 = pneg %p339
        %s496 = sand.u32 %s329, 1
        %s497 = scalar_lea.sflag [#allocation5], %s496
        %s498 = sand.u32 %s329, 1
        %s499 = scalar_lea.vmem [#allocation9], %s498
        %s500 = smul.u32 16, %s34
        %p501 = scmp.lt.s32.totalorder %s33, 1
        %s502 = scalar_select %p501, %s33, 1
        %p503 = scmp.lt.s32.totalorder %s500, 15
        %s504 = scalar_select %p503, %s500, 15
        %s505 = smul.addr %s502, 16
        %s506 = sadd.s32 %s504, %s505
        %s507 = smul.addr %s506, 4
        %s508 = scalar_lea.vmem %s0, %s507
        %s509 = smul.u32 16, %s34
        %p511 = scmp.eq.s32.totalorder %s34, 0
        // Predicated region
        $region85: #{tpu_custom_call.1} parent=71 // pred_check
          %p512 = pneg %p511
        $region86: #{tpu_custom_call.1} parent=71 // pred_check_branch
          %514 = sbr.rel (%p512) target = $region88
        $region87: #{tpu_custom_call.1} parent=71 // pred_region
          %515 = vst [vmem:[#allocation2] sm:$0xff] -inf
        $region88: #{tpu_custom_call.1} parent=71 // pred_fallthru
          _
        %v516 = vld [vmem:[%s508] sm:$0xf]
        %v517 = vld [vmem:[%s508 + $0x4] sm:$0xf]
        %v518 = vld [vmem:[%s508 + $0x8] sm:$0xf]
        %v519 = vld [vmem:[%s508 + $0xc] sm:$0xf]
        %v520 = vld [vmem:[%s508 + $0x10] sm:$0xf]
        %v521 = vld [vmem:[%s508 + $0x14] sm:$0xf]
        %v522 = vld [vmem:[%s508 + $0x18] sm:$0xf]
        %v523 = vld [vmem:[%s508 + $0x1c] sm:$0xf]
        %v524 = vld [vmem:[%s508 + $0x20] sm:$0xf]
        %v525 = vld [vmem:[%s508 + $0x24] sm:$0xf]
        %v526 = vld [vmem:[%s508 + $0x28] sm:$0xf]
        %v527 = vld [vmem:[%s508 + $0x2c] sm:$0xf]
        %v528 = vld [vmem:[%s508 + $0x30] sm:$0xf]
        %v529 = vld [vmem:[%s508 + $0x34] sm:$0xf]
        %v530 = vld [vmem:[%s508 + $0x38] sm:$0xf]
        %v531 = vld [vmem:[%s508 + $0x3c] sm:$0xf]
        %v532 = vld [vmem:[%s1] sm:$0x3]
        %v533 = vld [vmem:[%s2] sm:$0x1]
        %v535 = vlaneseq
        %v536 = vshrl.u32 %v535, 7
        %v537 = vsub.s32 0, %v536
        %v538 = vrot.slane %v533, %v537
        %v556 = vunpack.c.l.b16 %v516
        %v557 = vunpack.c.l.b16 %v517
        %v558 = vunpack.c.l.b16 %v518
        %v559 = vunpack.c.l.b16 %v519
        %v560 = vunpack.c.l.b16 %v520
        %v561 = vunpack.c.l.b16 %v521
        %v562 = vunpack.c.l.b16 %v522
        %v563 = vunpack.c.l.b16 %v523
        %v564 = vunpack.c.l.b16 %v524
        %v565 = vunpack.c.l.b16 %v525
        %v566 = vunpack.c.l.b16 %v526
        %v567 = vunpack.c.l.b16 %v527
        %v568 = vunpack.c.l.b16 %v528
        %v569 = vunpack.c.l.b16 %v529
        %v570 = vunpack.c.l.b16 %v530
        %v571 = vunpack.c.l.b16 %v531
        %v572 = vpack.c.b16 %v557, %v556
        %v573 = vpack.c.b16 %v559, %v558
        %v574 = vpack.c.b16 %v561, %v560
        %v575 = vpack.c.b16 %v563, %v562
        %v576 = vpack.c.b16 %v565, %v564
        %v577 = vpack.c.b16 %v567, %v566
        %v578 = vpack.c.b16 %v569, %v568
        %v579 = vpack.c.b16 %v571, %v570
        %vm580 = vcmask 23552
        %v582 = vsel %vm580, %v572, 0
        %v585 = vsel %vm580, %v573, 0
        %v588 = vsel %vm580, %v574, 0
        %v591 = vsel %vm580, %v575, 0
        %v594 = vsel %vm580, %v576, 0
        %v597 = vsel %vm580, %v577, 0
        %v600 = vsel %vm580, %v578, 0
        %v603 = vsel %vm580, %v579, 0
        %vm605 = vcmask 1040384
        %vm606 = vcmask 1041408
        %v607 = vsel %vm605, 4294967295, 65535
        %v608 = vsel %vm606, %v607, 0
        %v610 = vand.u32 %v532, %v608
        %612 = vmatprep.subr.bf16.mxu0 0
        %613 = vmatpush1.bf16.msra.mxu0 0
        %614 = vmatprep.subr.bf16.mxu0 0
        %615 = vmatpush1.bf16.msra.mxu0 0
        %616 = vmatprep.subr.bf16.mxu0 0
        %617 = vmatpush1.bf16.msra.mxu0 0
        %618 = vmatprep.subr.bf16.mxu0 0
        %619 = vmatpush1.bf16.msra.mxu0 0
        %620 = vmatprep.subr.bf16.mxu0 0
        %621 = vmatpush1.bf16.msra.mxu0 0
        %622 = vmatprep.subr.bf16.mxu0 0
        %623 = vmatpush1.bf16.msra.mxu0 0
        %624 = vmatprep.subr.bf16.mxu0 0
        %625 = vmatpush1.bf16.msra.mxu0 0
        %626 = vmatprep.subr.bf16.mxu0 0
        %627 = vmatpush1.bf16.msra.mxu0 %v610
        %628 = vmatprep.subr.bf16.mxu0 0
        %629 = vmatpush2.bf16.msra.mxu0 0
        %630 = vmatprep.subr.bf16.mxu0 0
        %631 = vmatpush2.bf16.msra.mxu0 0
        %632 = vmatprep.subr.bf16.mxu0 0
        %633 = vmatpush2.bf16.msra.mxu0 0
        %634 = vmatprep.subr.bf16.mxu0 0
        %635 = vmatpush2.bf16.msra.mxu0 0
        %636 = vmatprep.subr.bf16.mxu0 0
        %637 = vmatpush2.bf16.msra.mxu0 0
        %638 = vmatprep.subr.bf16.mxu0 0
        %639 = vmatpush2.bf16.msra.mxu0 0
        %640 = vmatprep.subr.bf16.mxu0 0
        %641 = vmatpush2.bf16.msra.mxu0 0
        %642 = vmatprep.subr.bf16.mxu0 0
        %643 = vmatpush2.bf16.msra.mxu0 0
        %644 = vmatprep.mubr.bf16.mxu0 0
        %645 = vmatmul.mubr.bf16.gmra.mxu0 %v582
        %v646 = vpop.f32.mrf.mxu0
        %v647 = vadd.f32 %v538, %v646
        %v648 = vpop.f32.mrf.mxu0
        %v649 = vpop.f32.mrf.mxu0
        %v650 = vadd.f32 %v538, %v649
        %v651 = vpop.f32.mrf.mxu0
        %652 = vmatprep.mubr.bf16.mxu0 0
        %653 = vmatmul.mubr.bf16.gmra.mxu0 %v585
        %v654 = vpop.f32.mrf.mxu0
        %v655 = vadd.f32 %v538, %v654
        %v656 = vpop.f32.mrf.mxu0
        %v657 = vpop.f32.mrf.mxu0
        %v658 = vadd.f32 %v538, %v657
        %v659 = vpop.f32.mrf.mxu0
        %660 = vmatprep.mubr.bf16.mxu0 0
        %661 = vmatmul.mubr.bf16.gmra.mxu0 %v588
        %v662 = vpop.f32.mrf.mxu0
        %v663 = vadd.f32 %v538, %v662
        %v664 = vpop.f32.mrf.mxu0
        %v665 = vpop.f32.mrf.mxu0
        %v666 = vadd.f32 %v538, %v665
        %v667 = vpop.f32.mrf.mxu0
        %668 = vmatprep.mubr.bf16.mxu0 0
        %669 = vmatmul.mubr.bf16.gmra.mxu0 %v591
        %v670 = vpop.f32.mrf.mxu0
        %v671 = vadd.f32 %v538, %v670
        %v672 = vpop.f32.mrf.mxu0
        %v673 = vpop.f32.mrf.mxu0
        %v674 = vadd.f32 %v538, %v673
        %v675 = vpop.f32.mrf.mxu0
        %676 = vmatprep.mubr.bf16.mxu0 0
        %677 = vmatmul.mubr.bf16.gmra.mxu0 %v594
        %v678 = vpop.f32.mrf.mxu0
        %v679 = vadd.f32 %v538, %v678
        %v680 = vpop.f32.mrf.mxu0
        %v681 = vpop.f32.mrf.mxu0
        %v682 = vadd.f32 %v538, %v681
        %v683 = vpop.f32.mrf.mxu0
        %684 = vmatprep.mubr.bf16.mxu0 0
        %685 = vmatmul.mubr.bf16.gmra.mxu0 %v597
        %v686 = vpop.f32.mrf.mxu0
        %v687 = vadd.f32 %v538, %v686
        %v688 = vpop.f32.mrf.mxu0
        %v689 = vpop.f32.mrf.mxu0
        %v690 = vadd.f32 %v538, %v689
        %v691 = vpop.f32.mrf.mxu0
        %692 = vmatprep.mubr.bf16.mxu0 0
        %693 = vmatmul.mubr.bf16.gmra.mxu0 %v600
        %v694 = vpop.f32.mrf.mxu0
        %v695 = vadd.f32 %v538, %v694
        %v696 = vpop.f32.mrf.mxu0
        %v697 = vpop.f32.mrf.mxu0
        %v698 = vadd.f32 %v538, %v697
        %v699 = vpop.f32.mrf.mxu0
        %700 = vmatprep.mubr.bf16.mxu0 0
        %701 = vmatmul.mubr.bf16.gmra.mxu0 %v603
        %v702 = vpop.f32.mrf.mxu0
        %v703 = vadd.f32 %v538, %v702
        %v704 = vpop.f32.mrf.mxu0
        %v705 = vpop.f32.mrf.mxu0
        %v706 = vadd.f32 %v538, %v705
        %v707 = vpop.f32.mrf.mxu0
        %708 = vdwg.mxu0
        %v709 = vmax.f32 %v647, 0.0
        %v710 = vmax.f32 %v650, 0.0
        %v711 = vmax.f32 %v655, 0.0
        %v712 = vmax.f32 %v658, 0.0
        %v713 = vmax.f32 %v663, 0.0
        %v714 = vmax.f32 %v666, 0.0
        %v715 = vmax.f32 %v671, 0.0
        %v716 = vmax.f32 %v674, 0.0
        %v717 = vmax.f32 %v679, 0.0
        %v718 = vmax.f32 %v682, 0.0
        %v719 = vmax.f32 %v687, 0.0
        %v720 = vmax.f32 %v690, 0.0
        %v721 = vmax.f32 %v695, 0.0
        %v722 = vmax.f32 %v698, 0.0
        %v723 = vmax.f32 %v703, 0.0
        %v724 = vmax.f32 %v706, 0.0
        %v725 = vpack.c.bf16 %v710, %v709
        %v726 = vpack.c.bf16 %v712, %v711
        %v727 = vpack.c.bf16 %v714, %v713
        %v728 = vpack.c.bf16 %v716, %v715
        %v729 = vpack.c.bf16 %v718, %v717
        %v730 = vpack.c.bf16 %v720, %v719
        %v731 = vpack.c.bf16 %v722, %v721
        %v732 = vpack.c.bf16 %v724, %v723
        %v733 = vld [vmem:[%s3] sm:$0xf]
        %v734 = vld [vmem:[%s3 + $0x4] sm:$0xf]
        %v735 = vld [vmem:[%s3 + $0x8] sm:$0xf]
        %v736 = vld [vmem:[%s3 + $0xc] sm:$0xf]
        %v737 = vld [vmem:[%s3 + $0x10] sm:$0xf]
        %v738 = vld [vmem:[%s3 + $0x14] sm:$0xf]
        %v739 = vld [vmem:[%s3 + $0x18] sm:$0xf]
        %v740 = vld [vmem:[%s3 + $0x1c] sm:$0xf]
        %v741 = vld [vmem:[%s4] sm:$0x1]
        %v743 = vlaneseq
        %v744 = vshrl.u32 %v743, 7
        %v745 = vsub.s32 0, %v744
        %v746 = vrot.slane %v741, %v745
        %v756 = vunpack.c.l.b16 %v733
        %v757 = vunpack.c.l.b16 %v734
        %v758 = vunpack.c.l.b16 %v735
        %v759 = vunpack.c.l.b16 %v736
        %v760 = vunpack.c.l.b16 %v737
        %v761 = vunpack.c.l.b16 %v738
        %v762 = vunpack.c.l.b16 %v739
        %v763 = vunpack.c.l.b16 %v740
        %v764 = vpack.c.b16 %v757, %v756
        %v765 = vpack.c.b16 %v759, %v758
        %v766 = vpack.c.b16 %v761, %v760
        %v767 = vpack.c.b16 %v763, %v762
        %vm772 = vcmask 523264
        %v774 = vsel %vm772, %v725, 0
        %v777 = vsel %vm772, %v726, 0
        %v780 = vsel %vm772, %v727, 0
        %v783 = vsel %vm772, %v728, 0
        %v786 = vsel %vm772, %v729, 0
        %v789 = vsel %vm772, %v730, 0
        %v792 = vsel %vm772, %v731, 0
        %v795 = vsel %vm772, %v732, 0
        %797 = vmatprep.subr.bf16.mxu0 0
        %798 = vmatpush1.bf16.msra.mxu0 0
        %799 = vmatprep.subr.bf16.mxu0 0
        %800 = vmatpush1.bf16.msra.mxu0 0
        %801 = vmatprep.subr.bf16.mxu0 0
        %802 = vmatpush1.bf16.msra.mxu0 0
        %803 = vmatprep.subr.bf16.mxu0 0
        %804 = vmatpush1.bf16.msra.mxu0 0
        %805 = vmatprep.subr.bf16.mxu0 0
        %806 = vmatpush1.bf16.msra.mxu0 %v767
        %807 = vmatprep.subr.bf16.mxu0 0
        %808 = vmatpush1.bf16.msra.mxu0 %v766
        %809 = vmatprep.subr.bf16.mxu0 0
        %810 = vmatpush1.bf16.msra.mxu0 %v765
        %811 = vmatprep.subr.bf16.mxu0 0
        %812 = vmatpush1.bf16.msra.mxu0 %v764
        %813 = vmatprep.subr.bf16.mxu0 0
        %814 = vmatpush2.bf16.msra.mxu0 0
        %815 = vmatprep.subr.bf16.mxu0 0
        %816 = vmatpush2.bf16.msra.mxu0 0
        %817 = vmatprep.subr.bf16.mxu0 0
        %818 = vmatpush2.bf16.msra.mxu0 0
        %819 = vmatprep.subr.bf16.mxu0 0
        %820 = vmatpush2.bf16.msra.mxu0 0
        %821 = vmatprep.subr.bf16.mxu0 0
        %822 = vmatpush2.bf16.msra.mxu0 0
        %823 = vmatprep.subr.bf16.mxu0 0
        %824 = vmatpush2.bf16.msra.mxu0 0
        %825 = vmatprep.subr.bf16.mxu0 0
        %826 = vmatpush2.bf16.msra.mxu0 0
        %827 = vmatprep.subr.bf16.mxu0 0
        %828 = vmatpush2.bf16.msra.mxu0 0
        %829 = vmatprep.mubr.bf16.mxu0 0
        %830 = vmatmul.mubr.bf16.gmra.mxu0 %v774
        %v831 = vpop.f32.mrf.mxu0
        %v832 = vadd.f32 %v746, %v831
        %v833 = vpop.f32.mrf.mxu0
        %v834 = vpop.f32.mrf.mxu0
        %v835 = vadd.f32 %v746, %v834
        %v836 = vpop.f32.mrf.mxu0
        %837 = vmatprep.mubr.bf16.mxu0 0
        %838 = vmatmul.mubr.bf16.gmra.mxu0 %v777
        %v839 = vpop.f32.mrf.mxu0
        %v840 = vadd.f32 %v746, %v839
        %v841 = vpop.f32.mrf.mxu0
        %v842 = vpop.f32.mrf.mxu0
        %v843 = vadd.f32 %v746, %v842
        %v844 = vpop.f32.mrf.mxu0
        %845 = vmatprep.mubr.bf16.mxu0 0
        %846 = vmatmul.mubr.bf16.gmra.mxu0 %v780
        %v847 = vpop.f32.mrf.mxu0
        %v848 = vadd.f32 %v746, %v847
        %v849 = vpop.f32.mrf.mxu0
        %v850 = vpop.f32.mrf.mxu0
        %v851 = vadd.f32 %v746, %v850
        %v852 = vpop.f32.mrf.mxu0
        %853 = vmatprep.mubr.bf16.mxu0 0
        %854 = vmatmul.mubr.bf16.gmra.mxu0 %v783
        %v855 = vpop.f32.mrf.mxu0
        %v856 = vadd.f32 %v746, %v855
        %v857 = vpop.f32.mrf.mxu0
        %v858 = vpop.f32.mrf.mxu0
        %v859 = vadd.f32 %v746, %v858
        %v860 = vpop.f32.mrf.mxu0
        %861 = vmatprep.mubr.bf16.mxu0 0
        %862 = vmatmul.mubr.bf16.gmra.mxu0 %v786
        %v863 = vpop.f32.mrf.mxu0
        %v864 = vadd.f32 %v746, %v863
        %v865 = vpop.f32.mrf.mxu0
        %v866 = vpop.f32.mrf.mxu0
        %v867 = vadd.f32 %v746, %v866
        %v868 = vpop.f32.mrf.mxu0
        %869 = vmatprep.mubr.bf16.mxu0 0
        %870 = vmatmul.mubr.bf16.gmra.mxu0 %v789
        %v871 = vpop.f32.mrf.mxu0
        %v872 = vadd.f32 %v746, %v871
        %v873 = vpop.f32.mrf.mxu0
        %v874 = vpop.f32.mrf.mxu0
        %v875 = vadd.f32 %v746, %v874
        %v876 = vpop.f32.mrf.mxu0
        %877 = vmatprep.mubr.bf16.mxu0 0
        %878 = vmatmul.mubr.bf16.gmra.mxu0 %v792
        %v879 = vpop.f32.mrf.mxu0
        %v880 = vadd.f32 %v746, %v879
        %v881 = vpop.f32.mrf.mxu0
        %v882 = vpop.f32.mrf.mxu0
        %v883 = vadd.f32 %v746, %v882
        %v884 = vpop.f32.mrf.mxu0
        %885 = vmatprep.mubr.bf16.mxu0 0
        %886 = vmatmul.mubr.bf16.gmra.mxu0 %v795
        %v887 = vpop.f32.mrf.mxu0
        %v888 = vadd.f32 %v746, %v887
        %v889 = vpop.f32.mrf.mxu0
        %v890 = vpop.f32.mrf.mxu0
        %v891 = vadd.f32 %v746, %v890
        %v892 = vpop.f32.mrf.mxu0
        %893 = vdwg.mxu0
        %v894 = vmax.f32 %v832, 0.0
        %v895 = vmax.f32 %v835, 0.0
        %v896 = vmax.f32 %v840, 0.0
        %v897 = vmax.f32 %v843, 0.0
        %v898 = vmax.f32 %v848, 0.0
        %v899 = vmax.f32 %v851, 0.0
        %v900 = vmax.f32 %v856, 0.0
        %v901 = vmax.f32 %v859, 0.0
        %v902 = vmax.f32 %v864, 0.0
        %v903 = vmax.f32 %v867, 0.0
        %v904 = vmax.f32 %v872, 0.0
        %v905 = vmax.f32 %v875, 0.0
        %v906 = vmax.f32 %v880, 0.0
        %v907 = vmax.f32 %v883, 0.0
        %v908 = vmax.f32 %v888, 0.0
        %v909 = vmax.f32 %v891, 0.0
        %v910 = vpack.c.bf16 %v895, %v894
        %v911 = vpack.c.bf16 %v897, %v896
        %v912 = vpack.c.bf16 %v899, %v898
        %v913 = vpack.c.bf16 %v901, %v900
        %v914 = vpack.c.bf16 %v903, %v902
        %v915 = vpack.c.bf16 %v905, %v904
        %v916 = vpack.c.bf16 %v907, %v906
        %v917 = vpack.c.bf16 %v909, %v908
        %v918 = vld [vmem:[#allocation3] sm:$0xff]
        %v919 = vld [vmem:[#allocation3 + $0x8] sm:$0xff]
        %v920 = vld [vmem:[#allocation3 + $0x10] sm:$0xff]
        %v921 = vld [vmem:[#allocation3 + $0x18] sm:$0xff]
        %v922 = vld [vmem:[#allocation3 + $0x20] sm:$0xff]
        %v923 = vld [vmem:[#allocation3 + $0x28] sm:$0xff]
        %v924 = vld [vmem:[#allocation3 + $0x30] sm:$0xff]
        %v925 = vld [vmem:[#allocation3 + $0x38] sm:$0xff]
        %v926 = vld [vmem:[#allocation3 + $0x40] sm:$0xff]
        %v927 = vld [vmem:[#allocation3 + $0x48] sm:$0xff]
        %v928 = vld [vmem:[#allocation3 + $0x50] sm:$0xff]
        %v929 = vld [vmem:[#allocation3 + $0x58] sm:$0xff]
        %v930 = vld [vmem:[#allocation3 + $0x60] sm:$0xff]
        %v931 = vld [vmem:[#allocation3 + $0x68] sm:$0xff]
        %v932 = vld [vmem:[#allocation3 + $0x70] sm:$0xff]
        %v933 = vld [vmem:[#allocation3 + $0x78] sm:$0xff]
        %v934 = vld [vmem:[#allocation3 + $0x80] sm:$0xff]
        %v935 = vld [vmem:[#allocation3 + $0x88] sm:$0xff]
        %v936 = vld [vmem:[#allocation3 + $0x90] sm:$0xff]
        %v937 = vld [vmem:[#allocation3 + $0x98] sm:$0xff]
        %v938 = vld [vmem:[#allocation3 + $0xa0] sm:$0xff]
        %v939 = vld [vmem:[#allocation3 + $0xa8] sm:$0xff]
        %v940 = vld [vmem:[#allocation3 + $0xb0] sm:$0xff]
        %v941 = vld [vmem:[#allocation3 + $0xb8] sm:$0xff]
        %v942 = vld [vmem:[#allocation3 + $0xc0] sm:$0xff]
        %v943 = vld [vmem:[#allocation3 + $0xc8] sm:$0xff]
        %v944 = vld [vmem:[#allocation3 + $0xd0] sm:$0xff]
        %v945 = vld [vmem:[#allocation3 + $0xd8] sm:$0xff]
        %v946 = vld [vmem:[#allocation3 + $0xe0] sm:$0xff]
        %v947 = vld [vmem:[#allocation3 + $0xe8] sm:$0xff]
        %v948 = vld [vmem:[#allocation3 + $0xf0] sm:$0xff]
        %v949 = vld [vmem:[#allocation3 + $0xf8] sm:$0xff]
        %v950 = vld [vmem:[#allocation3 + $0x100] sm:$0xff]
        %v951 = vld [vmem:[#allocation3 + $0x108] sm:$0xff]
        %v952 = vld [vmem:[#allocation3 + $0x110] sm:$0xff]
        %v953 = vld [vmem:[#allocation3 + $0x118] sm:$0xff]
        %v954 = vld [vmem:[#allocation3 + $0x120] sm:$0xff]
        %v955 = vld [vmem:[#allocation3 + $0x128] sm:$0xff]
        %v956 = vld [vmem:[#allocation3 + $0x130] sm:$0xff]
        %v957 = vld [vmem:[#allocation3 + $0x138] sm:$0xff]
        %v958 = vld [vmem:[#allocation3 + $0x140] sm:$0xff]
        %v959 = vld [vmem:[#allocation3 + $0x148] sm:$0xff]
        %v960 = vld [vmem:[#allocation3 + $0x150] sm:$0xff]
        %v961 = vld [vmem:[#allocation3 + $0x158] sm:$0xff]
        %v962 = vld [vmem:[#allocation3 + $0x160] sm:$0xff]
        %v963 = vld [vmem:[#allocation3 + $0x168] sm:$0xff]
        %v964 = vld [vmem:[#allocation3 + $0x170] sm:$0xff]
        %v965 = vld [vmem:[#allocation3 + $0x178] sm:$0xff]
        %v966 = vld [vmem:[#allocation3 + $0x180] sm:$0xff]
        %v967 = vld [vmem:[#allocation3 + $0x188] sm:$0xff]
        %v968 = vld [vmem:[#allocation3 + $0x190] sm:$0xff]
        %v969 = vld [vmem:[#allocation3 + $0x198] sm:$0xff]
        %v970 = vld [vmem:[#allocation3 + $0x1a0] sm:$0xff]
        %v971 = vld [vmem:[#allocation3 + $0x1a8] sm:$0xff]
        %v972 = vld [vmem:[#allocation3 + $0x1b0] sm:$0xff]
        %v973 = vld [vmem:[#allocation3 + $0x1b8] sm:$0xff]
        %v974 = vld [vmem:[#allocation3 + $0x1c0] sm:$0xff]
        %v975 = vld [vmem:[#allocation3 + $0x1c8] sm:$0xff]
        %v976 = vld [vmem:[#allocation3 + $0x1d0] sm:$0xff]
        %v977 = vld [vmem:[#allocation3 + $0x1d8] sm:$0xff]
        %v978 = vld [vmem:[#allocation3 + $0x1e0] sm:$0xff]
        %v979 = vld [vmem:[#allocation3 + $0x1e8] sm:$0xff]
        %v980 = vld [vmem:[#allocation3 + $0x1f0] sm:$0xff]
        %v981 = vld [vmem:[#allocation3 + $0x1f8] sm:$0xff]
        %v982 = vld [vmem:[%s6] sm:$0xff]
        %v984 = vlaneseq
        %v985 = vshrl.u32 %v984, 7
        %v986 = vsub.s32 0, %v985
        %v987 = vrot.slane %v982, %v986
        %v988 = vlaneseq
        %v989 = vshrl.u32 %v988, 7
        %v990 = vsub.s32 1, %v989
        %v991 = vrot.slane %v982, %v990
        %v992 = vlaneseq
        %v993 = vshrl.u32 %v992, 7
        %v994 = vsub.s32 2, %v993
        %v995 = vrot.slane %v982, %v994
        %v996 = vlaneseq
        %v997 = vshrl.u32 %v996, 7
        %v998 = vsub.s32 3, %v997
        %v999 = vrot.slane %v982, %v998
        %v1000 = vlaneseq
        %v1001 = vshrl.u32 %v1000, 7
        %v1002 = vsub.s32 4, %v1001
        %v1003 = vrot.slane %v982, %v1002
        %v1004 = vlaneseq
        %v1005 = vshrl.u32 %v1004, 7
        %v1006 = vsub.s32 5, %v1005
        %v1007 = vrot.slane %v982, %v1006
        %v1008 = vlaneseq
        %v1009 = vshrl.u32 %v1008, 7
        %v1010 = vsub.s32 6, %v1009
        %v1011 = vrot.slane %v982, %v1010
        %v1012 = vlaneseq
        %v1013 = vshrl.u32 %v1012, 7
        %v1014 = vsub.s32 7, %v1013
        %v1015 = vrot.slane %v982, %v1014
        %v1088 = vunpack.c.l.b16 %v918
        %v1089 = vunpack.c.h.b16 %v918
        %v1090 = vunpack.c.l.b16 %v919
        %v1091 = vunpack.c.h.b16 %v919
        %v1092 = vunpack.c.l.b16 %v920
        %v1093 = vunpack.c.h.b16 %v920
        %v1094 = vunpack.c.l.b16 %v921
        %v1095 = vunpack.c.h.b16 %v921
        %v1096 = vunpack.c.l.b16 %v922
        %v1097 = vunpack.c.h.b16 %v922
        %v1098 = vunpack.c.l.b16 %v923
        %v1099 = vunpack.c.h.b16 %v923
        %v1100 = vunpack.c.l.b16 %v924
        %v1101 = vunpack.c.h.b16 %v924
        %v1102 = vunpack.c.l.b16 %v925
        %v1103 = vunpack.c.h.b16 %v925
        %v1104 = vunpack.c.l.b16 %v926
        %v1105 = vunpack.c.h.b16 %v926
        %v1106 = vunpack.c.l.b16 %v927
        %v1107 = vunpack.c.h.b16 %v927
        %v1108 = vunpack.c.l.b16 %v928
        %v1109 = vunpack.c.h.b16 %v928
        %v1110 = vunpack.c.l.b16 %v929
        %v1111 = vunpack.c.h.b16 %v929
        %v1112 = vunpack.c.l.b16 %v930
        %v1113 = vunpack.c.h.b16 %v930
        %v1114 = vunpack.c.l.b16 %v931
        %v1115 = vunpack.c.h.b16 %v931
        %v1116 = vunpack.c.l.b16 %v932
        %v1117 = vunpack.c.h.b16 %v932
        %v1118 = vunpack.c.l.b16 %v933
        %v1119 = vunpack.c.h.b16 %v933
        %v1120 = vunpack.c.l.b16 %v934
        %v1121 = vunpack.c.h.b16 %v934
        %v1122 = vunpack.c.l.b16 %v935
        %v1123 = vunpack.c.h.b16 %v935
        %v1124 = vunpack.c.l.b16 %v936
        %v1125 = vunpack.c.h.b16 %v936
        %v1126 = vunpack.c.l.b16 %v937
        %v1127 = vunpack.c.h.b16 %v937
        %v1128 = vunpack.c.l.b16 %v938
        %v1129 = vunpack.c.h.b16 %v938
        %v1130 = vunpack.c.l.b16 %v939
        %v1131 = vunpack.c.h.b16 %v939
        %v1132 = vunpack.c.l.b16 %v940
        %v1133 = vunpack.c.h.b16 %v940
        %v1134 = vunpack.c.l.b16 %v941
        %v1135 = vunpack.c.h.b16 %v941
        %v1136 = vunpack.c.l.b16 %v942
        %v1137 = vunpack.c.h.b16 %v942
        %v1138 = vunpack.c.l.b16 %v943
        %v1139 = vunpack.c.h.b16 %v943
        %v1140 = vunpack.c.l.b16 %v944
        %v1141 = vunpack.c.h.b16 %v944
        %v1142 = vunpack.c.l.b16 %v945
        %v1143 = vunpack.c.h.b16 %v945
        %v1144 = vunpack.c.l.b16 %v946
        %v1145 = vunpack.c.h.b16 %v946
        %v1146 = vunpack.c.l.b16 %v947
        %v1147 = vunpack.c.h.b16 %v947
        %v1148 = vunpack.c.l.b16 %v948
        %v1149 = vunpack.c.h.b16 %v948
        %v1150 = vunpack.c.l.b16 %v949
        %v1151 = vunpack.c.h.b16 %v949
        %v1152 = vunpack.c.l.b16 %v950
        %v1153 = vunpack.c.h.b16 %v950
        %v1154 = vunpack.c.l.b16 %v951
        %v1155 = vunpack.c.h.b16 %v951
        %v1156 = vunpack.c.l.b16 %v952
        %v1157 = vunpack.c.h.b16 %v952
        %v1158 = vunpack.c.l.b16 %v953
        %v1159 = vunpack.c.h.b16 %v953
        %v1160 = vunpack.c.l.b16 %v954
        %v1161 = vunpack.c.h.b16 %v954
        %v1162 = vunpack.c.l.b16 %v955
        %v1163 = vunpack.c.h.b16 %v955
        %v1164 = vunpack.c.l.b16 %v956
        %v1165 = vunpack.c.h.b16 %v956
        %v1166 = vunpack.c.l.b16 %v957
        %v1167 = vunpack.c.h.b16 %v957
        %v1168 = vunpack.c.l.b16 %v958
        %v1169 = vunpack.c.h.b16 %v958
        %v1170 = vunpack.c.l.b16 %v959
        %v1171 = vunpack.c.h.b16 %v959
        %v1172 = vunpack.c.l.b16 %v960
        %v1173 = vunpack.c.h.b16 %v960
        %v1174 = vunpack.c.l.b16 %v961
        %v1175 = vunpack.c.h.b16 %v961
        %v1176 = vunpack.c.l.b16 %v962
        %v1177 = vunpack.c.h.b16 %v962
        %v1178 = vunpack.c.l.b16 %v963
        %v1179 = vunpack.c.h.b16 %v963
        %v1180 = vunpack.c.l.b16 %v964
        %v1181 = vunpack.c.h.b16 %v964
        %v1182 = vunpack.c.l.b16 %v965
        %v1183 = vunpack.c.h.b16 %v965
        %v1184 = vunpack.c.l.b16 %v966
        %v1185 = vunpack.c.h.b16 %v966
        %v1186 = vunpack.c.l.b16 %v967
        %v1187 = vunpack.c.h.b16 %v967
        %v1188 = vunpack.c.l.b16 %v968
        %v1189 = vunpack.c.h.b16 %v968
        %v1190 = vunpack.c.l.b16 %v969
        %v1191 = vunpack.c.h.b16 %v969
        %v1192 = vunpack.c.l.b16 %v970
        %v1193 = vunpack.c.h.b16 %v970
        %v1194 = vunpack.c.l.b16 %v971
        %v1195 = vunpack.c.h.b16 %v971
        %v1196 = vunpack.c.l.b16 %v972
        %v1197 = vunpack.c.h.b16 %v972
        %v1198 = vunpack.c.l.b16 %v973
        %v1199 = vunpack.c.h.b16 %v973
        %v1200 = vunpack.c.l.b16 %v974
        %v1201 = vunpack.c.h.b16 %v974
        %v1202 = vunpack.c.l.b16 %v975
        %v1203 = vunpack.c.h.b16 %v975
        %v1204 = vunpack.c.l.b16 %v976
        %v1205 = vunpack.c.h.b16 %v976
        %v1206 = vunpack.c.l.b16 %v977
        %v1207 = vunpack.c.h.b16 %v977
        %v1208 = vunpack.c.l.b16 %v978
        %v1209 = vunpack.c.h.b16 %v978
        %v1210 = vunpack.c.l.b16 %v979
        %v1211 = vunpack.c.h.b16 %v979
        %v1212 = vunpack.c.l.b16 %v980
        %v1213 = vunpack.c.h.b16 %v980
        %v1214 = vunpack.c.l.b16 %v981
        %v1215 = vunpack.c.h.b16 %v981
        %v1216 = vpack.c.b16 %v1096, %v1088
        %v1217 = vpack.c.b16 %v1097, %v1089
        %v1218 = vpack.c.b16 %v1098, %v1090
        %v1219 = vpack.c.b16 %v1099, %v1091
        %v1220 = vpack.c.b16 %v1100, %v1092
        %v1221 = vpack.c.b16 %v1101, %v1093
        %v1222 = vpack.c.b16 %v1102, %v1094
        %v1223 = vpack.c.b16 %v1103, %v1095
        %v1224 = vpack.c.b16 %v1112, %v1104
        %v1225 = vpack.c.b16 %v1113, %v1105
        %v1226 = vpack.c.b16 %v1114, %v1106
        %v1227 = vpack.c.b16 %v1115, %v1107
        %v1228 = vpack.c.b16 %v1116, %v1108
        %v1229 = vpack.c.b16 %v1117, %v1109
        %v1230 = vpack.c.b16 %v1118, %v1110
        %v1231 = vpack.c.b16 %v1119, %v1111
        %v1232 = vpack.c.b16 %v1128, %v1120
        %v1233 = vpack.c.b16 %v1129, %v1121
        %v1234 = vpack.c.b16 %v1130, %v1122
        %v1235 = vpack.c.b16 %v1131, %v1123
        %v1236 = vpack.c.b16 %v1132, %v1124
        %v1237 = vpack.c.b16 %v1133, %v1125
        %v1238 = vpack.c.b16 %v1134, %v1126
        %v1239 = vpack.c.b16 %v1135, %v1127
        %v1240 = vpack.c.b16 %v1144, %v1136
        %v1241 = vpack.c.b16 %v1145, %v1137
        %v1242 = vpack.c.b16 %v1146, %v1138
        %v1243 = vpack.c.b16 %v1147, %v1139
        %v1244 = vpack.c.b16 %v1148, %v1140
        %v1245 = vpack.c.b16 %v1149, %v1141
        %v1246 = vpack.c.b16 %v1150, %v1142
        %v1247 = vpack.c.b16 %v1151, %v1143
        %v1248 = vpack.c.b16 %v1160, %v1152
        %v1249 = vpack.c.b16 %v1161, %v1153
        %v1250 = vpack.c.b16 %v1162, %v1154
        %v1251 = vpack.c.b16 %v1163, %v1155
        %v1252 = vpack.c.b16 %v1164, %v1156
        %v1253 = vpack.c.b16 %v1165, %v1157
        %v1254 = vpack.c.b16 %v1166, %v1158
        %v1255 = vpack.c.b16 %v1167, %v1159
        %v1256 = vpack.c.b16 %v1176, %v1168
        %v1257 = vpack.c.b16 %v1177, %v1169
        %v1258 = vpack.c.b16 %v1178, %v1170
        %v1259 = vpack.c.b16 %v1179, %v1171
        %v1260 = vpack.c.b16 %v1180, %v1172
        %v1261 = vpack.c.b16 %v1181, %v1173
        %v1262 = vpack.c.b16 %v1182, %v1174
        %v1263 = vpack.c.b16 %v1183, %v1175
        %v1264 = vpack.c.b16 %v1192, %v1184
        %v1265 = vpack.c.b16 %v1193, %v1185
        %v1266 = vpack.c.b16 %v1194, %v1186
        %v1267 = vpack.c.b16 %v1195, %v1187
        %v1268 = vpack.c.b16 %v1196, %v1188
        %v1269 = vpack.c.b16 %v1197, %v1189
        %v1270 = vpack.c.b16 %v1198, %v1190
        %v1271 = vpack.c.b16 %v1199, %v1191
        %v1272 = vpack.c.b16 %v1208, %v1200
        %v1273 = vpack.c.b16 %v1209, %v1201
        %v1274 = vpack.c.b16 %v1210, %v1202
        %v1275 = vpack.c.b16 %v1211, %v1203
        %v1276 = vpack.c.b16 %v1212, %v1204
        %v1277 = vpack.c.b16 %v1213, %v1205
        %v1278 = vpack.c.b16 %v1214, %v1206
        %v1279 = vpack.c.b16 %v1215, %v1207
        %1344 = vmatprep.subr.bf16.mxu0 %v1273
        %1345 = vmatpush1.bf16.msra.mxu0 %v1272
        %1346 = vmatprep.subr.bf16.mxu0 %v1265
        %1347 = vmatpush1.bf16.msra.mxu0 %v1264
        %1348 = vmatprep.subr.bf16.mxu0 %v1257
        %1349 = vmatpush1.bf16.msra.mxu0 %v1256
        %1350 = vmatprep.subr.bf16.mxu0 %v1249
        %1351 = vmatpush1.bf16.msra.mxu0 %v1248
        %1352 = vmatprep.subr.bf16.mxu0 %v1241
        %1353 = vmatpush1.bf16.msra.mxu0 %v1240
        %1354 = vmatprep.subr.bf16.mxu0 %v1233
        %1355 = vmatpush1.bf16.msra.mxu0 %v1232
        %1356 = vmatprep.subr.bf16.mxu0 %v1225
        %1357 = vmatpush1.bf16.msra.mxu0 %v1224
        %1358 = vmatprep.subr.bf16.mxu0 %v1217
        %1359 = vmatpush1.bf16.msra.mxu0 %v1216
        %1360 = vmatprep.subr.bf16.mxu0 0
        %1361 = vmatpush2.bf16.msra.mxu0 0
        %1362 = vmatprep.subr.bf16.mxu0 0
        %1363 = vmatpush2.bf16.msra.mxu0 0
        %1364 = vmatprep.subr.bf16.mxu0 0
        %1365 = vmatpush2.bf16.msra.mxu0 0
        %1366 = vmatprep.subr.bf16.mxu0 0
        %1367 = vmatpush2.bf16.msra.mxu0 0
        %1368 = vmatprep.subr.bf16.mxu0 0
        %1369 = vmatpush2.bf16.msra.mxu0 0
        %1370 = vmatprep.subr.bf16.mxu0 0
        %1371 = vmatpush2.bf16.msra.mxu0 0
        %1372 = vmatprep.subr.bf16.mxu0 0
        %1373 = vmatpush2.bf16.msra.mxu0 0
        %1374 = vmatprep.subr.bf16.mxu0 0
        %1375 = vmatpush2.bf16.msra.mxu0 0
        %1376 = vmatprep.mubr.bf16.mxu0 0
        %1377 = vmatmul.mubr.bf16.gmra.mxu0 %v910
        %v1378 = vpop.f32.mrf.mxu0
        %v1379 = vadd.f32 %v987, %v1378
        %v1380 = vpop.f32.mrf.mxu0
        %v1381 = vadd.f32 %v991, %v1380
        %v1382 = vpop.f32.mrf.mxu0
        %v1383 = vadd.f32 %v987, %v1382
        %v1384 = vpop.f32.mrf.mxu0
        %v1385 = vadd.f32 %v991, %v1384
        %1386 = vmatprep.mubr.bf16.mxu0 0
        %1387 = vmatmul.mubr.bf16.gmra.mxu0 %v911
        %v1388 = vpop.f32.mrf.mxu0
        %v1389 = vadd.f32 %v987, %v1388
        %v1390 = vpop.f32.mrf.mxu0
        %v1391 = vadd.f32 %v991, %v1390
        %v1392 = vpop.f32.mrf.mxu0
        %v1393 = vadd.f32 %v987, %v1392
        %v1394 = vpop.f32.mrf.mxu0
        %v1395 = vadd.f32 %v991, %v1394
        %1396 = vmatprep.mubr.bf16.mxu0 0
        %1397 = vmatmul.mubr.bf16.gmra.mxu0 %v912
        %v1398 = vpop.f32.mrf.mxu0
        %v1399 = vadd.f32 %v987, %v1398
        %v1400 = vpop.f32.mrf.mxu0
        %v1401 = vadd.f32 %v991, %v1400
        %v1402 = vpop.f32.mrf.mxu0
        %v1403 = vadd.f32 %v987, %v1402
        %v1404 = vpop.f32.mrf.mxu0
        %v1405 = vadd.f32 %v991, %v1404
        %1406 = vmatprep.mubr.bf16.mxu0 0
        %1407 = vmatmul.mubr.bf16.gmra.mxu0 %v913
        %v1408 = vpop.f32.mrf.mxu0
        %v1409 = vadd.f32 %v987, %v1408
        %v1410 = vpop.f32.mrf.mxu0
        %v1411 = vadd.f32 %v991, %v1410
        %v1412 = vpop.f32.mrf.mxu0
        %v1413 = vadd.f32 %v987, %v1412
        %v1414 = vpop.f32.mrf.mxu0
        %v1415 = vadd.f32 %v991, %v1414
        %1416 = vmatprep.mubr.bf16.mxu0 0
        %1417 = vmatmul.mubr.bf16.gmra.mxu0 %v914
        %v1418 = vpop.f32.mrf.mxu0
        %v1419 = vadd.f32 %v987, %v1418
        %v1420 = vpop.f32.mrf.mxu0
        %v1421 = vadd.f32 %v991, %v1420
        %v1422 = vpop.f32.mrf.mxu0
        %v1423 = vadd.f32 %v987, %v1422
        %v1424 = vpop.f32.mrf.mxu0
        %v1425 = vadd.f32 %v991, %v1424
        %1426 = vmatprep.mubr.bf16.mxu0 0
        %1427 = vmatmul.mubr.bf16.gmra.mxu0 %v915
        %v1428 = vpop.f32.mrf.mxu0
        %v1429 = vadd.f32 %v987, %v1428
        %v1430 = vpop.f32.mrf.mxu0
        %v1431 = vadd.f32 %v991, %v1430
        %v1432 = vpop.f32.mrf.mxu0
        %v1433 = vadd.f32 %v987, %v1432
        %v1434 = vpop.f32.mrf.mxu0
        %v1435 = vadd.f32 %v991, %v1434
        %1436 = vmatprep.mubr.bf16.mxu0 0
        %1437 = vmatmul.mubr.bf16.gmra.mxu0 %v916
        %v1438 = vpop.f32.mrf.mxu0
        %v1439 = vadd.f32 %v987, %v1438
        %v1440 = vpop.f32.mrf.mxu0
        %v1441 = vadd.f32 %v991, %v1440
        %v1442 = vpop.f32.mrf.mxu0
        %v1443 = vadd.f32 %v987, %v1442
        %v1444 = vpop.f32.mrf.mxu0
        %v1445 = vadd.f32 %v991, %v1444
        %1446 = vmatprep.mubr.bf16.mxu0 0
        %1447 = vmatmul.mubr.bf16.gmra.mxu0 %v917
        %v1448 = vpop.f32.mrf.mxu0
        %v1449 = vadd.f32 %v987, %v1448
        %v1450 = vpop.f32.mrf.mxu0
        %v1451 = vadd.f32 %v991, %v1450
        %v1452 = vpop.f32.mrf.mxu0
        %v1453 = vadd.f32 %v987, %v1452
        %v1454 = vpop.f32.mrf.mxu0
        %v1455 = vadd.f32 %v991, %v1454
        %1456 = vdwg.mxu0
        %1457 = vmatprep.subr.bf16.mxu0 %v1275
        %1458 = vmatpush1.bf16.msra.mxu0 %v1274
        %1459 = vmatprep.subr.bf16.mxu0 %v1267
        %1460 = vmatpush1.bf16.msra.mxu0 %v1266
        %1461 = vmatprep.subr.bf16.mxu0 %v1259
        %1462 = vmatpush1.bf16.msra.mxu0 %v1258
        %1463 = vmatprep.subr.bf16.mxu0 %v1251
        %1464 = vmatpush1.bf16.msra.mxu0 %v1250
        %1465 = vmatprep.subr.bf16.mxu0 %v1243
        %1466 = vmatpush1.bf16.msra.mxu0 %v1242
        %1467 = vmatprep.subr.bf16.mxu0 %v1235
        %1468 = vmatpush1.bf16.msra.mxu0 %v1234
        %1469 = vmatprep.subr.bf16.mxu0 %v1227
        %1470 = vmatpush1.bf16.msra.mxu0 %v1226
        %1471 = vmatprep.subr.bf16.mxu0 %v1219
        %1472 = vmatpush1.bf16.msra.mxu0 %v1218
        %1473 = vmatprep.subr.bf16.mxu0 0
        %1474 = vmatpush2.bf16.msra.mxu0 0
        %1475 = vmatprep.subr.bf16.mxu0 0
        %1476 = vmatpush2.bf16.msra.mxu0 0
        %1477 = vmatprep.subr.bf16.mxu0 0
        %1478 = vmatpush2.bf16.msra.mxu0 0
        %1479 = vmatprep.subr.bf16.mxu0 0
        %1480 = vmatpush2.bf16.msra.mxu0 0
        %1481 = vmatprep.subr.bf16.mxu0 0
        %1482 = vmatpush2.bf16.msra.mxu0 0
        %1483 = vmatprep.subr.bf16.mxu0 0
        %1484 = vmatpush2.bf16.msra.mxu0 0
        %1485 = vmatprep.subr.bf16.mxu0 0
        %1486 = vmatpush2.bf16.msra.mxu0 0
        %1487 = vmatprep.subr.bf16.mxu0 0
        %1488 = vmatpush2.bf16.msra.mxu0 0
        %1489 = vmatprep.mubr.bf16.mxu0 0
        %1490 = vmatmul.mubr.bf16.gmra.mxu0 %v910
        %v1491 = vpop.f32.mrf.mxu0
        %v1492 = vadd.f32 %v995, %v1491
        %v1493 = vpop.f32.mrf.mxu0
        %v1494 = vadd.f32 %v999, %v1493
        %v1495 = vpop.f32.mrf.mxu0
        %v1496 = vadd.f32 %v995, %v1495
        %v1497 = vpop.f32.mrf.mxu0
        %v1498 = vadd.f32 %v999, %v1497
        %1499 = vmatprep.mubr.bf16.mxu0 0
        %1500 = vmatmul.mubr.bf16.gmra.mxu0 %v911
        %v1501 = vpop.f32.mrf.mxu0
        %v1502 = vadd.f32 %v995, %v1501
        %v1503 = vpop.f32.mrf.mxu0
        %v1504 = vadd.f32 %v999, %v1503
        %v1505 = vpop.f32.mrf.mxu0
        %v1506 = vadd.f32 %v995, %v1505
        %v1507 = vpop.f32.mrf.mxu0
        %v1508 = vadd.f32 %v999, %v1507
        %1509 = vmatprep.mubr.bf16.mxu0 0
        %1510 = vmatmul.mubr.bf16.gmra.mxu0 %v912
        %v1511 = vpop.f32.mrf.mxu0
        %v1512 = vadd.f32 %v995, %v1511
        %v1513 = vpop.f32.mrf.mxu0
        %v1514 = vadd.f32 %v999, %v1513
        %v1515 = vpop.f32.mrf.mxu0
        %v1516 = vadd.f32 %v995, %v1515
        %v1517 = vpop.f32.mrf.mxu0
        %v1518 = vadd.f32 %v999, %v1517
        %1519 = vmatprep.mubr.bf16.mxu0 0
        %1520 = vmatmul.mubr.bf16.gmra.mxu0 %v913
        %v1521 = vpop.f32.mrf.mxu0
        %v1522 = vadd.f32 %v995, %v1521
        %v1523 = vpop.f32.mrf.mxu0
        %v1524 = vadd.f32 %v999, %v1523
        %v1525 = vpop.f32.mrf.mxu0
        %v1526 = vadd.f32 %v995, %v1525
        %v1527 = vpop.f32.mrf.mxu0
        %v1528 = vadd.f32 %v999, %v1527
        %1529 = vmatprep.mubr.bf16.mxu0 0
        %1530 = vmatmul.mubr.bf16.gmra.mxu0 %v914
        %v1531 = vpop.f32.mrf.mxu0
        %v1532 = vadd.f32 %v995, %v1531
        %v1533 = vpop.f32.mrf.mxu0
        %v1534 = vadd.f32 %v999, %v1533
        %v1535 = vpop.f32.mrf.mxu0
        %v1536 = vadd.f32 %v995, %v1535
        %v1537 = vpop.f32.mrf.mxu0
        %v1538 = vadd.f32 %v999, %v1537
        %1539 = vmatprep.mubr.bf16.mxu0 0
        %1540 = vmatmul.mubr.bf16.gmra.mxu0 %v915
        %v1541 = vpop.f32.mrf.mxu0
        %v1542 = vadd.f32 %v995, %v1541
        %v1543 = vpop.f32.mrf.mxu0
        %v1544 = vadd.f32 %v999, %v1543
        %v1545 = vpop.f32.mrf.mxu0
        %v1546 = vadd.f32 %v995, %v1545
        %v1547 = vpop.f32.mrf.mxu0
        %v1548 = vadd.f32 %v999, %v1547
        %1549 = vmatprep.mubr.bf16.mxu0 0
        %1550 = vmatmul.mubr.bf16.gmra.mxu0 %v916
        %v1551 = vpop.f32.mrf.mxu0
        %v1552 = vadd.f32 %v995, %v1551
        %v1553 = vpop.f32.mrf.mxu0
        %v1554 = vadd.f32 %v999, %v1553
        %v1555 = vpop.f32.mrf.mxu0
        %v1556 = vadd.f32 %v995, %v1555
        %v1557 = vpop.f32.mrf.mxu0
        %v1558 = vadd.f32 %v999, %v1557
        %1559 = vmatprep.mubr.bf16.mxu0 0
        %1560 = vmatmul.mubr.bf16.gmra.mxu0 %v917
        %v1561 = vpop.f32.mrf.mxu0
        %v1562 = vadd.f32 %v995, %v1561
        %v1563 = vpop.f32.mrf.mxu0
        %v1564 = vadd.f32 %v999, %v1563
        %v1565 = vpop.f32.mrf.mxu0
        %v1566 = vadd.f32 %v995, %v1565
        %v1567 = vpop.f32.mrf.mxu0
        %v1568 = vadd.f32 %v999, %v1567
        %1569 = vdwg.mxu0
        %1570 = vmatprep.subr.bf16.mxu0 %v1277
        %1571 = vmatpush1.bf16.msra.mxu0 %v1276
        %1572 = vmatprep.subr.bf16.mxu0 %v1269
        %1573 = vmatpush1.bf16.msra.mxu0 %v1268
        %1574 = vmatprep.subr.bf16.mxu0 %v1261
        %1575 = vmatpush1.bf16.msra.mxu0 %v1260
        %1576 = vmatprep.subr.bf16.mxu0 %v1253
        %1577 = vmatpush1.bf16.msra.mxu0 %v1252
        %1578 = vmatprep.subr.bf16.mxu0 %v1245
        %1579 = vmatpush1.bf16.msra.mxu0 %v1244
        %1580 = vmatprep.subr.bf16.mxu0 %v1237
        %1581 = vmatpush1.bf16.msra.mxu0 %v1236
        %1582 = vmatprep.subr.bf16.mxu0 %v1229
        %1583 = vmatpush1.bf16.msra.mxu0 %v1228
        %1584 = vmatprep.subr.bf16.mxu0 %v1221
        %1585 = vmatpush1.bf16.msra.mxu0 %v1220
        %1586 = vmatprep.subr.bf16.mxu0 0
        %1587 = vmatpush2.bf16.msra.mxu0 0
        %1588 = vmatprep.subr.bf16.mxu0 0
        %1589 = vmatpush2.bf16.msra.mxu0 0
        %1590 = vmatprep.subr.bf16.mxu0 0
        %1591 = vmatpush2.bf16.msra.mxu0 0
        %1592 = vmatprep.subr.bf16.mxu0 0
        %1593 = vmatpush2.bf16.msra.mxu0 0
        %1594 = vmatprep.subr.bf16.mxu0 0
        %1595 = vmatpush2.bf16.msra.mxu0 0
        %1596 = vmatprep.subr.bf16.mxu0 0
        %1597 = vmatpush2.bf16.msra.mxu0 0
        %1598 = vmatprep.subr.bf16.mxu0 0
        %1599 = vmatpush2.bf16.msra.mxu0 0
        %1600 = vmatprep.subr.bf16.mxu0 0
        %1601 = vmatpush2.bf16.msra.mxu0 0
        %1602 = vmatprep.mubr.bf16.mxu0 0
        %1603 = vmatmul.mubr.bf16.gmra.mxu0 %v910
        %v1604 = vpop.f32.mrf.mxu0
        %v1605 = vadd.f32 %v1003, %v1604
        %v1606 = vpop.f32.mrf.mxu0
        %v1607 = vadd.f32 %v1007, %v1606
        %v1608 = vpop.f32.mrf.mxu0
        %v1609 = vadd.f32 %v1003, %v1608
        %v1610 = vpop.f32.mrf.mxu0
        %v1611 = vadd.f32 %v1007, %v1610
        %1612 = vmatprep.mubr.bf16.mxu0 0
        %1613 = vmatmul.mubr.bf16.gmra.mxu0 %v911
        %v1614 = vpop.f32.mrf.mxu0
        %v1615 = vadd.f32 %v1003, %v1614
        %v1616 = vpop.f32.mrf.mxu0
        %v1617 = vadd.f32 %v1007, %v1616
        %v1618 = vpop.f32.mrf.mxu0
        %v1619 = vadd.f32 %v1003, %v1618
        %v1620 = vpop.f32.mrf.mxu0
        %v1621 = vadd.f32 %v1007, %v1620
        %1622 = vmatprep.mubr.bf16.mxu0 0
        %1623 = vmatmul.mubr.bf16.gmra.mxu0 %v912
        %v1624 = vpop.f32.mrf.mxu0
        %v1625 = vadd.f32 %v1003, %v1624
        %v1626 = vpop.f32.mrf.mxu0
        %v1627 = vadd.f32 %v1007, %v1626
        %v1628 = vpop.f32.mrf.mxu0
        %v1629 = vadd.f32 %v1003, %v1628
        %v1630 = vpop.f32.mrf.mxu0
        %v1631 = vadd.f32 %v1007, %v1630
        %1632 = vmatprep.mubr.bf16.mxu0 0
        %1633 = vmatmul.mubr.bf16.gmra.mxu0 %v913
        %v1634 = vpop.f32.mrf.mxu0
        %v1635 = vadd.f32 %v1003, %v1634
        %v1636 = vpop.f32.mrf.mxu0
        %v1637 = vadd.f32 %v1007, %v1636
        %v1638 = vpop.f32.mrf.mxu0
        %v1639 = vadd.f32 %v1003, %v1638
        %v1640 = vpop.f32.mrf.mxu0
        %v1641 = vadd.f32 %v1007, %v1640
        %1642 = vmatprep.mubr.bf16.mxu0 0
        %1643 = vmatmul.mubr.bf16.gmra.mxu0 %v914
        %v1644 = vpop.f32.mrf.mxu0
        %v1645 = vadd.f32 %v1003, %v1644
        %v1646 = vpop.f32.mrf.mxu0
        %v1647 = vadd.f32 %v1007, %v1646
        %v1648 = vpop.f32.mrf.mxu0
        %v1649 = vadd.f32 %v1003, %v1648
        %v1650 = vpop.f32.mrf.mxu0
        %v1651 = vadd.f32 %v1007, %v1650
        %1652 = vmatprep.mubr.bf16.mxu0 0
        %1653 = vmatmul.mubr.bf16.gmra.mxu0 %v915
        %v1654 = vpop.f32.mrf.mxu0
        %v1655 = vadd.f32 %v1003, %v1654
        %v1656 = vpop.f32.mrf.mxu0
        %v1657 = vadd.f32 %v1007, %v1656
        %v1658 = vpop.f32.mrf.mxu0
        %v1659 = vadd.f32 %v1003, %v1658
        %v1660 = vpop.f32.mrf.mxu0
        %v1661 = vadd.f32 %v1007, %v1660
        %1662 = vmatprep.mubr.bf16.mxu0 0
        %1663 = vmatmul.mubr.bf16.gmra.mxu0 %v916
        %v1664 = vpop.f32.mrf.mxu0
        %v1665 = vadd.f32 %v1003, %v1664
        %v1666 = vpop.f32.mrf.mxu0
        %v1667 = vadd.f32 %v1007, %v1666
        %v1668 = vpop.f32.mrf.mxu0
        %v1669 = vadd.f32 %v1003, %v1668
        %v1670 = vpop.f32.mrf.mxu0
        %v1671 = vadd.f32 %v1007, %v1670
        %1672 = vmatprep.mubr.bf16.mxu0 0
        %1673 = vmatmul.mubr.bf16.gmra.mxu0 %v917
        %v1674 = vpop.f32.mrf.mxu0
        %v1675 = vadd.f32 %v1003, %v1674
        %v1676 = vpop.f32.mrf.mxu0
        %v1677 = vadd.f32 %v1007, %v1676
        %v1678 = vpop.f32.mrf.mxu0
        %v1679 = vadd.f32 %v1003, %v1678
        %v1680 = vpop.f32.mrf.mxu0
        %v1681 = vadd.f32 %v1007, %v1680
        %1682 = vdwg.mxu0
        %1683 = vmatprep.subr.bf16.mxu0 %v1279
        %1684 = vmatpush1.bf16.msra.mxu0 %v1278
        %1685 = vmatprep.subr.bf16.mxu0 %v1271
        %1686 = vmatpush1.bf16.msra.mxu0 %v1270
        %1687 = vmatprep.subr.bf16.mxu0 %v1263
        %1688 = vmatpush1.bf16.msra.mxu0 %v1262
        %1689 = vmatprep.subr.bf16.mxu0 %v1255
        %1690 = vmatpush1.bf16.msra.mxu0 %v1254
        %1691 = vmatprep.subr.bf16.mxu0 %v1247
        %1692 = vmatpush1.bf16.msra.mxu0 %v1246
        %1693 = vmatprep.subr.bf16.mxu0 %v1239
        %1694 = vmatpush1.bf16.msra.mxu0 %v1238
        %1695 = vmatprep.subr.bf16.mxu0 %v1231
        %1696 = vmatpush1.bf16.msra.mxu0 %v1230
        %1697 = vmatprep.subr.bf16.mxu0 %v1223
        %1698 = vmatpush1.bf16.msra.mxu0 %v1222
        %1699 = vmatprep.subr.bf16.mxu0 0
        %1700 = vmatpush2.bf16.msra.mxu0 0
        %1701 = vmatprep.subr.bf16.mxu0 0
        %1702 = vmatpush2.bf16.msra.mxu0 0
        %1703 = vmatprep.subr.bf16.mxu0 0
        %1704 = vmatpush2.bf16.msra.mxu0 0
        %1705 = vmatprep.subr.bf16.mxu0 0
        %1706 = vmatpush2.bf16.msra.mxu0 0
        %1707 = vmatprep.subr.bf16.mxu0 0
        %1708 = vmatpush2.bf16.msra.mxu0 0
        %1709 = vmatprep.subr.bf16.mxu0 0
        %1710 = vmatpush2.bf16.msra.mxu0 0
        %1711 = vmatprep.subr.bf16.mxu0 0
        %1712 = vmatpush2.bf16.msra.mxu0 0
        %1713 = vmatprep.subr.bf16.mxu0 0
        %1714 = vmatpush2.bf16.msra.mxu0 0
        %1715 = vmatprep.mubr.bf16.mxu0 0
        %1716 = vmatmul.mubr.bf16.gmra.mxu0 %v910
        %v1717 = vpop.f32.mrf.mxu0
        %v1718 = vadd.f32 %v1011, %v1717
        %v1719 = vpop.f32.mrf.mxu0
        %v1720 = vadd.f32 %v1015, %v1719
        %v1721 = vpop.f32.mrf.mxu0
        %v1722 = vadd.f32 %v1011, %v1721
        %v1723 = vpop.f32.mrf.mxu0
        %v1724 = vadd.f32 %v1015, %v1723
        %1725 = vmatprep.mubr.bf16.mxu0 0
        %1726 = vmatmul.mubr.bf16.gmra.mxu0 %v911
        %v1727 = vpop.f32.mrf.mxu0
        %v1728 = vadd.f32 %v1011, %v1727
        %v1729 = vpop.f32.mrf.mxu0
        %v1730 = vadd.f32 %v1015, %v1729
        %v1731 = vpop.f32.mrf.mxu0
        %v1732 = vadd.f32 %v1011, %v1731
        %v1733 = vpop.f32.mrf.mxu0
        %v1734 = vadd.f32 %v1015, %v1733
        %1735 = vmatprep.mubr.bf16.mxu0 0
        %1736 = vmatmul.mubr.bf16.gmra.mxu0 %v912
        %v1737 = vpop.f32.mrf.mxu0
        %v1738 = vadd.f32 %v1011, %v1737
        %v1739 = vpop.f32.mrf.mxu0
        %v1740 = vadd.f32 %v1015, %v1739
        %v1741 = vpop.f32.mrf.mxu0
        %v1742 = vadd.f32 %v1011, %v1741
        %v1743 = vpop.f32.mrf.mxu0
        %v1744 = vadd.f32 %v1015, %v1743
        %1745 = vmatprep.mubr.bf16.mxu0 0
        %1746 = vmatmul.mubr.bf16.gmra.mxu0 %v913
        %v1747 = vpop.f32.mrf.mxu0
        %v1748 = vadd.f32 %v1011, %v1747
        %v1749 = vpop.f32.mrf.mxu0
        %v1750 = vadd.f32 %v1015, %v1749
        %v1751 = vpop.f32.mrf.mxu0
        %v1752 = vadd.f32 %v1011, %v1751
        %v1753 = vpop.f32.mrf.mxu0
        %v1754 = vadd.f32 %v1015, %v1753
        %1755 = vmatprep.mubr.bf16.mxu0 0
        %1756 = vmatmul.mubr.bf16.gmra.mxu0 %v914
        %v1757 = vpop.f32.mrf.mxu0
        %v1758 = vadd.f32 %v1011, %v1757
        %v1759 = vpop.f32.mrf.mxu0
        %v1760 = vadd.f32 %v1015, %v1759
        %v1761 = vpop.f32.mrf.mxu0
        %v1762 = vadd.f32 %v1011, %v1761
        %v1763 = vpop.f32.mrf.mxu0
        %v1764 = vadd.f32 %v1015, %v1763
        %1765 = vmatprep.mubr.bf16.mxu0 0
        %1766 = vmatmul.mubr.bf16.gmra.mxu0 %v915
        %v1767 = vpop.f32.mrf.mxu0
        %v1768 = vadd.f32 %v1011, %v1767
        %v1769 = vpop.f32.mrf.mxu0
        %v1770 = vadd.f32 %v1015, %v1769
        %v1771 = vpop.f32.mrf.mxu0
        %v1772 = vadd.f32 %v1011, %v1771
        %v1773 = vpop.f32.mrf.mxu0
        %v1774 = vadd.f32 %v1015, %v1773
        %1775 = vmatprep.mubr.bf16.mxu0 0
        %1776 = vmatmul.mubr.bf16.gmra.mxu0 %v916
        %v1777 = vpop.f32.mrf.mxu0
        %v1778 = vadd.f32 %v1011, %v1777
        %v1779 = vpop.f32.mrf.mxu0
        %v1780 = vadd.f32 %v1015, %v1779
        %v1781 = vpop.f32.mrf.mxu0
        %v1782 = vadd.f32 %v1011, %v1781
        %v1783 = vpop.f32.mrf.mxu0
        %v1784 = vadd.f32 %v1015, %v1783
        %1785 = vmatprep.mubr.bf16.mxu0 0
        %1786 = vmatmul.mubr.bf16.gmra.mxu0 %v917
        %v1787 = vpop.f32.mrf.mxu0
        %v1788 = vadd.f32 %v1011, %v1787
        %v1789 = vpop.f32.mrf.mxu0
        %v1790 = vadd.f32 %v1015, %v1789
        %v1791 = vpop.f32.mrf.mxu0
        %v1792 = vadd.f32 %v1011, %v1791
        %v1793 = vpop.f32.mrf.mxu0
        %v1794 = vadd.f32 %v1015, %v1793
        %1795 = vdwg.mxu0
        %v1796 = vmax.f32 %v1379, 0.0
        %v1797 = vmax.f32 %v1381, 0.0
        %v1798 = vmax.f32 %v1492, 0.0
        %v1799 = vmax.f32 %v1494, 0.0
        %v1800 = vmax.f32 %v1605, 0.0
        %v1801 = vmax.f32 %v1607, 0.0
        %v1802 = vmax.f32 %v1718, 0.0
        %v1803 = vmax.f32 %v1720, 0.0
        %v1804 = vmax.f32 %v1383, 0.0
        %v1805 = vmax.f32 %v1385, 0.0
        %v1806 = vmax.f32 %v1496, 0.0
        %v1807 = vmax.f32 %v1498, 0.0
        %v1808 = vmax.f32 %v1609, 0.0
        %v1809 = vmax.f32 %v1611, 0.0
        %v1810 = vmax.f32 %v1722, 0.0
        %v1811 = vmax.f32 %v1724, 0.0
        %v1812 = vmax.f32 %v1389, 0.0
        %v1813 = vmax.f32 %v1391, 0.0
        %v1814 = vmax.f32 %v1502, 0.0
        %v1815 = vmax.f32 %v1504, 0.0
        %v1816 = vmax.f32 %v1615, 0.0
        %v1817 = vmax.f32 %v1617, 0.0
        %v1818 = vmax.f32 %v1728, 0.0
        %v1819 = vmax.f32 %v1730, 0.0
        %v1820 = vmax.f32 %v1393, 0.0
        %v1821 = vmax.f32 %v1395, 0.0
        %v1822 = vmax.f32 %v1506, 0.0
        %v1823 = vmax.f32 %v1508, 0.0
        %v1824 = vmax.f32 %v1619, 0.0
        %v1825 = vmax.f32 %v1621, 0.0
        %v1826 = vmax.f32 %v1732, 0.0
        %v1827 = vmax.f32 %v1734, 0.0
        %v1828 = vmax.f32 %v1399, 0.0
        %v1829 = vmax.f32 %v1401, 0.0
        %v1830 = vmax.f32 %v1512, 0.0
        %v1831 = vmax.f32 %v1514, 0.0
        %v1832 = vmax.f32 %v1625, 0.0
        %v1833 = vmax.f32 %v1627, 0.0
        %v1834 = vmax.f32 %v1738, 0.0
        %v1835 = vmax.f32 %v1740, 0.0
        %v1836 = vmax.f32 %v1403, 0.0
        %v1837 = vmax.f32 %v1405, 0.0
        %v1838 = vmax.f32 %v1516, 0.0
        %v1839 = vmax.f32 %v1518, 0.0
        %v1840 = vmax.f32 %v1629, 0.0
        %v1841 = vmax.f32 %v1631, 0.0
        %v1842 = vmax.f32 %v1742, 0.0
        %v1843 = vmax.f32 %v1744, 0.0
        %v1844 = vmax.f32 %v1409, 0.0
        %v1845 = vmax.f32 %v1411, 0.0
        %v1846 = vmax.f32 %v1522, 0.0
        %v1847 = vmax.f32 %v1524, 0.0
        %v1848 = vmax.f32 %v1635, 0.0
        %v1849 = vmax.f32 %v1637, 0.0
        %v1850 = vmax.f32 %v1748, 0.0
        %v1851 = vmax.f32 %v1750, 0.0
        %v1852 = vmax.f32 %v1413, 0.0
        %v1853 = vmax.f32 %v1415, 0.0
        %v1854 = vmax.f32 %v1526, 0.0
        %v1855 = vmax.f32 %v1528, 0.0
        %v1856 = vmax.f32 %v1639, 0.0
        %v1857 = vmax.f32 %v1641, 0.0
        %v1858 = vmax.f32 %v1752, 0.0
        %v1859 = vmax.f32 %v1754, 0.0
        %v1860 = vmax.f32 %v1419, 0.0
        %v1861 = vmax.f32 %v1421, 0.0
        %v1862 = vmax.f32 %v1532, 0.0
        %v1863 = vmax.f32 %v1534, 0.0
        %v1864 = vmax.f32 %v1645, 0.0
        %v1865 = vmax.f32 %v1647, 0.0
        %v1866 = vmax.f32 %v1758, 0.0
        %v1867 = vmax.f32 %v1760, 0.0
        %v1868 = vmax.f32 %v1423, 0.0
        %v1869 = vmax.f32 %v1425, 0.0
        %v1870 = vmax.f32 %v1536, 0.0
        %v1871 = vmax.f32 %v1538, 0.0
        %v1872 = vmax.f32 %v1649, 0.0
        %v1873 = vmax.f32 %v1651, 0.0
        %v1874 = vmax.f32 %v1762, 0.0
        %v1875 = vmax.f32 %v1764, 0.0
        %v1876 = vmax.f32 %v1429, 0.0
        %v1877 = vmax.f32 %v1431, 0.0
        %v1878 = vmax.f32 %v1542, 0.0
        %v1879 = vmax.f32 %v1544, 0.0
        %v1880 = vmax.f32 %v1655, 0.0
        %v1881 = vmax.f32 %v1657, 0.0
        %v1882 = vmax.f32 %v1768, 0.0
        %v1883 = vmax.f32 %v1770, 0.0
        %v1884 = vmax.f32 %v1433, 0.0
        %v1885 = vmax.f32 %v1435, 0.0
        %v1886 = vmax.f32 %v1546, 0.0
        %v1887 = vmax.f32 %v1548, 0.0
        %v1888 = vmax.f32 %v1659, 0.0
        %v1889 = vmax.f32 %v1661, 0.0
        %v1890 = vmax.f32 %v1772, 0.0
        %v1891 = vmax.f32 %v1774, 0.0
        %v1892 = vmax.f32 %v1439, 0.0
        %v1893 = vmax.f32 %v1441, 0.0
        %v1894 = vmax.f32 %v1552, 0.0
        %v1895 = vmax.f32 %v1554, 0.0
        %v1896 = vmax.f32 %v1665, 0.0
        %v1897 = vmax.f32 %v1667, 0.0
        %v1898 = vmax.f32 %v1778, 0.0
        %v1899 = vmax.f32 %v1780, 0.0
        %v1900 = vmax.f32 %v1443, 0.0
        %v1901 = vmax.f32 %v1445, 0.0
        %v1902 = vmax.f32 %v1556, 0.0
        %v1903 = vmax.f32 %v1558, 0.0
        %v1904 = vmax.f32 %v1669, 0.0
        %v1905 = vmax.f32 %v1671, 0.0
        %v1906 = vmax.f32 %v1782, 0.0
        %v1907 = vmax.f32 %v1784, 0.0
        %v1908 = vmax.f32 %v1449, 0.0
        %v1909 = vmax.f32 %v1451, 0.0
        %v1910 = vmax.f32 %v1562, 0.0
        %v1911 = vmax.f32 %v1564, 0.0
        %v1912 = vmax.f32 %v1675, 0.0
        %v1913 = vmax.f32 %v1677, 0.0
        %v1914 = vmax.f32 %v1788, 0.0
        %v1915 = vmax.f32 %v1790, 0.0
        %v1916 = vmax.f32 %v1453, 0.0
        %v1917 = vmax.f32 %v1455, 0.0
        %v1918 = vmax.f32 %v1566, 0.0
        %v1919 = vmax.f32 %v1568, 0.0
        %v1920 = vmax.f32 %v1679, 0.0
        %v1921 = vmax.f32 %v1681, 0.0
        %v1922 = vmax.f32 %v1792, 0.0
        %v1923 = vmax.f32 %v1794, 0.0
        %v1924 = vld [vmem:[#allocation2] sm:$0xff]
        %v1925 = vmax.f32 %v1796, %v1804
        %v1926 = vmax.f32 %v1925, %v1812
        %v1927 = vmax.f32 %v1926, %v1820
        %v1928 = vmax.f32 %v1927, %v1828
        %v1929 = vmax.f32 %v1928, %v1836
        %v1930 = vmax.f32 %v1929, %v1844
        %v1931 = vmax.f32 %v1930, %v1852
        %v1932 = vmax.f32 %v1931, %v1860
        %v1933 = vmax.f32 %v1932, %v1868
        %v1934 = vmax.f32 %v1933, %v1876
        %v1935 = vmax.f32 %v1934, %v1884
        %v1936 = vmax.f32 %v1935, %v1892
        %v1937 = vmax.f32 %v1936, %v1900
        %v1938 = vmax.f32 %v1937, %v1908
        %v1939 = vmax.f32 %v1938, %v1916
        %v1940 = vrot.slane %v1939, 4
        %v1941 = vmax.f32 %v1939, %v1940
        %v1942 = vrot.slane %v1941, 2
        %v1943 = vmax.f32 %v1941, %v1942
        %v1944 = vrot.slane %v1943, 1
        %v1945 = vmax.f32 %v1943, %v1944
        %v1946 = vmax.f32 %v1797, %v1805
        %v1947 = vmax.f32 %v1946, %v1813
        %v1948 = vmax.f32 %v1947, %v1821
        %v1949 = vmax.f32 %v1948, %v1829
        %v1950 = vmax.f32 %v1949, %v1837
        %v1951 = vmax.f32 %v1950, %v1845
        %v1952 = vmax.f32 %v1951, %v1853
        %v1953 = vmax.f32 %v1952, %v1861
        %v1954 = vmax.f32 %v1953, %v1869
        %v1955 = vmax.f32 %v1954, %v1877
        %v1956 = vmax.f32 %v1955, %v1885
        %v1957 = vmax.f32 %v1956, %v1893
        %v1958 = vmax.f32 %v1957, %v1901
        %v1959 = vmax.f32 %v1958, %v1909
        %v1960 = vmax.f32 %v1959, %v1917
        %v1961 = vrot.slane %v1960, 4
        %v1962 = vmax.f32 %v1960, %v1961
        %v1963 = vrot.slane %v1962, 2
        %v1964 = vmax.f32 %v1962, %v1963
        %v1965 = vrot.slane %v1964, 1
        %v1966 = vmax.f32 %v1964, %v1965
        %v1967 = vmax.f32 %v1798, %v1806
        %v1968 = vmax.f32 %v1967, %v1814
        %v1969 = vmax.f32 %v1968, %v1822
        %v1970 = vmax.f32 %v1969, %v1830
        %v1971 = vmax.f32 %v1970, %v1838
        %v1972 = vmax.f32 %v1971, %v1846
        %v1973 = vmax.f32 %v1972, %v1854
        %v1974 = vmax.f32 %v1973, %v1862
        %v1975 = vmax.f32 %v1974, %v1870
        %v1976 = vmax.f32 %v1975, %v1878
        %v1977 = vmax.f32 %v1976, %v1886
        %v1978 = vmax.f32 %v1977, %v1894
        %v1979 = vmax.f32 %v1978, %v1902
        %v1980 = vmax.f32 %v1979, %v1910
        %v1981 = vmax.f32 %v1980, %v1918
        %v1982 = vrot.slane %v1981, 4
        %v1983 = vmax.f32 %v1981, %v1982
        %v1984 = vrot.slane %v1983, 2
        %v1985 = vmax.f32 %v1983, %v1984
        %v1986 = vrot.slane %v1985, 1
        %v1987 = vmax.f32 %v1985, %v1986
        %v1988 = vmax.f32 %v1799, %v1807
        %v1989 = vmax.f32 %v1988, %v1815
        %v1990 = vmax.f32 %v1989, %v1823
        %v1991 = vmax.f32 %v1990, %v1831
        %v1992 = vmax.f32 %v1991, %v1839
        %v1993 = vmax.f32 %v1992, %v1847
        %v1994 = vmax.f32 %v1993, %v1855
        %v1995 = vmax.f32 %v1994, %v1863
        %v1996 = vmax.f32 %v1995, %v1871
        %v1997 = vmax.f32 %v1996, %v1879
        %v1998 = vmax.f32 %v1997, %v1887
        %v1999 = vmax.f32 %v1998, %v1895
        %v2000 = vmax.f32 %v1999, %v1903
        %v2001 = vmax.f32 %v2000, %v1911
        %v2002 = vmax.f32 %v2001, %v1919
        %v2003 = vrot.slane %v2002, 4
        %v2004 = vmax.f32 %v2002, %v2003
        %v2005 = vrot.slane %v2004, 2
        %v2006 = vmax.f32 %v2004, %v2005
        %v2007 = vrot.slane %v2006, 1
        %v2008 = vmax.f32 %v2006, %v2007
        %v2009 = vmax.f32 %v1800, %v1808
        %v2010 = vmax.f32 %v2009, %v1816
        %v2011 = vmax.f32 %v2010, %v1824
        %v2012 = vmax.f32 %v2011, %v1832
        %v2013 = vmax.f32 %v2012, %v1840
        %v2014 = vmax.f32 %v2013, %v1848
        %v2015 = vmax.f32 %v2014, %v1856
        %v2016 = vmax.f32 %v2015, %v1864
        %v2017 = vmax.f32 %v2016, %v1872
        %v2018 = vmax.f32 %v2017, %v1880
        %v2019 = vmax.f32 %v2018, %v1888
        %v2020 = vmax.f32 %v2019, %v1896
        %v2021 = vmax.f32 %v2020, %v1904
        %v2022 = vmax.f32 %v2021, %v1912
        %v2023 = vmax.f32 %v2022, %v1920
        %v2024 = vrot.slane %v2023, 4
        %v2025 = vmax.f32 %v2023, %v2024
        %v2026 = vrot.slane %v2025, 2
        %v2027 = vmax.f32 %v2025, %v2026
        %v2028 = vrot.slane %v2027, 1
        %v2029 = vmax.f32 %v2027, %v2028
        %v2030 = vmax.f32 %v1801, %v1809
        %v2031 = vmax.f32 %v2030, %v1817
        %v2032 = vmax.f32 %v2031, %v1825
        %v2033 = vmax.f32 %v2032, %v1833
        %v2034 = vmax.f32 %v2033, %v1841
        %v2035 = vmax.f32 %v2034, %v1849
        %v2036 = vmax.f32 %v2035, %v1857
        %v2037 = vmax.f32 %v2036, %v1865
        %v2038 = vmax.f32 %v2037, %v1873
        %v2039 = vmax.f32 %v2038, %v1881
        %v2040 = vmax.f32 %v2039, %v1889
        %v2041 = vmax.f32 %v2040, %v1897
        %v2042 = vmax.f32 %v2041, %v1905
        %v2043 = vmax.f32 %v2042, %v1913
        %v2044 = vmax.f32 %v2043, %v1921
        %v2045 = vrot.slane %v2044, 4
        %v2046 = vmax.f32 %v2044, %v2045
        %v2047 = vrot.slane %v2046, 2
        %v2048 = vmax.f32 %v2046, %v2047
        %v2049 = vrot.slane %v2048, 1
        %v2050 = vmax.f32 %v2048, %v2049
        %v2051 = vmax.f32 %v1802, %v1810
        %v2052 = vmax.f32 %v2051, %v1818
        %v2053 = vmax.f32 %v2052, %v1826
        %v2054 = vmax.f32 %v2053, %v1834
        %v2055 = vmax.f32 %v2054, %v1842
        %v2056 = vmax.f32 %v2055, %v1850
        %v2057 = vmax.f32 %v2056, %v1858
        %v2058 = vmax.f32 %v2057, %v1866
        %v2059 = vmax.f32 %v2058, %v1874
        %v2060 = vmax.f32 %v2059, %v1882
        %v2061 = vmax.f32 %v2060, %v1890
        %v2062 = vmax.f32 %v2061, %v1898
        %v2063 = vmax.f32 %v2062, %v1906
        %v2064 = vmax.f32 %v2063, %v1914
        %v2065 = vmax.f32 %v2064, %v1922
        %v2066 = vrot.slane %v2065, 4
        %v2067 = vmax.f32 %v2065, %v2066
        %v2068 = vrot.slane %v2067, 2
        %v2069 = vmax.f32 %v2067, %v2068
        %v2070 = vrot.slane %v2069, 1
        %v2071 = vmax.f32 %v2069, %v2070
        %v2072 = vmax.f32 %v1803, %v1811
        %v2073 = vmax.f32 %v2072, %v1819
        %v2074 = vmax.f32 %v2073, %v1827
        %v2075 = vmax.f32 %v2074, %v1835
        %v2076 = vmax.f32 %v2075, %v1843
        %v2077 = vmax.f32 %v2076, %v1851
        %v2078 = vmax.f32 %v2077, %v1859
        %v2079 = vmax.f32 %v2078, %v1867
        %v2080 = vmax.f32 %v2079, %v1875
        %v2081 = vmax.f32 %v2080, %v1883
        %v2082 = vmax.f32 %v2081, %v1891
        %v2083 = vmax.f32 %v2082, %v1899
        %v2084 = vmax.f32 %v2083, %v1907
        %v2085 = vmax.f32 %v2084, %v1915
        %v2086 = vmax.f32 %v2085, %v1923
        %v2087 = vrot.slane %v2086, 4
        %v2088 = vmax.f32 %v2086, %v2087
        %v2089 = vrot.slane %v2088, 2
        %v2090 = vmax.f32 %v2088, %v2089
        %v2091 = vrot.slane %v2090, 1
        %v2092 = vmax.f32 %v2090, %v2091
        %v2101 = vcombine.low %v1945, %v1966
        %v2102 = vcombine.low %v1987, %v2008
        %v2103 = vcombine.low %v2029, %v2050
        %v2104 = vcombine.low %v2071, %v2092
        %v2106 = vunpack.c.l.s4 1966171168
        %v2107 = vunpack.c.0.s8 %v2106
        %v2108 = vlaneseq
        %v2109 = vshrl.u32 %v2108, 7
        %v2110 = vsub.s32 %v2107, %v2109
        %v2111 = vrot.slane %v2101, %v2110
        %v2113 = vunpack.c.l.s4 1966171168
        %v2114 = vunpack.c.0.s8 %v2113
        %v2115 = vlaneseq
        %v2116 = vshrl.u32 %v2115, 7
        %v2117 = vsub.s32 %v2114, %v2116
        %v2118 = vrot.slane %v2102, %v2117
        %v2120 = vunpack.c.l.s4 1966171168
        %v2121 = vunpack.c.0.s8 %v2120
        %v2122 = vlaneseq
        %v2123 = vshrl.u32 %v2122, 7
        %v2124 = vsub.s32 %v2121, %v2123
        %v2125 = vrot.slane %v2103, %v2124
        %v2127 = vunpack.c.l.s4 1966171168
        %v2128 = vunpack.c.0.s8 %v2127
        %v2129 = vlaneseq
        %v2130 = vshrl.u32 %v2129, 7
        %v2131 = vsub.s32 %v2128, %v2130
        %v2132 = vrot.slane %v2104, %v2131
        %v2133 = vcombine.low %v2111, %v2118
        %v2134 = vcombine.low %v2125, %v2132
        %v2136 = vunpack.c.l.s4 1966171168
        %v2137 = vunpack.c.0.s8 %v2136
        %v2138 = vlaneseq
        %v2139 = vshrl.u32 %v2138, 7
        %v2140 = vsub.s32 %v2137, %v2139
        %v2141 = vrot.slane %v2133, %v2140
        %v2143 = vunpack.c.l.s4 1966171168
        %v2144 = vunpack.c.0.s8 %v2143
        %v2145 = vlaneseq
        %v2146 = vshrl.u32 %v2145, 7
        %v2147 = vsub.s32 %v2144, %v2146
        %v2148 = vrot.slane %v2134, %v2147
        %v2149 = vcombine.low %v2141, %v2148
        %v2151 = vmax.f32 %v1924, %v2149
        %2152 = vst [vmem:[#allocation2] sm:$0xff] %v2151
        // Predicated region
        $region89: #{tpu_custom_call.1} parent=71 // pred_check
          %p2153 = pneg %p511
        $region90: #{tpu_custom_call.1} parent=71 // pred_check_branch
          %2155 = sbr.rel (%p2153) target = $region92
        $region91: #{tpu_custom_call.1} parent=71 // pred_region
          %v2156 = vld [vmem:[#allocation2] sm:$0xff]
          %v2158 = vlaneseq
          %v2159 = vshrl.u32 %v2158, 7
          %v2160 = vsub.s32 0, %v2159
          %v2161 = vrot.slane %v2156, %v2160
          %v2162 = vlaneseq
          %v2163 = vshrl.u32 %v2162, 7
          %v2164 = vsub.s32 1, %v2163
          %v2165 = vrot.slane %v2156, %v2164
          %v2166 = vlaneseq
          %v2167 = vshrl.u32 %v2166, 7
          %v2168 = vsub.s32 2, %v2167
          %v2169 = vrot.slane %v2156, %v2168
          %v2170 = vlaneseq
          %v2171 = vshrl.u32 %v2170, 7
          %v2172 = vsub.s32 3, %v2171
          %v2173 = vrot.slane %v2156, %v2172
          %v2174 = vlaneseq
          %v2175 = vshrl.u32 %v2174, 7
          %v2176 = vsub.s32 4, %v2175
          %v2177 = vrot.slane %v2156, %v2176
          %v2178 = vlaneseq
          %v2179 = vshrl.u32 %v2178, 7
          %v2180 = vsub.s32 5, %v2179
          %v2181 = vrot.slane %v2156, %v2180
          %v2182 = vlaneseq
          %v2183 = vshrl.u32 %v2182, 7
          %v2184 = vsub.s32 6, %v2183
          %v2185 = vrot.slane %v2156, %v2184
          %v2186 = vlaneseq
          %v2187 = vshrl.u32 %v2186, 7
          %v2188 = vsub.s32 7, %v2187
          %v2189 = vrot.slane %v2156, %v2188
          %v2198 = vpack.c.bf16 %v2161, %v2161
          %v2199 = vpack.c.bf16 %v2165, %v2165
          %v2200 = vpack.c.bf16 %v2169, %v2169
          %v2201 = vpack.c.bf16 %v2173, %v2173
          %v2202 = vpack.c.bf16 %v2177, %v2177
          %v2203 = vpack.c.bf16 %v2181, %v2181
          %v2204 = vpack.c.bf16 %v2185, %v2185
          %v2205 = vpack.c.bf16 %v2189, %v2189
          %v2206 = vld [vmem:[#allocation6] sm:$0xff]
          %v2207 = vld [vmem:[#allocation6 + $0x8] sm:$0xff]
          %v2208 = vld [vmem:[#allocation6 + $0x10] sm:$0xff]
          %v2209 = vld [vmem:[#allocation6 + $0x18] sm:$0xff]
          %v2210 = vld [vmem:[#allocation6 + $0x20] sm:$0xff]
          %v2211 = vld [vmem:[#allocation6 + $0x28] sm:$0xff]
          %v2212 = vld [vmem:[#allocation6 + $0x30] sm:$0xff]
          %v2213 = vld [vmem:[#allocation6 + $0x38] sm:$0xff]
          %v2214 = vld [vmem:[#allocation6 + $0x40] sm:$0xff]
          %v2215 = vld [vmem:[#allocation6 + $0x48] sm:$0xff]
          %v2216 = vld [vmem:[#allocation6 + $0x50] sm:$0xff]
          %v2217 = vld [vmem:[#allocation6 + $0x58] sm:$0xff]
          %v2218 = vld [vmem:[#allocation6 + $0x60] sm:$0xff]
          %v2219 = vld [vmem:[#allocation6 + $0x68] sm:$0xff]
          %v2220 = vld [vmem:[#allocation6 + $0x70] sm:$0xff]
          %v2221 = vld [vmem:[#allocation6 + $0x78] sm:$0xff]
          %v2222 = vld [vmem:[#allocation6 + $0x80] sm:$0xff]
          %v2223 = vld [vmem:[#allocation6 + $0x88] sm:$0xff]
          %v2224 = vld [vmem:[#allocation6 + $0x90] sm:$0xff]
          %v2225 = vld [vmem:[#allocation6 + $0x98] sm:$0xff]
          %v2226 = vld [vmem:[#allocation6 + $0xa0] sm:$0xff]
          %v2227 = vld [vmem:[#allocation6 + $0xa8] sm:$0xff]
          %v2228 = vld [vmem:[#allocation6 + $0xb0] sm:$0xff]
          %v2229 = vld [vmem:[#allocation6 + $0xb8] sm:$0xff]
          %v2230 = vld [vmem:[#allocation6 + $0xc0] sm:$0xff]
          %v2231 = vld [vmem:[#allocation6 + $0xc8] sm:$0xff]
          %v2232 = vld [vmem:[#allocation6 + $0xd0] sm:$0xff]
          %v2233 = vld [vmem:[#allocation6 + $0xd8] sm:$0xff]
          %v2234 = vld [vmem:[#allocation6 + $0xe0] sm:$0xff]
          %v2235 = vld [vmem:[#allocation6 + $0xe8] sm:$0xff]
          %v2236 = vld [vmem:[#allocation6 + $0xf0] sm:$0xff]
          %v2237 = vld [vmem:[#allocation6 + $0xf8] sm:$0xff]
          %v2238 = vld [vmem:[#allocation6 + $0x100] sm:$0xff]
          %v2239 = vld [vmem:[#allocation6 + $0x108] sm:$0xff]
          %v2240 = vld [vmem:[#allocation6 + $0x110] sm:$0xff]
          %v2241 = vld [vmem:[#allocation6 + $0x118] sm:$0xff]
          %v2242 = vld [vmem:[#allocation6 + $0x120] sm:$0xff]
          %v2243 = vld [vmem:[#allocation6 + $0x128] sm:$0xff]
          %v2244 = vld [vmem:[#allocation6 + $0x130] sm:$0xff]
          %v2245 = vld [vmem:[#allocation6 + $0x138] sm:$0xff]
          %v2246 = vld [vmem:[#allocation6 + $0x140] sm:$0xff]
          %v2247 = vld [vmem:[#allocation6 + $0x148] sm:$0xff]
          %v2248 = vld [vmem:[#allocation6 + $0x150] sm:$0xff]
          %v2249 = vld [vmem:[#allocation6 + $0x158] sm:$0xff]
          %v2250 = vld [vmem:[#allocation6 + $0x160] sm:$0xff]
          %v2251 = vld [vmem:[#allocation6 + $0x168] sm:$0xff]
          %v2252 = vld [vmem:[#allocation6 + $0x170] sm:$0xff]
          %v2253 = vld [vmem:[#allocation6 + $0x178] sm:$0xff]
          %v2254 = vld [vmem:[#allocation6 + $0x180] sm:$0xff]
          %v2255 = vld [vmem:[#allocation6 + $0x188] sm:$0xff]
          %v2256 = vld [vmem:[#allocation6 + $0x190] sm:$0xff]
          %v2257 = vld [vmem:[#allocation6 + $0x198] sm:$0xff]
          %v2258 = vld [vmem:[#allocation6 + $0x1a0] sm:$0xff]
          %v2259 = vld [vmem:[#allocation6 + $0x1a8] sm:$0xff]
          %v2260 = vld [vmem:[#allocation6 + $0x1b0] sm:$0xff]
          %v2261 = vld [vmem:[#allocation6 + $0x1b8] sm:$0xff]
          %v2262 = vld [vmem:[#allocation6 + $0x1c0] sm:$0xff]
          %v2263 = vld [vmem:[#allocation6 + $0x1c8] sm:$0xff]
          %v2264 = vld [vmem:[#allocation6 + $0x1d0] sm:$0xff]
          %v2265 = vld [vmem:[#allocation6 + $0x1d8] sm:$0xff]
          %v2266 = vld [vmem:[#allocation6 + $0x1e0] sm:$0xff]
          %v2267 = vld [vmem:[#allocation6 + $0x1e8] sm:$0xff]
          %v2268 = vld [vmem:[#allocation6 + $0x1f0] sm:$0xff]
          %v2269 = vld [vmem:[#allocation6 + $0x1f8] sm:$0xff]
          %v2270 = vld [vmem:[#allocation6 + $0x200] sm:$0xff]
          %v2271 = vld [vmem:[#allocation6 + $0x208] sm:$0xff]
          %v2272 = vld [vmem:[#allocation6 + $0x210] sm:$0xff]
          %v2273 = vld [vmem:[#allocation6 + $0x218] sm:$0xff]
          %v2274 = vld [vmem:[#allocation6 + $0x220] sm:$0xff]
          %v2275 = vld [vmem:[#allocation6 + $0x228] sm:$0xff]
          %v2276 = vld [vmem:[#allocation6 + $0x230] sm:$0xff]
          %v2277 = vld [vmem:[#allocation6 + $0x238] sm:$0xff]
          %v2278 = vld [vmem:[#allocation6 + $0x240] sm:$0xff]
          %v2279 = vld [vmem:[#allocation6 + $0x248] sm:$0xff]
          %v2280 = vld [vmem:[#allocation6 + $0x250] sm:$0xff]
          %v2281 = vld [vmem:[#allocation6 + $0x258] sm:$0xff]
          %v2282 = vld [vmem:[#allocation6 + $0x260] sm:$0xff]
          %v2283 = vld [vmem:[#allocation6 + $0x268] sm:$0xff]
          %v2284 = vld [vmem:[#allocation6 + $0x270] sm:$0xff]
          %v2285 = vld [vmem:[#allocation6 + $0x278] sm:$0xff]
          %v2286 = vld [vmem:[#allocation6 + $0x280] sm:$0xff]
          %v2287 = vld [vmem:[#allocation6 + $0x288] sm:$0xff]
          %v2288 = vld [vmem:[#allocation6 + $0x290] sm:$0xff]
          %v2289 = vld [vmem:[#allocation6 + $0x298] sm:$0xff]
          %v2290 = vld [vmem:[#allocation6 + $0x2a0] sm:$0xff]
          %v2291 = vld [vmem:[#allocation6 + $0x2a8] sm:$0xff]
          %v2292 = vld [vmem:[#allocation6 + $0x2b0] sm:$0xff]
          %v2293 = vld [vmem:[#allocation6 + $0x2b8] sm:$0xff]
          %v2294 = vld [vmem:[#allocation6 + $0x2c0] sm:$0xff]
          %v2295 = vld [vmem:[#allocation6 + $0x2c8] sm:$0xff]
          %v2296 = vld [vmem:[#allocation6 + $0x2d0] sm:$0xff]
          %v2297 = vld [vmem:[#allocation6 + $0x2d8] sm:$0xff]
          %v2298 = vld [vmem:[#allocation6 + $0x2e0] sm:$0xff]
          %v2299 = vld [vmem:[#allocation6 + $0x2e8] sm:$0xff]
          %v2300 = vld [vmem:[#allocation6 + $0x2f0] sm:$0xff]
          %v2301 = vld [vmem:[#allocation6 + $0x2f8] sm:$0xff]
          %v2302 = vld [vmem:[#allocation6 + $0x300] sm:$0xff]
          %v2303 = vld [vmem:[#allocation6 + $0x308] sm:$0xff]
          %v2304 = vld [vmem:[#allocation6 + $0x310] sm:$0xff]
          %v2305 = vld [vmem:[#allocation6 + $0x318] sm:$0xff]
          %v2306 = vld [vmem:[#allocation6 + $0x320] sm:$0xff]
          %v2307 = vld [vmem:[#allocation6 + $0x328] sm:$0xff]
          %v2308 = vld [vmem:[#allocation6 + $0x330] sm:$0xff]
          %v2309 = vld [vmem:[#allocation6 + $0x338] sm:$0xff]
          %v2310 = vld [vmem:[#allocation6 + $0x340] sm:$0xff]
          %v2311 = vld [vmem:[#allocation6 + $0x348] sm:$0xff]
          %v2312 = vld [vmem:[#allocation6 + $0x350] sm:$0xff]
          %v2313 = vld [vmem:[#allocation6 + $0x358] sm:$0xff]
          %v2314 = vld [vmem:[#allocation6 + $0x360] sm:$0xff]
          %v2315 = vld [vmem:[#allocation6 + $0x368] sm:$0xff]
          %v2316 = vld [vmem:[#allocation6 + $0x370] sm:$0xff]
          %v2317 = vld [vmem:[#allocation6 + $0x378] sm:$0xff]
          %v2318 = vld [vmem:[#allocation6 + $0x380] sm:$0xff]
          %v2319 = vld [vmem:[#allocation6 + $0x388] sm:$0xff]
          %v2320 = vld [vmem:[#allocation6 + $0x390] sm:$0xff]
          %v2321 = vld [vmem:[#allocation6 + $0x398] sm:$0xff]
          %v2322 = vld [vmem:[#allocation6 + $0x3a0] sm:$0xff]
          %v2323 = vld [vmem:[#allocation6 + $0x3a8] sm:$0xff]
          %v2324 = vld [vmem:[#allocation6 + $0x3b0] sm:$0xff]
          %v2325 = vld [vmem:[#allocation6 + $0x3b8] sm:$0xff]
          %v2326 = vld [vmem:[#allocation6 + $0x3c0] sm:$0xff]
          %v2327 = vld [vmem:[#allocation6 + $0x3c8] sm:$0xff]
          %v2328 = vld [vmem:[#allocation6 + $0x3d0] sm:$0xff]
          %v2329 = vld [vmem:[#allocation6 + $0x3d8] sm:$0xff]
          %v2330 = vld [vmem:[#allocation6 + $0x3e0] sm:$0xff]
          %v2331 = vld [vmem:[#allocation6 + $0x3e8] sm:$0xff]
          %v2332 = vld [vmem:[#allocation6 + $0x3f0] sm:$0xff]
          %v2333 = vld [vmem:[#allocation6 + $0x3f8] sm:$0xff]
          %v2334 = vld [vmem:[#allocation6 + $0x400] sm:$0xff]
          %v2335 = vld [vmem:[#allocation6 + $0x408] sm:$0xff]
          %v2336 = vld [vmem:[#allocation6 + $0x410] sm:$0xff]
          %v2337 = vld [vmem:[#allocation6 + $0x418] sm:$0xff]
          %v2338 = vld [vmem:[#allocation6 + $0x420] sm:$0xff]
          %v2339 = vld [vmem:[#allocation6 + $0x428] sm:$0xff]
          %v2340 = vld [vmem:[#allocation6 + $0x430] sm:$0xff]
          %v2341 = vld [vmem:[#allocation6 + $0x438] sm:$0xff]
          %v2342 = vld [vmem:[#allocation6 + $0x440] sm:$0xff]
          %v2343 = vld [vmem:[#allocation6 + $0x448] sm:$0xff]
          %v2344 = vld [vmem:[#allocation6 + $0x450] sm:$0xff]
          %v2345 = vld [vmem:[#allocation6 + $0x458] sm:$0xff]
          %v2346 = vld [vmem:[#allocation6 + $0x460] sm:$0xff]
          %v2347 = vld [vmem:[#allocation6 + $0x468] sm:$0xff]
          %v2348 = vld [vmem:[#allocation6 + $0x470] sm:$0xff]
          %v2349 = vld [vmem:[#allocation6 + $0x478] sm:$0xff]
          %v2350 = vld [vmem:[#allocation6 + $0x480] sm:$0xff]
          %v2351 = vld [vmem:[#allocation6 + $0x488] sm:$0xff]
          %v2352 = vld [vmem:[#allocation6 + $0x490] sm:$0xff]
          %v2353 = vld [vmem:[#allocation6 + $0x498] sm:$0xff]
          %v2354 = vld [vmem:[#allocation6 + $0x4a0] sm:$0xff]
          %v2355 = vld [vmem:[#allocation6 + $0x4a8] sm:$0xff]
          %v2356 = vld [vmem:[#allocation6 + $0x4b0] sm:$0xff]
          %v2357 = vld [vmem:[#allocation6 + $0x4b8] sm:$0xff]
          %v2358 = vld [vmem:[#allocation6 + $0x4c0] sm:$0xff]
          %v2359 = vld [vmem:[#allocation6 + $0x4c8] sm:$0xff]
          %v2360 = vld [vmem:[#allocation6 + $0x4d0] sm:$0xff]
          %v2361 = vld [vmem:[#allocation6 + $0x4d8] sm:$0xff]
          %v2362 = vld [vmem:[#allocation6 + $0x4e0] sm:$0xff]
          %v2363 = vld [vmem:[#allocation6 + $0x4e8] sm:$0xff]
          %v2364 = vld [vmem:[#allocation6 + $0x4f0] sm:$0xff]
          %v2365 = vld [vmem:[#allocation6 + $0x4f8] sm:$0xff]
          %v2366 = vld [vmem:[#allocation6 + $0x500] sm:$0xff]
          %v2367 = vld [vmem:[#allocation6 + $0x508] sm:$0xff]
          %v2368 = vld [vmem:[#allocation6 + $0x510] sm:$0xff]
          %v2369 = vld [vmem:[#allocation6 + $0x518] sm:$0xff]
          %v2370 = vld [vmem:[#allocation6 + $0x520] sm:$0xff]
          %v2371 = vld [vmem:[#allocation6 + $0x528] sm:$0xff]
          %v2372 = vld [vmem:[#allocation6 + $0x530] sm:$0xff]
          %v2373 = vld [vmem:[#allocation6 + $0x538] sm:$0xff]
          %v2374 = vld [vmem:[#allocation6 + $0x540] sm:$0xff]
          %v2375 = vld [vmem:[#allocation6 + $0x548] sm:$0xff]
          %v2376 = vld [vmem:[#allocation6 + $0x550] sm:$0xff]
          %v2377 = vld [vmem:[#allocation6 + $0x558] sm:$0xff]
          %v2378 = vld [vmem:[#allocation6 + $0x560] sm:$0xff]
          %v2379 = vld [vmem:[#allocation6 + $0x568] sm:$0xff]
          %v2380 = vld [vmem:[#allocation6 + $0x570] sm:$0xff]
          %v2381 = vld [vmem:[#allocation6 + $0x578] sm:$0xff]
          %v2382 = vld [vmem:[#allocation6 + $0x580] sm:$0xff]
          %v2383 = vld [vmem:[#allocation6 + $0x588] sm:$0xff]
          %v2384 = vld [vmem:[#allocation6 + $0x590] sm:$0xff]
          %v2385 = vld [vmem:[#allocation6 + $0x598] sm:$0xff]
          %v2386 = vld [vmem:[#allocation6 + $0x5a0] sm:$0xff]
          %v2387 = vld [vmem:[#allocation6 + $0x5a8] sm:$0xff]
          %v2388 = vld [vmem:[#allocation6 + $0x5b0] sm:$0xff]
          %v2389 = vld [vmem:[#allocation6 + $0x5b8] sm:$0xff]
          %v2390 = vld [vmem:[#allocation6 + $0x5c0] sm:$0xff]
          %v2391 = vld [vmem:[#allocation6 + $0x5c8] sm:$0xff]
          %v2392 = vld [vmem:[#allocation6 + $0x5d0] sm:$0xff]
          %v2393 = vld [vmem:[#allocation6 + $0x5d8] sm:$0xff]
          %v2394 = vld [vmem:[#allocation6 + $0x5e0] sm:$0xff]
          %v2395 = vld [vmem:[#allocation6 + $0x5e8] sm:$0xff]
          %v2396 = vld [vmem:[#allocation6 + $0x5f0] sm:$0xff]
          %v2397 = vld [vmem:[#allocation6 + $0x5f8] sm:$0xff]
          %v2398 = vld [vmem:[#allocation6 + $0x600] sm:$0xff]
          %v2399 = vld [vmem:[#allocation6 + $0x608] sm:$0xff]
          %v2400 = vld [vmem:[#allocation6 + $0x610] sm:$0xff]
          %v2401 = vld [vmem:[#allocation6 + $0x618] sm:$0xff]
          %v2402 = vld [vmem:[#allocation6 + $0x620] sm:$0xff]
          %v2403 = vld [vmem:[#allocation6 + $0x628] sm:$0xff]
          %v2404 = vld [vmem:[#allocation6 + $0x630] sm:$0xff]
          %v2405 = vld [vmem:[#allocation6 + $0x638] sm:$0xff]
          %v2406 = vld [vmem:[#allocation6 + $0x640] sm:$0xff]
          %v2407 = vld [vmem:[#allocation6 + $0x648] sm:$0xff]
          %v2408 = vld [vmem:[#allocation6 + $0x650] sm:$0xff]
          %v2409 = vld [vmem:[#allocation6 + $0x658] sm:$0xff]
          %v2410 = vld [vmem:[#allocation6 + $0x660] sm:$0xff]
          %v2411 = vld [vmem:[#allocation6 + $0x668] sm:$0xff]
          %v2412 = vld [vmem:[#allocation6 + $0x670] sm:$0xff]
          %v2413 = vld [vmem:[#allocation6 + $0x678] sm:$0xff]
          %v2414 = vld [vmem:[#allocation6 + $0x680] sm:$0xff]
          %v2415 = vld [vmem:[#allocation6 + $0x688] sm:$0xff]
          %v2416 = vld [vmem:[#allocation6 + $0x690] sm:$0xff]
          %v2417 = vld [vmem:[#allocation6 + $0x698] sm:$0xff]
          %v2418 = vld [vmem:[#allocation6 + $0x6a0] sm:$0xff]
          %v2419 = vld [vmem:[#allocation6 + $0x6a8] sm:$0xff]
          %v2420 = vld [vmem:[#allocation6 + $0x6b0] sm:$0xff]
          %v2421 = vld [vmem:[#allocation6 + $0x6b8] sm:$0xff]
          %v2422 = vld [vmem:[#allocation6 + $0x6c0] sm:$0xff]
          %v2423 = vld [vmem:[#allocation6 + $0x6c8] sm:$0xff]
          %v2424 = vld [vmem:[#allocation6 + $0x6d0] sm:$0xff]
          %v2425 = vld [vmem:[#allocation6 + $0x6d8] sm:$0xff]
          %v2426 = vld [vmem:[#allocation6 + $0x6e0] sm:$0xff]
          %v2427 = vld [vmem:[#allocation6 + $0x6e8] sm:$0xff]
          %v2428 = vld [vmem:[#allocation6 + $0x6f0] sm:$0xff]
          %v2429 = vld [vmem:[#allocation6 + $0x6f8] sm:$0xff]
          %v2430 = vld [vmem:[#allocation6 + $0x700] sm:$0xff]
          %v2431 = vld [vmem:[#allocation6 + $0x708] sm:$0xff]
          %v2432 = vld [vmem:[#allocation6 + $0x710] sm:$0xff]
          %v2433 = vld [vmem:[#allocation6 + $0x718] sm:$0xff]
          %v2434 = vld [vmem:[#allocation6 + $0x720] sm:$0xff]
          %v2435 = vld [vmem:[#allocation6 + $0x728] sm:$0xff]
          %v2436 = vld [vmem:[#allocation6 + $0x730] sm:$0xff]
          %v2437 = vld [vmem:[#allocation6 + $0x738] sm:$0xff]
          %v2438 = vld [vmem:[#allocation6 + $0x740] sm:$0xff]
          %v2439 = vld [vmem:[#allocation6 + $0x748] sm:$0xff]
          %v2440 = vld [vmem:[#allocation6 + $0x750] sm:$0xff]
          %v2441 = vld [vmem:[#allocation6 + $0x758] sm:$0xff]
          %v2442 = vld [vmem:[#allocation6 + $0x760] sm:$0xff]
          %v2443 = vld [vmem:[#allocation6 + $0x768] sm:$0xff]
          %v2444 = vld [vmem:[#allocation6 + $0x770] sm:$0xff]
          %v2445 = vld [vmem:[#allocation6 + $0x778] sm:$0xff]
          %v2446 = vld [vmem:[#allocation6 + $0x780] sm:$0xff]
          %v2447 = vld [vmem:[#allocation6 + $0x788] sm:$0xff]
          %v2448 = vld [vmem:[#allocation6 + $0x790] sm:$0xff]
          %v2449 = vld [vmem:[#allocation6 + $0x798] sm:$0xff]
          %v2450 = vld [vmem:[#allocation6 + $0x7a0] sm:$0xff]
          %v2451 = vld [vmem:[#allocation6 + $0x7a8] sm:$0xff]
          %v2452 = vld [vmem:[#allocation6 + $0x7b0] sm:$0xff]
          %v2453 = vld [vmem:[#allocation6 + $0x7b8] sm:$0xff]
          %v2454 = vld [vmem:[#allocation6 + $0x7c0] sm:$0xff]
          %v2455 = vld [vmem:[#allocation6 + $0x7c8] sm:$0xff]
          %v2456 = vld [vmem:[#allocation6 + $0x7d0] sm:$0xff]
          %v2457 = vld [vmem:[#allocation6 + $0x7d8] sm:$0xff]
          %v2458 = vld [vmem:[#allocation6 + $0x7e0] sm:$0xff]
          %v2459 = vld [vmem:[#allocation6 + $0x7e8] sm:$0xff]
          %v2460 = vld [vmem:[#allocation6 + $0x7f0] sm:$0xff]
          %v2461 = vld [vmem:[#allocation6 + $0x7f8] sm:$0xff]
          %v2462 = vld [vmem:[%s8] sm:$0xf]
          %v2719 = vunpack.c.l.b16 %v2206
          %v2720 = vunpack.c.h.b16 %v2206
          %v2721 = vunpack.c.l.b16 %v2207
          %v2722 = vunpack.c.h.b16 %v2207
          %v2723 = vunpack.c.l.b16 %v2208
          %v2724 = vunpack.c.h.b16 %v2208
          %v2725 = vunpack.c.l.b16 %v2209
          %v2726 = vunpack.c.h.b16 %v2209
          %v2727 = vunpack.c.l.b16 %v2210
          %v2728 = vunpack.c.h.b16 %v2210
          %v2729 = vunpack.c.l.b16 %v2211
          %v2730 = vunpack.c.h.b16 %v2211
          %v2731 = vunpack.c.l.b16 %v2212
          %v2732 = vunpack.c.h.b16 %v2212
          %v2733 = vunpack.c.l.b16 %v2213
          %v2734 = vunpack.c.h.b16 %v2213
          %v2735 = vunpack.c.l.b16 %v2214
          %v2736 = vunpack.c.h.b16 %v2214
          %v2737 = vunpack.c.l.b16 %v2215
          %v2738 = vunpack.c.h.b16 %v2215
          %v2739 = vunpack.c.l.b16 %v2216
          %v2740 = vunpack.c.h.b16 %v2216
          %v2741 = vunpack.c.l.b16 %v2217
          %v2742 = vunpack.c.h.b16 %v2217
          %v2743 = vunpack.c.l.b16 %v2218
          %v2744 = vunpack.c.h.b16 %v2218
          %v2745 = vunpack.c.l.b16 %v2219
          %v2746 = vunpack.c.h.b16 %v2219
          %v2747 = vunpack.c.l.b16 %v2220
          %v2748 = vunpack.c.h.b16 %v2220
          %v2749 = vunpack.c.l.b16 %v2221
          %v2750 = vunpack.c.h.b16 %v2221
          %v2751 = vunpack.c.l.b16 %v2222
          %v2752 = vunpack.c.h.b16 %v2222
          %v2753 = vunpack.c.l.b16 %v2223
          %v2754 = vunpack.c.h.b16 %v2223
          %v2755 = vunpack.c.l.b16 %v2224
          %v2756 = vunpack.c.h.b16 %v2224
          %v2757 = vunpack.c.l.b16 %v2225
          %v2758 = vunpack.c.h.b16 %v2225
          %v2759 = vunpack.c.l.b16 %v2226
          %v2760 = vunpack.c.h.b16 %v2226
          %v2761 = vunpack.c.l.b16 %v2227
          %v2762 = vunpack.c.h.b16 %v2227
          %v2763 = vunpack.c.l.b16 %v2228
          %v2764 = vunpack.c.h.b16 %v2228
          %v2765 = vunpack.c.l.b16 %v2229
          %v2766 = vunpack.c.h.b16 %v2229
          %v2767 = vunpack.c.l.b16 %v2230
          %v2768 = vunpack.c.h.b16 %v2230
          %v2769 = vunpack.c.l.b16 %v2231
          %v2770 = vunpack.c.h.b16 %v2231
          %v2771 = vunpack.c.l.b16 %v2232
          %v2772 = vunpack.c.h.b16 %v2232
          %v2773 = vunpack.c.l.b16 %v2233
          %v2774 = vunpack.c.h.b16 %v2233
          %v2775 = vunpack.c.l.b16 %v2234
          %v2776 = vunpack.c.h.b16 %v2234
          %v2777 = vunpack.c.l.b16 %v2235
          %v2778 = vunpack.c.h.b16 %v2235
          %v2779 = vunpack.c.l.b16 %v2236
          %v2780 = vunpack.c.h.b16 %v2236
          %v2781 = vunpack.c.l.b16 %v2237
          %v2782 = vunpack.c.h.b16 %v2237
          %v2783 = vunpack.c.l.b16 %v2238
          %v2784 = vunpack.c.h.b16 %v2238
          %v2785 = vunpack.c.l.b16 %v2239
          %v2786 = vunpack.c.h.b16 %v2239
          %v2787 = vunpack.c.l.b16 %v2240
          %v2788 = vunpack.c.h.b16 %v2240
          %v2789 = vunpack.c.l.b16 %v2241
          %v2790 = vunpack.c.h.b16 %v2241
          %v2791 = vunpack.c.l.b16 %v2242
          %v2792 = vunpack.c.h.b16 %v2242
          %v2793 = vunpack.c.l.b16 %v2243
          %v2794 = vunpack.c.h.b16 %v2243
          %v2795 = vunpack.c.l.b16 %v2244
          %v2796 = vunpack.c.h.b16 %v2244
          %v2797 = vunpack.c.l.b16 %v2245
          %v2798 = vunpack.c.h.b16 %v2245
          %v2799 = vunpack.c.l.b16 %v2246
          %v2800 = vunpack.c.h.b16 %v2246
          %v2801 = vunpack.c.l.b16 %v2247
          %v2802 = vunpack.c.h.b16 %v2247
          %v2803 = vunpack.c.l.b16 %v2248
          %v2804 = vunpack.c.h.b16 %v2248
          %v2805 = vunpack.c.l.b16 %v2249
          %v2806 = vunpack.c.h.b16 %v2249
          %v2807 = vunpack.c.l.b16 %v2250
          %v2808 = vunpack.c.h.b16 %v2250
          %v2809 = vunpack.c.l.b16 %v2251
          %v2810 = vunpack.c.h.b16 %v2251
          %v2811 = vunpack.c.l.b16 %v2252
          %v2812 = vunpack.c.h.b16 %v2252
          %v2813 = vunpack.c.l.b16 %v2253
          %v2814 = vunpack.c.h.b16 %v2253
          %v2815 = vunpack.c.l.b16 %v2254
          %v2816 = vunpack.c.h.b16 %v2254
          %v2817 = vunpack.c.l.b16 %v2255
          %v2818 = vunpack.c.h.b16 %v2255
          %v2819 = vunpack.c.l.b16 %v2256
          %v2820 = vunpack.c.h.b16 %v2256
          %v2821 = vunpack.c.l.b16 %v2257
          %v2822 = vunpack.c.h.b16 %v2257
          %v2823 = vunpack.c.l.b16 %v2258
          %v2824 = vunpack.c.h.b16 %v2258
          %v2825 = vunpack.c.l.b16 %v2259
          %v2826 = vunpack.c.h.b16 %v2259
          %v2827 = vunpack.c.l.b16 %v2260
          %v2828 = vunpack.c.h.b16 %v2260
          %v2829 = vunpack.c.l.b16 %v2261
          %v2830 = vunpack.c.h.b16 %v2261
          %v2831 = vunpack.c.l.b16 %v2262
          %v2832 = vunpack.c.h.b16 %v2262
          %v2833 = vunpack.c.l.b16 %v2263
          %v2834 = vunpack.c.h.b16 %v2263
          %v2835 = vunpack.c.l.b16 %v2264
          %v2836 = vunpack.c.h.b16 %v2264
          %v2837 = vunpack.c.l.b16 %v2265
          %v2838 = vunpack.c.h.b16 %v2265
          %v2839 = vunpack.c.l.b16 %v2266
          %v2840 = vunpack.c.h.b16 %v2266
          %v2841 = vunpack.c.l.b16 %v2267
          %v2842 = vunpack.c.h.b16 %v2267
          %v2843 = vunpack.c.l.b16 %v2268
          %v2844 = vunpack.c.h.b16 %v2268
          %v2845 = vunpack.c.l.b16 %v2269
          %v2846 = vunpack.c.h.b16 %v2269
          %v2847 = vunpack.c.l.b16 %v2270
          %v2848 = vunpack.c.h.b16 %v2270
          %v2849 = vunpack.c.l.b16 %v2271
          %v2850 = vunpack.c.h.b16 %v2271
          %v2851 = vunpack.c.l.b16 %v2272
          %v2852 = vunpack.c.h.b16 %v2272
          %v2853 = vunpack.c.l.b16 %v2273
          %v2854 = vunpack.c.h.b16 %v2273
          %v2855 = vunpack.c.l.b16 %v2274
          %v2856 = vunpack.c.h.b16 %v2274
          %v2857 = vunpack.c.l.b16 %v2275
          %v2858 = vunpack.c.h.b16 %v2275
          %v2859 = vunpack.c.l.b16 %v2276
          %v2860 = vunpack.c.h.b16 %v2276
          %v2861 = vunpack.c.l.b16 %v2277
          %v2862 = vunpack.c.h.b16 %v2277
          %v2863 = vunpack.c.l.b16 %v2278
          %v2864 = vunpack.c.h.b16 %v2278
          %v2865 = vunpack.c.l.b16 %v2279
          %v2866 = vunpack.c.h.b16 %v2279
          %v2867 = vunpack.c.l.b16 %v2280
          %v2868 = vunpack.c.h.b16 %v2280
          %v2869 = vunpack.c.l.b16 %v2281
          %v2870 = vunpack.c.h.b16 %v2281
          %v2871 = vunpack.c.l.b16 %v2282
          %v2872 = vunpack.c.h.b16 %v2282
          %v2873 = vunpack.c.l.b16 %v2283
          %v2874 = vunpack.c.h.b16 %v2283
          %v2875 = vunpack.c.l.b16 %v2284
          %v2876 = vunpack.c.h.b16 %v2284
          %v2877 = vunpack.c.l.b16 %v2285
          %v2878 = vunpack.c.h.b16 %v2285
          %v2879 = vunpack.c.l.b16 %v2286
          %v2880 = vunpack.c.h.b16 %v2286
          %v2881 = vunpack.c.l.b16 %v2287
          %v2882 = vunpack.c.h.b16 %v2287
          %v2883 = vunpack.c.l.b16 %v2288
          %v2884 = vunpack.c.h.b16 %v2288
          %v2885 = vunpack.c.l.b16 %v2289
          %v2886 = vunpack.c.h.b16 %v2289
          %v2887 = vunpack.c.l.b16 %v2290
          %v2888 = vunpack.c.h.b16 %v2290
          %v2889 = vunpack.c.l.b16 %v2291
          %v2890 = vunpack.c.h.b16 %v2291
          %v2891 = vunpack.c.l.b16 %v2292
          %v2892 = vunpack.c.h.b16 %v2292
          %v2893 = vunpack.c.l.b16 %v2293
          %v2894 = vunpack.c.h.b16 %v2293
          %v2895 = vunpack.c.l.b16 %v2294
          %v2896 = vunpack.c.h.b16 %v2294
          %v2897 = vunpack.c.l.b16 %v2295
          %v2898 = vunpack.c.h.b16 %v2295
          %v2899 = vunpack.c.l.b16 %v2296
          %v2900 = vunpack.c.h.b16 %v2296
          %v2901 = vunpack.c.l.b16 %v2297
          %v2902 = vunpack.c.h.b16 %v2297
          %v2903 = vunpack.c.l.b16 %v2298
          %v2904 = vunpack.c.h.b16 %v2298
          %v2905 = vunpack.c.l.b16 %v2299
          %v2906 = vunpack.c.h.b16 %v2299
          %v2907 = vunpack.c.l.b16 %v2300
          %v2908 = vunpack.c.h.b16 %v2300
          %v2909 = vunpack.c.l.b16 %v2301
          %v2910 = vunpack.c.h.b16 %v2301
          %v2911 = vunpack.c.l.b16 %v2302
          %v2912 = vunpack.c.h.b16 %v2302
          %v2913 = vunpack.c.l.b16 %v2303
          %v2914 = vunpack.c.h.b16 %v2303
          %v2915 = vunpack.c.l.b16 %v2304
          %v2916 = vunpack.c.h.b16 %v2304
          %v2917 = vunpack.c.l.b16 %v2305
          %v2918 = vunpack.c.h.b16 %v2305
          %v2919 = vunpack.c.l.b16 %v2306
          %v2920 = vunpack.c.h.b16 %v2306
          %v2921 = vunpack.c.l.b16 %v2307
          %v2922 = vunpack.c.h.b16 %v2307
          %v2923 = vunpack.c.l.b16 %v2308
          %v2924 = vunpack.c.h.b16 %v2308
          %v2925 = vunpack.c.l.b16 %v2309
          %v2926 = vunpack.c.h.b16 %v2309
          %v2927 = vunpack.c.l.b16 %v2310
          %v2928 = vunpack.c.h.b16 %v2310
          %v2929 = vunpack.c.l.b16 %v2311
          %v2930 = vunpack.c.h.b16 %v2311
          %v2931 = vunpack.c.l.b16 %v2312
          %v2932 = vunpack.c.h.b16 %v2312
          %v2933 = vunpack.c.l.b16 %v2313
          %v2934 = vunpack.c.h.b16 %v2313
          %v2935 = vunpack.c.l.b16 %v2314
          %v2936 = vunpack.c.h.b16 %v2314
          %v2937 = vunpack.c.l.b16 %v2315
          %v2938 = vunpack.c.h.b16 %v2315
          %v2939 = vunpack.c.l.b16 %v2316
          %v2940 = vunpack.c.h.b16 %v2316
          %v2941 = vunpack.c.l.b16 %v2317
          %v2942 = vunpack.c.h.b16 %v2317
          %v2943 = vunpack.c.l.b16 %v2318
          %v2944 = vunpack.c.h.b16 %v2318
          %v2945 = vunpack.c.l.b16 %v2319
          %v2946 = vunpack.c.h.b16 %v2319
          %v2947 = vunpack.c.l.b16 %v2320
          %v2948 = vunpack.c.h.b16 %v2320
          %v2949 = vunpack.c.l.b16 %v2321
          %v2950 = vunpack.c.h.b16 %v2321
          %v2951 = vunpack.c.l.b16 %v2322
          %v2952 = vunpack.c.h.b16 %v2322
          %v2953 = vunpack.c.l.b16 %v2323
          %v2954 = vunpack.c.h.b16 %v2323
          %v2955 = vunpack.c.l.b16 %v2324
          %v2956 = vunpack.c.h.b16 %v2324
          %v2957 = vunpack.c.l.b16 %v2325
          %v2958 = vunpack.c.h.b16 %v2325
          %v2959 = vunpack.c.l.b16 %v2326
          %v2960 = vunpack.c.h.b16 %v2326
          %v2961 = vunpack.c.l.b16 %v2327
          %v2962 = vunpack.c.h.b16 %v2327
          %v2963 = vunpack.c.l.b16 %v2328
          %v2964 = vunpack.c.h.b16 %v2328
          %v2965 = vunpack.c.l.b16 %v2329
          %v2966 = vunpack.c.h.b16 %v2329
          %v2967 = vunpack.c.l.b16 %v2330
          %v2968 = vunpack.c.h.b16 %v2330
          %v2969 = vunpack.c.l.b16 %v2331
          %v2970 = vunpack.c.h.b16 %v2331
          %v2971 = vunpack.c.l.b16 %v2332
          %v2972 = vunpack.c.h.b16 %v2332
          %v2973 = vunpack.c.l.b16 %v2333
          %v2974 = vunpack.c.h.b16 %v2333
          %v2975 = vunpack.c.l.b16 %v2334
          %v2976 = vunpack.c.h.b16 %v2334
          %v2977 = vunpack.c.l.b16 %v2335
          %v2978 = vunpack.c.h.b16 %v2335
          %v2979 = vunpack.c.l.b16 %v2336
          %v2980 = vunpack.c.h.b16 %v2336
          %v2981 = vunpack.c.l.b16 %v2337
          %v2982 = vunpack.c.h.b16 %v2337
          %v2983 = vunpack.c.l.b16 %v2338
          %v2984 = vunpack.c.h.b16 %v2338
          %v2985 = vunpack.c.l.b16 %v2339
          %v2986 = vunpack.c.h.b16 %v2339
          %v2987 = vunpack.c.l.b16 %v2340
          %v2988 = vunpack.c.h.b16 %v2340
          %v2989 = vunpack.c.l.b16 %v2341
          %v2990 = vunpack.c.h.b16 %v2341
          %v2991 = vunpack.c.l.b16 %v2342
          %v2992 = vunpack.c.h.b16 %v2342
          %v2993 = vunpack.c.l.b16 %v2343
          %v2994 = vunpack.c.h.b16 %v2343
          %v2995 = vunpack.c.l.b16 %v2344
          %v2996 = vunpack.c.h.b16 %v2344
          %v2997 = vunpack.c.l.b16 %v2345
          %v2998 = vunpack.c.h.b16 %v2345
          %v2999 = vunpack.c.l.b16 %v2346
          %v3000 = vunpack.c.h.b16 %v2346
          %v3001 = vunpack.c.l.b16 %v2347
          %v3002 = vunpack.c.h.b16 %v2347
          %v3003 = vunpack.c.l.b16 %v2348
          %v3004 = vunpack.c.h.b16 %v2348
          %v3005 = vunpack.c.l.b16 %v2349
          %v3006 = vunpack.c.h.b16 %v2349
          %v3007 = vunpack.c.l.b16 %v2350
          %v3008 = vunpack.c.h.b16 %v2350
          %v3009 = vunpack.c.l.b16 %v2351
          %v3010 = vunpack.c.h.b16 %v2351
          %v3011 = vunpack.c.l.b16 %v2352
          %v3012 = vunpack.c.h.b16 %v2352
          %v3013 = vunpack.c.l.b16 %v2353
          %v3014 = vunpack.c.h.b16 %v2353
          %v3015 = vunpack.c.l.b16 %v2354
          %v3016 = vunpack.c.h.b16 %v2354
          %v3017 = vunpack.c.l.b16 %v2355
          %v3018 = vunpack.c.h.b16 %v2355
          %v3019 = vunpack.c.l.b16 %v2356
          %v3020 = vunpack.c.h.b16 %v2356
          %v3021 = vunpack.c.l.b16 %v2357
          %v3022 = vunpack.c.h.b16 %v2357
          %v3023 = vunpack.c.l.b16 %v2358
          %v3024 = vunpack.c.h.b16 %v2358
          %v3025 = vunpack.c.l.b16 %v2359
          %v3026 = vunpack.c.h.b16 %v2359
          %v3027 = vunpack.c.l.b16 %v2360
          %v3028 = vunpack.c.h.b16 %v2360
          %v3029 = vunpack.c.l.b16 %v2361
          %v3030 = vunpack.c.h.b16 %v2361
          %v3031 = vunpack.c.l.b16 %v2362
          %v3032 = vunpack.c.h.b16 %v2362
          %v3033 = vunpack.c.l.b16 %v2363
          %v3034 = vunpack.c.h.b16 %v2363
          %v3035 = vunpack.c.l.b16 %v2364
          %v3036 = vunpack.c.h.b16 %v2364
          %v3037 = vunpack.c.l.b16 %v2365
          %v3038 = vunpack.c.h.b16 %v2365
          %v3039 = vunpack.c.l.b16 %v2366
          %v3040 = vunpack.c.h.b16 %v2366
          %v3041 = vunpack.c.l.b16 %v2367
          %v3042 = vunpack.c.h.b16 %v2367
          %v3043 = vunpack.c.l.b16 %v2368
          %v3044 = vunpack.c.h.b16 %v2368
          %v3045 = vunpack.c.l.b16 %v2369
          %v3046 = vunpack.c.h.b16 %v2369
          %v3047 = vunpack.c.l.b16 %v2370
          %v3048 = vunpack.c.h.b16 %v2370
          %v3049 = vunpack.c.l.b16 %v2371
          %v3050 = vunpack.c.h.b16 %v2371
          %v3051 = vunpack.c.l.b16 %v2372
          %v3052 = vunpack.c.h.b16 %v2372
          %v3053 = vunpack.c.l.b16 %v2373
          %v3054 = vunpack.c.h.b16 %v2373
          %v3055 = vunpack.c.l.b16 %v2374
          %v3056 = vunpack.c.h.b16 %v2374
          %v3057 = vunpack.c.l.b16 %v2375
          %v3058 = vunpack.c.h.b16 %v2375
          %v3059 = vunpack.c.l.b16 %v2376
          %v3060 = vunpack.c.h.b16 %v2376
          %v3061 = vunpack.c.l.b16 %v2377
          %v3062 = vunpack.c.h.b16 %v2377
          %v3063 = vunpack.c.l.b16 %v2378
          %v3064 = vunpack.c.h.b16 %v2378
          %v3065 = vunpack.c.l.b16 %v2379
          %v3066 = vunpack.c.h.b16 %v2379
          %v3067 = vunpack.c.l.b16 %v2380
          %v3068 = vunpack.c.h.b16 %v2380
          %v3069 = vunpack.c.l.b16 %v2381
          %v3070 = vunpack.c.h.b16 %v2381
          %v3071 = vunpack.c.l.b16 %v2382
          %v3072 = vunpack.c.h.b16 %v2382
          %v3073 = vunpack.c.l.b16 %v2383
          %v3074 = vunpack.c.h.b16 %v2383
          %v3075 = vunpack.c.l.b16 %v2384
          %v3076 = vunpack.c.h.b16 %v2384
          %v3077 = vunpack.c.l.b16 %v2385
          %v3078 = vunpack.c.h.b16 %v2385
          %v3079 = vunpack.c.l.b16 %v2386
          %v3080 = vunpack.c.h.b16 %v2386
          %v3081 = vunpack.c.l.b16 %v2387
          %v3082 = vunpack.c.h.b16 %v2387
          %v3083 = vunpack.c.l.b16 %v2388
          %v3084 = vunpack.c.h.b16 %v2388
          %v3085 = vunpack.c.l.b16 %v2389
          %v3086 = vunpack.c.h.b16 %v2389
          %v3087 = vunpack.c.l.b16 %v2390
          %v3088 = vunpack.c.h.b16 %v2390
          %v3089 = vunpack.c.l.b16 %v2391
          %v3090 = vunpack.c.h.b16 %v2391
          %v3091 = vunpack.c.l.b16 %v2392
          %v3092 = vunpack.c.h.b16 %v2392
          %v3093 = vunpack.c.l.b16 %v2393
          %v3094 = vunpack.c.h.b16 %v2393
          %v3095 = vunpack.c.l.b16 %v2394
          %v3096 = vunpack.c.h.b16 %v2394
          %v3097 = vunpack.c.l.b16 %v2395
          %v3098 = vunpack.c.h.b16 %v2395
          %v3099 = vunpack.c.l.b16 %v2396
          %v3100 = vunpack.c.h.b16 %v2396
          %v3101 = vunpack.c.l.b16 %v2397
          %v3102 = vunpack.c.h.b16 %v2397
          %v3103 = vunpack.c.l.b16 %v2398
          %v3104 = vunpack.c.h.b16 %v2398
          %v3105 = vunpack.c.l.b16 %v2399
          %v3106 = vunpack.c.h.b16 %v2399
          %v3107 = vunpack.c.l.b16 %v2400
          %v3108 = vunpack.c.h.b16 %v2400
          %v3109 = vunpack.c.l.b16 %v2401
          %v3110 = vunpack.c.h.b16 %v2401
          %v3111 = vunpack.c.l.b16 %v2402
          %v3112 = vunpack.c.h.b16 %v2402
          %v3113 = vunpack.c.l.b16 %v2403
          %v3114 = vunpack.c.h.b16 %v2403
          %v3115 = vunpack.c.l.b16 %v2404
          %v3116 = vunpack.c.h.b16 %v2404
          %v3117 = vunpack.c.l.b16 %v2405
          %v3118 = vunpack.c.h.b16 %v2405
          %v3119 = vunpack.c.l.b16 %v2406
          %v3120 = vunpack.c.h.b16 %v2406
          %v3121 = vunpack.c.l.b16 %v2407
          %v3122 = vunpack.c.h.b16 %v2407
          %v3123 = vunpack.c.l.b16 %v2408
          %v3124 = vunpack.c.h.b16 %v2408
          %v3125 = vunpack.c.l.b16 %v2409
          %v3126 = vunpack.c.h.b16 %v2409
          %v3127 = vunpack.c.l.b16 %v2410
          %v3128 = vunpack.c.h.b16 %v2410
          %v3129 = vunpack.c.l.b16 %v2411
          %v3130 = vunpack.c.h.b16 %v2411
          %v3131 = vunpack.c.l.b16 %v2412
          %v3132 = vunpack.c.h.b16 %v2412
          %v3133 = vunpack.c.l.b16 %v2413
          %v3134 = vunpack.c.h.b16 %v2413
          %v3135 = vunpack.c.l.b16 %v2414
          %v3136 = vunpack.c.h.b16 %v2414
          %v3137 = vunpack.c.l.b16 %v2415
          %v3138 = vunpack.c.h.b16 %v2415
          %v3139 = vunpack.c.l.b16 %v2416
          %v3140 = vunpack.c.h.b16 %v2416
          %v3141 = vunpack.c.l.b16 %v2417
          %v3142 = vunpack.c.h.b16 %v2417
          %v3143 = vunpack.c.l.b16 %v2418
          %v3144 = vunpack.c.h.b16 %v2418
          %v3145 = vunpack.c.l.b16 %v2419
          %v3146 = vunpack.c.h.b16 %v2419
          %v3147 = vunpack.c.l.b16 %v2420
          %v3148 = vunpack.c.h.b16 %v2420
          %v3149 = vunpack.c.l.b16 %v2421
          %v3150 = vunpack.c.h.b16 %v2421
          %v3151 = vunpack.c.l.b16 %v2422
          %v3152 = vunpack.c.h.b16 %v2422
          %v3153 = vunpack.c.l.b16 %v2423
          %v3154 = vunpack.c.h.b16 %v2423
          %v3155 = vunpack.c.l.b16 %v2424
          %v3156 = vunpack.c.h.b16 %v2424
          %v3157 = vunpack.c.l.b16 %v2425
          %v3158 = vunpack.c.h.b16 %v2425
          %v3159 = vunpack.c.l.b16 %v2426
          %v3160 = vunpack.c.h.b16 %v2426
          %v3161 = vunpack.c.l.b16 %v2427
          %v3162 = vunpack.c.h.b16 %v2427
          %v3163 = vunpack.c.l.b16 %v2428
          %v3164 = vunpack.c.h.b16 %v2428
          %v3165 = vunpack.c.l.b16 %v2429
          %v3166 = vunpack.c.h.b16 %v2429
          %v3167 = vunpack.c.l.b16 %v2430
          %v3168 = vunpack.c.h.b16 %v2430
          %v3169 = vunpack.c.l.b16 %v2431
          %v3170 = vunpack.c.h.b16 %v2431
          %v3171 = vunpack.c.l.b16 %v2432
          %v3172 = vunpack.c.h.b16 %v2432
          %v3173 = vunpack.c.l.b16 %v2433
          %v3174 = vunpack.c.h.b16 %v2433
          %v3175 = vunpack.c.l.b16 %v2434
          %v3176 = vunpack.c.h.b16 %v2434
          %v3177 = vunpack.c.l.b16 %v2435
          %v3178 = vunpack.c.h.b16 %v2435
          %v3179 = vunpack.c.l.b16 %v2436
          %v3180 = vunpack.c.h.b16 %v2436
          %v3181 = vunpack.c.l.b16 %v2437
          %v3182 = vunpack.c.h.b16 %v2437
          %v3183 = vunpack.c.l.b16 %v2438
          %v3184 = vunpack.c.h.b16 %v2438
          %v3185 = vunpack.c.l.b16 %v2439
          %v3186 = vunpack.c.h.b16 %v2439
          %v3187 = vunpack.c.l.b16 %v2440
          %v3188 = vunpack.c.h.b16 %v2440
          %v3189 = vunpack.c.l.b16 %v2441
          %v3190 = vunpack.c.h.b16 %v2441
          %v3191 = vunpack.c.l.b16 %v2442
          %v3192 = vunpack.c.h.b16 %v2442
          %v3193 = vunpack.c.l.b16 %v2443
          %v3194 = vunpack.c.h.b16 %v2443
          %v3195 = vunpack.c.l.b16 %v2444
          %v3196 = vunpack.c.h.b16 %v2444
          %v3197 = vunpack.c.l.b16 %v2445
          %v3198 = vunpack.c.h.b16 %v2445
          %v3199 = vunpack.c.l.b16 %v2446
          %v3200 = vunpack.c.h.b16 %v2446
          %v3201 = vunpack.c.l.b16 %v2447
          %v3202 = vunpack.c.h.b16 %v2447
          %v3203 = vunpack.c.l.b16 %v2448
          %v3204 = vunpack.c.h.b16 %v2448
          %v3205 = vunpack.c.l.b16 %v2449
          %v3206 = vunpack.c.h.b16 %v2449
          %v3207 = vunpack.c.l.b16 %v2450
          %v3208 = vunpack.c.h.b16 %v2450
          %v3209 = vunpack.c.l.b16 %v2451
          %v3210 = vunpack.c.h.b16 %v2451
          %v3211 = vunpack.c.l.b16 %v2452
          %v3212 = vunpack.c.h.b16 %v2452
          %v3213 = vunpack.c.l.b16 %v2453
          %v3214 = vunpack.c.h.b16 %v2453
          %v3215 = vunpack.c.l.b16 %v2454
          %v3216 = vunpack.c.h.b16 %v2454
          %v3217 = vunpack.c.l.b16 %v2455
          %v3218 = vunpack.c.h.b16 %v2455
          %v3219 = vunpack.c.l.b16 %v2456
          %v3220 = vunpack.c.h.b16 %v2456
          %v3221 = vunpack.c.l.b16 %v2457
          %v3222 = vunpack.c.h.b16 %v2457
          %v3223 = vunpack.c.l.b16 %v2458
          %v3224 = vunpack.c.h.b16 %v2458
          %v3225 = vunpack.c.l.b16 %v2459
          %v3226 = vunpack.c.h.b16 %v2459
          %v3227 = vunpack.c.l.b16 %v2460
          %v3228 = vunpack.c.h.b16 %v2460
          %v3229 = vunpack.c.l.b16 %v2461
          %v3230 = vunpack.c.h.b16 %v2461
          %v3231 = vpack.c.b16 %v2723, %v2719
          %v3232 = vpack.c.b16 %v2724, %v2720
          %v3233 = vpack.c.b16 %v2725, %v2721
          %v3234 = vpack.c.b16 %v2726, %v2722
          %v3235 = vpack.c.b16 %v2731, %v2727
          %v3236 = vpack.c.b16 %v2732, %v2728
          %v3237 = vpack.c.b16 %v2733, %v2729
          %v3238 = vpack.c.b16 %v2734, %v2730
          %v3239 = vpack.c.b16 %v2739, %v2735
          %v3240 = vpack.c.b16 %v2740, %v2736
          %v3241 = vpack.c.b16 %v2741, %v2737
          %v3242 = vpack.c.b16 %v2742, %v2738
          %v3243 = vpack.c.b16 %v2747, %v2743
          %v3244 = vpack.c.b16 %v2748, %v2744
          %v3245 = vpack.c.b16 %v2749, %v2745
          %v3246 = vpack.c.b16 %v2750, %v2746
          %v3247 = vpack.c.b16 %v2755, %v2751
          %v3248 = vpack.c.b16 %v2756, %v2752
          %v3249 = vpack.c.b16 %v2757, %v2753
          %v3250 = vpack.c.b16 %v2758, %v2754
          %v3251 = vpack.c.b16 %v2763, %v2759
          %v3252 = vpack.c.b16 %v2764, %v2760
          %v3253 = vpack.c.b16 %v2765, %v2761
          %v3254 = vpack.c.b16 %v2766, %v2762
          %v3255 = vpack.c.b16 %v2771, %v2767
          %v3256 = vpack.c.b16 %v2772, %v2768
          %v3257 = vpack.c.b16 %v2773, %v2769
          %v3258 = vpack.c.b16 %v2774, %v2770
          %v3259 = vpack.c.b16 %v2779, %v2775
          %v3260 = vpack.c.b16 %v2780, %v2776
          %v3261 = vpack.c.b16 %v2781, %v2777
          %v3262 = vpack.c.b16 %v2782, %v2778
          %v3263 = vpack.c.b16 %v2787, %v2783
          %v3264 = vpack.c.b16 %v2788, %v2784
          %v3265 = vpack.c.b16 %v2789, %v2785
          %v3266 = vpack.c.b16 %v2790, %v2786
          %v3267 = vpack.c.b16 %v2795, %v2791
          %v3268 = vpack.c.b16 %v2796, %v2792
          %v3269 = vpack.c.b16 %v2797, %v2793
          %v3270 = vpack.c.b16 %v2798, %v2794
          %v3271 = vpack.c.b16 %v2803, %v2799
          %v3272 = vpack.c.b16 %v2804, %v2800
          %v3273 = vpack.c.b16 %v2805, %v2801
          %v3274 = vpack.c.b16 %v2806, %v2802
          %v3275 = vpack.c.b16 %v2811, %v2807
          %v3276 = vpack.c.b16 %v2812, %v2808
          %v3277 = vpack.c.b16 %v2813, %v2809
          %v3278 = vpack.c.b16 %v2814, %v2810
          %v3279 = vpack.c.b16 %v2819, %v2815
          %v3280 = vpack.c.b16 %v2820, %v2816
          %v3281 = vpack.c.b16 %v2821, %v2817
          %v3282 = vpack.c.b16 %v2822, %v2818
          %v3283 = vpack.c.b16 %v2827, %v2823
          %v3284 = vpack.c.b16 %v2828, %v2824
          %v3285 = vpack.c.b16 %v2829, %v2825
          %v3286 = vpack.c.b16 %v2830, %v2826
          %v3287 = vpack.c.b16 %v2835, %v2831
          %v3288 = vpack.c.b16 %v2836, %v2832
          %v3289 = vpack.c.b16 %v2837, %v2833
          %v3290 = vpack.c.b16 %v2838, %v2834
          %v3291 = vpack.c.b16 %v2843, %v2839
          %v3292 = vpack.c.b16 %v2844, %v2840
          %v3293 = vpack.c.b16 %v2845, %v2841
          %v3294 = vpack.c.b16 %v2846, %v2842
          %v3295 = vpack.c.b16 %v2851, %v2847
          %v3296 = vpack.c.b16 %v2852, %v2848
          %v3297 = vpack.c.b16 %v2853, %v2849
          %v3298 = vpack.c.b16 %v2854, %v2850
          %v3299 = vpack.c.b16 %v2859, %v2855
          %v3300 = vpack.c.b16 %v2860, %v2856
          %v3301 = vpack.c.b16 %v2861, %v2857
          %v3302 = vpack.c.b16 %v2862, %v2858
          %v3303 = vpack.c.b16 %v2867, %v2863
          %v3304 = vpack.c.b16 %v2868, %v2864
          %v3305 = vpack.c.b16 %v2869, %v2865
          %v3306 = vpack.c.b16 %v2870, %v2866
          %v3307 = vpack.c.b16 %v2875, %v2871
          %v3308 = vpack.c.b16 %v2876, %v2872
          %v3309 = vpack.c.b16 %v2877, %v2873
          %v3310 = vpack.c.b16 %v2878, %v2874
          %v3311 = vpack.c.b16 %v2883, %v2879
          %v3312 = vpack.c.b16 %v2884, %v2880
          %v3313 = vpack.c.b16 %v2885, %v2881
          %v3314 = vpack.c.b16 %v2886, %v2882
          %v3315 = vpack.c.b16 %v2891, %v2887
          %v3316 = vpack.c.b16 %v2892, %v2888
          %v3317 = vpack.c.b16 %v2893, %v2889
          %v3318 = vpack.c.b16 %v2894, %v2890
          %v3319 = vpack.c.b16 %v2899, %v2895
          %v3320 = vpack.c.b16 %v2900, %v2896
          %v3321 = vpack.c.b16 %v2901, %v2897
          %v3322 = vpack.c.b16 %v2902, %v2898
          %v3323 = vpack.c.b16 %v2907, %v2903
          %v3324 = vpack.c.b16 %v2908, %v2904
          %v3325 = vpack.c.b16 %v2909, %v2905
          %v3326 = vpack.c.b16 %v2910, %v2906
          %v3327 = vpack.c.b16 %v2915, %v2911
          %v3328 = vpack.c.b16 %v2916, %v2912
          %v3329 = vpack.c.b16 %v2917, %v2913
          %v3330 = vpack.c.b16 %v2918, %v2914
          %v3331 = vpack.c.b16 %v2923, %v2919
          %v3332 = vpack.c.b16 %v2924, %v2920
          %v3333 = vpack.c.b16 %v2925, %v2921
          %v3334 = vpack.c.b16 %v2926, %v2922
          %v3335 = vpack.c.b16 %v2931, %v2927
          %v3336 = vpack.c.b16 %v2932, %v2928
          %v3337 = vpack.c.b16 %v2933, %v2929
          %v3338 = vpack.c.b16 %v2934, %v2930
          %v3339 = vpack.c.b16 %v2939, %v2935
          %v3340 = vpack.c.b16 %v2940, %v2936
          %v3341 = vpack.c.b16 %v2941, %v2937
          %v3342 = vpack.c.b16 %v2942, %v2938
          %v3343 = vpack.c.b16 %v2947, %v2943
          %v3344 = vpack.c.b16 %v2948, %v2944
          %v3345 = vpack.c.b16 %v2949, %v2945
          %v3346 = vpack.c.b16 %v2950, %v2946
          %v3347 = vpack.c.b16 %v2955, %v2951
          %v3348 = vpack.c.b16 %v2956, %v2952
          %v3349 = vpack.c.b16 %v2957, %v2953
          %v3350 = vpack.c.b16 %v2958, %v2954
          %v3351 = vpack.c.b16 %v2963, %v2959
          %v3352 = vpack.c.b16 %v2964, %v2960
          %v3353 = vpack.c.b16 %v2965, %v2961
          %v3354 = vpack.c.b16 %v2966, %v2962
          %v3355 = vpack.c.b16 %v2971, %v2967
          %v3356 = vpack.c.b16 %v2972, %v2968
          %v3357 = vpack.c.b16 %v2973, %v2969
          %v3358 = vpack.c.b16 %v2974, %v2970
          %v3359 = vpack.c.b16 %v2979, %v2975
          %v3360 = vpack.c.b16 %v2980, %v2976
          %v3361 = vpack.c.b16 %v2981, %v2977
          %v3362 = vpack.c.b16 %v2982, %v2978
          %v3363 = vpack.c.b16 %v2987, %v2983
          %v3364 = vpack.c.b16 %v2988, %v2984
          %v3365 = vpack.c.b16 %v2989, %v2985
          %v3366 = vpack.c.b16 %v2990, %v2986
          %v3367 = vpack.c.b16 %v2995, %v2991
          %v3368 = vpack.c.b16 %v2996, %v2992
          %v3369 = vpack.c.b16 %v2997, %v2993
          %v3370 = vpack.c.b16 %v2998, %v2994
          %v3371 = vpack.c.b16 %v3003, %v2999
          %v3372 = vpack.c.b16 %v3004, %v3000
          %v3373 = vpack.c.b16 %v3005, %v3001
          %v3374 = vpack.c.b16 %v3006, %v3002
          %v3375 = vpack.c.b16 %v3011, %v3007
          %v3376 = vpack.c.b16 %v3012, %v3008
          %v3377 = vpack.c.b16 %v3013, %v3009
          %v3378 = vpack.c.b16 %v3014, %v3010
          %v3379 = vpack.c.b16 %v3019, %v3015
          %v3380 = vpack.c.b16 %v3020, %v3016
          %v3381 = vpack.c.b16 %v3021, %v3017
          %v3382 = vpack.c.b16 %v3022, %v3018
          %v3383 = vpack.c.b16 %v3027, %v3023
          %v3384 = vpack.c.b16 %v3028, %v3024
          %v3385 = vpack.c.b16 %v3029, %v3025
          %v3386 = vpack.c.b16 %v3030, %v3026
          %v3387 = vpack.c.b16 %v3035, %v3031
          %v3388 = vpack.c.b16 %v3036, %v3032
          %v3389 = vpack.c.b16 %v3037, %v3033
          %v3390 = vpack.c.b16 %v3038, %v3034
          %v3391 = vpack.c.b16 %v3043, %v3039
          %v3392 = vpack.c.b16 %v3044, %v3040
          %v3393 = vpack.c.b16 %v3045, %v3041
          %v3394 = vpack.c.b16 %v3046, %v3042
          %v3395 = vpack.c.b16 %v3051, %v3047
          %v3396 = vpack.c.b16 %v3052, %v3048
          %v3397 = vpack.c.b16 %v3053, %v3049
          %v3398 = vpack.c.b16 %v3054, %v3050
          %v3399 = vpack.c.b16 %v3059, %v3055
          %v3400 = vpack.c.b16 %v3060, %v3056
          %v3401 = vpack.c.b16 %v3061, %v3057
          %v3402 = vpack.c.b16 %v3062, %v3058
          %v3403 = vpack.c.b16 %v3067, %v3063
          %v3404 = vpack.c.b16 %v3068, %v3064
          %v3405 = vpack.c.b16 %v3069, %v3065
          %v3406 = vpack.c.b16 %v3070, %v3066
          %v3407 = vpack.c.b16 %v3075, %v3071
          %v3408 = vpack.c.b16 %v3076, %v3072
          %v3409 = vpack.c.b16 %v3077, %v3073
          %v3410 = vpack.c.b16 %v3078, %v3074
          %v3411 = vpack.c.b16 %v3083, %v3079
          %v3412 = vpack.c.b16 %v3084, %v3080
          %v3413 = vpack.c.b16 %v3085, %v3081
          %v3414 = vpack.c.b16 %v3086, %v3082
          %v3415 = vpack.c.b16 %v3091, %v3087
          %v3416 = vpack.c.b16 %v3092, %v3088
          %v3417 = vpack.c.b16 %v3093, %v3089
          %v3418 = vpack.c.b16 %v3094, %v3090
          %v3419 = vpack.c.b16 %v3099, %v3095
          %v3420 = vpack.c.b16 %v3100, %v3096
          %v3421 = vpack.c.b16 %v3101, %v3097
          %v3422 = vpack.c.b16 %v3102, %v3098
          %v3423 = vpack.c.b16 %v3107, %v3103
          %v3424 = vpack.c.b16 %v3108, %v3104
          %v3425 = vpack.c.b16 %v3109, %v3105
          %v3426 = vpack.c.b16 %v3110, %v3106
          %v3427 = vpack.c.b16 %v3115, %v3111
          %v3428 = vpack.c.b16 %v3116, %v3112
          %v3429 = vpack.c.b16 %v3117, %v3113
          %v3430 = vpack.c.b16 %v3118, %v3114
          %v3431 = vpack.c.b16 %v3123, %v3119
          %v3432 = vpack.c.b16 %v3124, %v3120
          %v3433 = vpack.c.b16 %v3125, %v3121
          %v3434 = vpack.c.b16 %v3126, %v3122
          %v3435 = vpack.c.b16 %v3131, %v3127
          %v3436 = vpack.c.b16 %v3132, %v3128
          %v3437 = vpack.c.b16 %v3133, %v3129
          %v3438 = vpack.c.b16 %v3134, %v3130
          %v3439 = vpack.c.b16 %v3139, %v3135
          %v3440 = vpack.c.b16 %v3140, %v3136
          %v3441 = vpack.c.b16 %v3141, %v3137
          %v3442 = vpack.c.b16 %v3142, %v3138
          %v3443 = vpack.c.b16 %v3147, %v3143
          %v3444 = vpack.c.b16 %v3148, %v3144
          %v3445 = vpack.c.b16 %v3149, %v3145
          %v3446 = vpack.c.b16 %v3150, %v3146
          %v3447 = vpack.c.b16 %v3155, %v3151
          %v3448 = vpack.c.b16 %v3156, %v3152
          %v3449 = vpack.c.b16 %v3157, %v3153
          %v3450 = vpack.c.b16 %v3158, %v3154
          %v3451 = vpack.c.b16 %v3163, %v3159
          %v3452 = vpack.c.b16 %v3164, %v3160
          %v3453 = vpack.c.b16 %v3165, %v3161
          %v3454 = vpack.c.b16 %v3166, %v3162
          %v3455 = vpack.c.b16 %v3171, %v3167
          %v3456 = vpack.c.b16 %v3172, %v3168
          %v3457 = vpack.c.b16 %v3173, %v3169
          %v3458 = vpack.c.b16 %v3174, %v3170
          %v3459 = vpack.c.b16 %v3179, %v3175
          %v3460 = vpack.c.b16 %v3180, %v3176
          %v3461 = vpack.c.b16 %v3181, %v3177
          %v3462 = vpack.c.b16 %v3182, %v3178
          %v3463 = vpack.c.b16 %v3187, %v3183
          %v3464 = vpack.c.b16 %v3188, %v3184
          %v3465 = vpack.c.b16 %v3189, %v3185
          %v3466 = vpack.c.b16 %v3190, %v3186
          %v3467 = vpack.c.b16 %v3195, %v3191
          %v3468 = vpack.c.b16 %v3196, %v3192
          %v3469 = vpack.c.b16 %v3197, %v3193
          %v3470 = vpack.c.b16 %v3198, %v3194
          %v3471 = vpack.c.b16 %v3203, %v3199
          %v3472 = vpack.c.b16 %v3204, %v3200
          %v3473 = vpack.c.b16 %v3205, %v3201
          %v3474 = vpack.c.b16 %v3206, %v3202
          %v3475 = vpack.c.b16 %v3211, %v3207
          %v3476 = vpack.c.b16 %v3212, %v3208
          %v3477 = vpack.c.b16 %v3213, %v3209
          %v3478 = vpack.c.b16 %v3214, %v3210
          %v3479 = vpack.c.b16 %v3219, %v3215
          %v3480 = vpack.c.b16 %v3220, %v3216
          %v3481 = vpack.c.b16 %v3221, %v3217
          %v3482 = vpack.c.b16 %v3222, %v3218
          %v3483 = vpack.c.b16 %v3227, %v3223
          %v3484 = vpack.c.b16 %v3228, %v3224
          %v3485 = vpack.c.b16 %v3229, %v3225
          %v3486 = vpack.c.b16 %v3230, %v3226
          %v3744 = vlaneseq
          %v3745 = vshrl.u32 %v3744, 7
          %v3746 = vsub.s32 0, %v3745
          %v3747 = vrot.slane %v2462, %v3746
          %v3748 = vlaneseq
          %v3749 = vshrl.u32 %v3748, 7
          %v3750 = vsub.s32 1, %v3749
          %v3751 = vrot.slane %v2462, %v3750
          %v3752 = vlaneseq
          %v3753 = vshrl.u32 %v3752, 7
          %v3754 = vsub.s32 2, %v3753
          %v3755 = vrot.slane %v2462, %v3754
          %v3756 = vlaneseq
          %v3757 = vshrl.u32 %v3756, 7
          %v3758 = vsub.s32 3, %v3757
          %v3759 = vrot.slane %v2462, %v3758
          %3764 = vmatprep.subr.bf16.mxu0 %v3260
          %3765 = vmatpush1.bf16.msra.mxu0 %v3259
          %3766 = vmatprep.subr.bf16.mxu0 %v3256
          %3767 = vmatpush1.bf16.msra.mxu0 %v3255
          %3768 = vmatprep.subr.bf16.mxu0 %v3252
          %3769 = vmatpush1.bf16.msra.mxu0 %v3251
          %3770 = vmatprep.subr.bf16.mxu0 %v3248
          %3771 = vmatpush1.bf16.msra.mxu0 %v3247
          %3772 = vmatprep.subr.bf16.mxu0 %v3244
          %3773 = vmatpush1.bf16.msra.mxu0 %v3243
          %3774 = vmatprep.subr.bf16.mxu0 %v3240
          %3775 = vmatpush1.bf16.msra.mxu0 %v3239
          %3776 = vmatprep.subr.bf16.mxu0 %v3236
          %3777 = vmatpush1.bf16.msra.mxu0 %v3235
          %3778 = vmatprep.subr.bf16.mxu0 %v3232
          %3779 = vmatpush1.bf16.msra.mxu0 %v3231
          %3780 = vmatprep.subr.bf16.mxu0 %v3292
          %3781 = vmatpush2.bf16.msra.mxu0 %v3291
          %3782 = vmatprep.subr.bf16.mxu0 %v3288
          %3783 = vmatpush2.bf16.msra.mxu0 %v3287
          %3784 = vmatprep.subr.bf16.mxu0 %v3284
          %3785 = vmatpush2.bf16.msra.mxu0 %v3283
          %3786 = vmatprep.subr.bf16.mxu0 %v3280
          %3787 = vmatpush2.bf16.msra.mxu0 %v3279
          %3788 = vmatprep.subr.bf16.mxu0 %v3276
          %3789 = vmatpush2.bf16.msra.mxu0 %v3275
          %3790 = vmatprep.subr.bf16.mxu0 %v3272
          %3791 = vmatpush2.bf16.msra.mxu0 %v3271
          %3792 = vmatprep.subr.bf16.mxu0 %v3268
          %3793 = vmatpush2.bf16.msra.mxu0 %v3267
          %3794 = vmatprep.subr.bf16.mxu0 %v3264
          %3795 = vmatpush2.bf16.msra.mxu0 %v3263
          %3796 = vmatprep.mubr.bf16.mxu0 %v2199
          %3797 = vmatmul.mubr.bf16.gmra.mxu0 %v2198
          %v3798 = vpop.f32.mrf.mxu0
          %v3799 = vadd.f32 %v3747, %v3798
          %v3800 = vpop.f32.mrf.mxu0
          %v3801 = vadd.f32 %v3751, %v3800
          %v3802 = vpop.f32.mrf.mxu0
          %v3803 = vpop.f32.mrf.mxu0
          %3804 = vdwg.mxu0
          %3805 = vmatprep.subr.bf16.mxu0 %v3324
          %3806 = vmatpush1.bf16.msra.mxu0 %v3323
          %3807 = vmatprep.subr.bf16.mxu0 %v3320
          %3808 = vmatpush1.bf16.msra.mxu0 %v3319
          %3809 = vmatprep.subr.bf16.mxu0 %v3316
          %3810 = vmatpush1.bf16.msra.mxu0 %v3315
          %3811 = vmatprep.subr.bf16.mxu0 %v3312
          %3812 = vmatpush1.bf16.msra.mxu0 %v3311
          %3813 = vmatprep.subr.bf16.mxu0 %v3308
          %3814 = vmatpush1.bf16.msra.mxu0 %v3307
          %3815 = vmatprep.subr.bf16.mxu0 %v3304
          %3816 = vmatpush1.bf16.msra.mxu0 %v3303
          %3817 = vmatprep.subr.bf16.mxu0 %v3300
          %3818 = vmatpush1.bf16.msra.mxu0 %v3299
          %3819 = vmatprep.subr.bf16.mxu0 %v3296
          %3820 = vmatpush1.bf16.msra.mxu0 %v3295
          %3821 = vmatprep.subr.bf16.mxu0 %v3356
          %3822 = vmatpush2.bf16.msra.mxu0 %v3355
          %3823 = vmatprep.subr.bf16.mxu0 %v3352
          %3824 = vmatpush2.bf16.msra.mxu0 %v3351
          %3825 = vmatprep.subr.bf16.mxu0 %v3348
          %3826 = vmatpush2.bf16.msra.mxu0 %v3347
          %3827 = vmatprep.subr.bf16.mxu0 %v3344
          %3828 = vmatpush2.bf16.msra.mxu0 %v3343
          %3829 = vmatprep.subr.bf16.mxu0 %v3340
          %3830 = vmatpush2.bf16.msra.mxu0 %v3339
          %3831 = vmatprep.subr.bf16.mxu0 %v3336
          %3832 = vmatpush2.bf16.msra.mxu0 %v3335
          %3833 = vmatprep.subr.bf16.mxu0 %v3332
          %3834 = vmatpush2.bf16.msra.mxu0 %v3331
          %3835 = vmatprep.subr.bf16.mxu0 %v3328
          %3836 = vmatpush2.bf16.msra.mxu0 %v3327
          %3837 = vmatprep.mubr.bf16.mxu0 %v2201
          %3838 = vmatmul.mubr.bf16.gmra.mxu0 %v2200
          %v3839 = vpop.f32.mrf.mxu0
          %v3840 = vadd.f32 %v3799, %v3839
          %v3841 = vpop.f32.mrf.mxu0
          %v3842 = vadd.f32 %v3801, %v3841
          %v3843 = vpop.f32.mrf.mxu0
          %v3844 = vpop.f32.mrf.mxu0
          %3845 = vdwg.mxu0
          %3846 = vmatprep.subr.bf16.mxu0 %v3388
          %3847 = vmatpush1.bf16.msra.mxu0 %v3387
          %3848 = vmatprep.subr.bf16.mxu0 %v3384
          %3849 = vmatpush1.bf16.msra.mxu0 %v3383
          %3850 = vmatprep.subr.bf16.mxu0 %v3380
          %3851 = vmatpush1.bf16.msra.mxu0 %v3379
          %3852 = vmatprep.subr.bf16.mxu0 %v3376
          %3853 = vmatpush1.bf16.msra.mxu0 %v3375
          %3854 = vmatprep.subr.bf16.mxu0 %v3372
          %3855 = vmatpush1.bf16.msra.mxu0 %v3371
          %3856 = vmatprep.subr.bf16.mxu0 %v3368
          %3857 = vmatpush1.bf16.msra.mxu0 %v3367
          %3858 = vmatprep.subr.bf16.mxu0 %v3364
          %3859 = vmatpush1.bf16.msra.mxu0 %v3363
          %3860 = vmatprep.subr.bf16.mxu0 %v3360
          %3861 = vmatpush1.bf16.msra.mxu0 %v3359
          %3862 = vmatprep.subr.bf16.mxu0 %v3420
          %3863 = vmatpush2.bf16.msra.mxu0 %v3419
          %3864 = vmatprep.subr.bf16.mxu0 %v3416
          %3865 = vmatpush2.bf16.msra.mxu0 %v3415
          %3866 = vmatprep.subr.bf16.mxu0 %v3412
          %3867 = vmatpush2.bf16.msra.mxu0 %v3411
          %3868 = vmatprep.subr.bf16.mxu0 %v3408
          %3869 = vmatpush2.bf16.msra.mxu0 %v3407
          %3870 = vmatprep.subr.bf16.mxu0 %v3404
          %3871 = vmatpush2.bf16.msra.mxu0 %v3403
          %3872 = vmatprep.subr.bf16.mxu0 %v3400
          %3873 = vmatpush2.bf16.msra.mxu0 %v3399
          %3874 = vmatprep.subr.bf16.mxu0 %v3396
          %3875 = vmatpush2.bf16.msra.mxu0 %v3395
          %3876 = vmatprep.subr.bf16.mxu0 %v3392
          %3877 = vmatpush2.bf16.msra.mxu0 %v3391
          %3878 = vmatprep.mubr.bf16.mxu0 %v2203
          %3879 = vmatmul.mubr.bf16.gmra.mxu0 %v2202
          %v3880 = vpop.f32.mrf.mxu0
          %v3881 = vadd.f32 %v3840, %v3880
          %v3882 = vpop.f32.mrf.mxu0
          %v3883 = vadd.f32 %v3842, %v3882
          %v3884 = vpop.f32.mrf.mxu0
          %v3885 = vpop.f32.mrf.mxu0
          %3886 = vdwg.mxu0
          %3887 = vmatprep.subr.bf16.mxu0 %v3452
          %3888 = vmatpush1.bf16.msra.mxu0 %v3451
          %3889 = vmatprep.subr.bf16.mxu0 %v3448
          %3890 = vmatpush1.bf16.msra.mxu0 %v3447
          %3891 = vmatprep.subr.bf16.mxu0 %v3444
          %3892 = vmatpush1.bf16.msra.mxu0 %v3443
          %3893 = vmatprep.subr.bf16.mxu0 %v3440
          %3894 = vmatpush1.bf16.msra.mxu0 %v3439
          %3895 = vmatprep.subr.bf16.mxu0 %v3436
          %3896 = vmatpush1.bf16.msra.mxu0 %v3435
          %3897 = vmatprep.subr.bf16.mxu0 %v3432
          %3898 = vmatpush1.bf16.msra.mxu0 %v3431
          %3899 = vmatprep.subr.bf16.mxu0 %v3428
          %3900 = vmatpush1.bf16.msra.mxu0 %v3427
          %3901 = vmatprep.subr.bf16.mxu0 %v3424
          %3902 = vmatpush1.bf16.msra.mxu0 %v3423
          %3903 = vmatprep.subr.bf16.mxu0 %v3484
          %3904 = vmatpush2.bf16.msra.mxu0 %v3483
          %3905 = vmatprep.subr.bf16.mxu0 %v3480
          %3906 = vmatpush2.bf16.msra.mxu0 %v3479
          %3907 = vmatprep.subr.bf16.mxu0 %v3476
          %3908 = vmatpush2.bf16.msra.mxu0 %v3475
          %3909 = vmatprep.subr.bf16.mxu0 %v3472
          %3910 = vmatpush2.bf16.msra.mxu0 %v3471
          %3911 = vmatprep.subr.bf16.mxu0 %v3468
          %3912 = vmatpush2.bf16.msra.mxu0 %v3467
          %3913 = vmatprep.subr.bf16.mxu0 %v3464
          %3914 = vmatpush2.bf16.msra.mxu0 %v3463
          %3915 = vmatprep.subr.bf16.mxu0 %v3460
          %3916 = vmatpush2.bf16.msra.mxu0 %v3459
          %3917 = vmatprep.subr.bf16.mxu0 %v3456
          %3918 = vmatpush2.bf16.msra.mxu0 %v3455
          %3919 = vmatprep.mubr.bf16.mxu0 %v2205
          %3920 = vmatmul.mubr.bf16.gmra.mxu0 %v2204
          %v3921 = vpop.f32.mrf.mxu0
          %v3922 = vadd.f32 %v3881, %v3921
          %v3923 = vpop.f32.mrf.mxu0
          %v3924 = vadd.f32 %v3883, %v3923
          %v3925 = vpop.f32.mrf.mxu0
          %v3926 = vpop.f32.mrf.mxu0
          %3927 = vdwg.mxu0
          %3928 = vmatprep.subr.bf16.mxu0 %v3262
          %3929 = vmatpush1.bf16.msra.mxu0 %v3261
          %3930 = vmatprep.subr.bf16.mxu0 %v3258
          %3931 = vmatpush1.bf16.msra.mxu0 %v3257
          %3932 = vmatprep.subr.bf16.mxu0 %v3254
          %3933 = vmatpush1.bf16.msra.mxu0 %v3253
          %3934 = vmatprep.subr.bf16.mxu0 %v3250
          %3935 = vmatpush1.bf16.msra.mxu0 %v3249
          %3936 = vmatprep.subr.bf16.mxu0 %v3246
          %3937 = vmatpush1.bf16.msra.mxu0 %v3245
          %3938 = vmatprep.subr.bf16.mxu0 %v3242
          %3939 = vmatpush1.bf16.msra.mxu0 %v3241
          %3940 = vmatprep.subr.bf16.mxu0 %v3238
          %3941 = vmatpush1.bf16.msra.mxu0 %v3237
          %3942 = vmatprep.subr.bf16.mxu0 %v3234
          %3943 = vmatpush1.bf16.msra.mxu0 %v3233
          %3944 = vmatprep.subr.bf16.mxu0 %v3294
          %3945 = vmatpush2.bf16.msra.mxu0 %v3293
          %3946 = vmatprep.subr.bf16.mxu0 %v3290
          %3947 = vmatpush2.bf16.msra.mxu0 %v3289
          %3948 = vmatprep.subr.bf16.mxu0 %v3286
          %3949 = vmatpush2.bf16.msra.mxu0 %v3285
          %3950 = vmatprep.subr.bf16.mxu0 %v3282
          %3951 = vmatpush2.bf16.msra.mxu0 %v3281
          %3952 = vmatprep.subr.bf16.mxu0 %v3278
          %3953 = vmatpush2.bf16.msra.mxu0 %v3277
          %3954 = vmatprep.subr.bf16.mxu0 %v3274
          %3955 = vmatpush2.bf16.msra.mxu0 %v3273
          %3956 = vmatprep.subr.bf16.mxu0 %v3270
          %3957 = vmatpush2.bf16.msra.mxu0 %v3269
          %3958 = vmatprep.subr.bf16.mxu0 %v3266
          %3959 = vmatpush2.bf16.msra.mxu0 %v3265
          %3960 = vmatprep.mubr.bf16.mxu0 %v2199
          %3961 = vmatmul.mubr.bf16.gmra.mxu0 %v2198
          %v3962 = vpop.f32.mrf.mxu0
          %v3963 = vadd.f32 %v3755, %v3962
          %v3964 = vpop.f32.mrf.mxu0
          %v3965 = vadd.f32 %v3759, %v3964
          %v3966 = vpop.f32.mrf.mxu0
          %v3967 = vpop.f32.mrf.mxu0
          %3968 = vdwg.mxu0
          %3969 = vmatprep.subr.bf16.mxu0 %v3326
          %3970 = vmatpush1.bf16.msra.mxu0 %v3325
          %3971 = vmatprep.subr.bf16.mxu0 %v3322
          %3972 = vmatpush1.bf16.msra.mxu0 %v3321
          %3973 = vmatprep.subr.bf16.mxu0 %v3318
          %3974 = vmatpush1.bf16.msra.mxu0 %v3317
          %3975 = vmatprep.subr.bf16.mxu0 %v3314
          %3976 = vmatpush1.bf16.msra.mxu0 %v3313
          %3977 = vmatprep.subr.bf16.mxu0 %v3310
          %3978 = vmatpush1.bf16.msra.mxu0 %v3309
          %3979 = vmatprep.subr.bf16.mxu0 %v3306
          %3980 = vmatpush1.bf16.msra.mxu0 %v3305
          %3981 = vmatprep.subr.bf16.mxu0 %v3302
          %3982 = vmatpush1.bf16.msra.mxu0 %v3301
          %3983 = vmatprep.subr.bf16.mxu0 %v3298
          %3984 = vmatpush1.bf16.msra.mxu0 %v3297
          %3985 = vmatprep.subr.bf16.mxu0 %v3358
          %3986 = vmatpush2.bf16.msra.mxu0 %v3357
          %3987 = vmatprep.subr.bf16.mxu0 %v3354
          %3988 = vmatpush2.bf16.msra.mxu0 %v3353
          %3989 = vmatprep.subr.bf16.mxu0 %v3350
          %3990 = vmatpush2.bf16.msra.mxu0 %v3349
          %3991 = vmatprep.subr.bf16.mxu0 %v3346
          %3992 = vmatpush2.bf16.msra.mxu0 %v3345
          %3993 = vmatprep.subr.bf16.mxu0 %v3342
          %3994 = vmatpush2.bf16.msra.mxu0 %v3341
          %3995 = vmatprep.subr.bf16.mxu0 %v3338
          %3996 = vmatpush2.bf16.msra.mxu0 %v3337
          %3997 = vmatprep.subr.bf16.mxu0 %v3334
          %3998 = vmatpush2.bf16.msra.mxu0 %v3333
          %3999 = vmatprep.subr.bf16.mxu0 %v3330
          %4000 = vmatpush2.bf16.msra.mxu0 %v3329
          %4001 = vmatprep.mubr.bf16.mxu0 %v2201
          %4002 = vmatmul.mubr.bf16.gmra.mxu0 %v2200
          %v4003 = vpop.f32.mrf.mxu0
          %v4004 = vadd.f32 %v3963, %v4003
          %v4005 = vpop.f32.mrf.mxu0
          %v4006 = vadd.f32 %v3965, %v4005
          %v4007 = vpop.f32.mrf.mxu0
          %v4008 = vpop.f32.mrf.mxu0
          %4009 = vdwg.mxu0
          %4010 = vmatprep.subr.bf16.mxu0 %v3390
          %4011 = vmatpush1.bf16.msra.mxu0 %v3389
          %4012 = vmatprep.subr.bf16.mxu0 %v3386
          %4013 = vmatpush1.bf16.msra.mxu0 %v3385
          %4014 = vmatprep.subr.bf16.mxu0 %v3382
          %4015 = vmatpush1.bf16.msra.mxu0 %v3381
          %4016 = vmatprep.subr.bf16.mxu0 %v3378
          %4017 = vmatpush1.bf16.msra.mxu0 %v3377
          %4018 = vmatprep.subr.bf16.mxu0 %v3374
          %4019 = vmatpush1.bf16.msra.mxu0 %v3373
          %4020 = vmatprep.subr.bf16.mxu0 %v3370
          %4021 = vmatpush1.bf16.msra.mxu0 %v3369
          %4022 = vmatprep.subr.bf16.mxu0 %v3366
          %4023 = vmatpush1.bf16.msra.mxu0 %v3365
          %4024 = vmatprep.subr.bf16.mxu0 %v3362
          %4025 = vmatpush1.bf16.msra.mxu0 %v3361
          %4026 = vmatprep.subr.bf16.mxu0 %v3422
          %4027 = vmatpush2.bf16.msra.mxu0 %v3421
          %4028 = vmatprep.subr.bf16.mxu0 %v3418
          %4029 = vmatpush2.bf16.msra.mxu0 %v3417
          %4030 = vmatprep.subr.bf16.mxu0 %v3414
          %4031 = vmatpush2.bf16.msra.mxu0 %v3413
          %4032 = vmatprep.subr.bf16.mxu0 %v3410
          %4033 = vmatpush2.bf16.msra.mxu0 %v3409
          %4034 = vmatprep.subr.bf16.mxu0 %v3406
          %4035 = vmatpush2.bf16.msra.mxu0 %v3405
          %4036 = vmatprep.subr.bf16.mxu0 %v3402
          %4037 = vmatpush2.bf16.msra.mxu0 %v3401
          %4038 = vmatprep.subr.bf16.mxu0 %v3398
          %4039 = vmatpush2.bf16.msra.mxu0 %v3397
          %4040 = vmatprep.subr.bf16.mxu0 %v3394
          %4041 = vmatpush2.bf16.msra.mxu0 %v3393
          %4042 = vmatprep.mubr.bf16.mxu0 %v2203
          %4043 = vmatmul.mubr.bf16.gmra.mxu0 %v2202
          %v4044 = vpop.f32.mrf.mxu0
          %v4045 = vadd.f32 %v4004, %v4044
          %v4046 = vpop.f32.mrf.mxu0
          %v4047 = vadd.f32 %v4006, %v4046
          %v4048 = vpop.f32.mrf.mxu0
          %v4049 = vpop.f32.mrf.mxu0
          %4050 = vdwg.mxu0
          %4051 = vmatprep.subr.bf16.mxu0 %v3454
          %4052 = vmatpush1.bf16.msra.mxu0 %v3453
          %4053 = vmatprep.subr.bf16.mxu0 %v3450
          %4054 = vmatpush1.bf16.msra.mxu0 %v3449
          %4055 = vmatprep.subr.bf16.mxu0 %v3446
          %4056 = vmatpush1.bf16.msra.mxu0 %v3445
          %4057 = vmatprep.subr.bf16.mxu0 %v3442
          %4058 = vmatpush1.bf16.msra.mxu0 %v3441
          %4059 = vmatprep.subr.bf16.mxu0 %v3438
          %4060 = vmatpush1.bf16.msra.mxu0 %v3437
          %4061 = vmatprep.subr.bf16.mxu0 %v3434
          %4062 = vmatpush1.bf16.msra.mxu0 %v3433
          %4063 = vmatprep.subr.bf16.mxu0 %v3430
          %4064 = vmatpush1.bf16.msra.mxu0 %v3429
          %4065 = vmatprep.subr.bf16.mxu0 %v3426
          %4066 = vmatpush1.bf16.msra.mxu0 %v3425
          %4067 = vmatprep.subr.bf16.mxu0 %v3486
          %4068 = vmatpush2.bf16.msra.mxu0 %v3485
          %4069 = vmatprep.subr.bf16.mxu0 %v3482
          %4070 = vmatpush2.bf16.msra.mxu0 %v3481
          %4071 = vmatprep.subr.bf16.mxu0 %v3478
          %4072 = vmatpush2.bf16.msra.mxu0 %v3477
          %4073 = vmatprep.subr.bf16.mxu0 %v3474
          %4074 = vmatpush2.bf16.msra.mxu0 %v3473
          %4075 = vmatprep.subr.bf16.mxu0 %v3470
          %4076 = vmatpush2.bf16.msra.mxu0 %v3469
          %4077 = vmatprep.subr.bf16.mxu0 %v3466
          %4078 = vmatpush2.bf16.msra.mxu0 %v3465
          %4079 = vmatprep.subr.bf16.mxu0 %v3462
          %4080 = vmatpush2.bf16.msra.mxu0 %v3461
          %4081 = vmatprep.subr.bf16.mxu0 %v3458
          %4082 = vmatpush2.bf16.msra.mxu0 %v3457
          %4083 = vmatprep.mubr.bf16.mxu0 %v2205
          %4084 = vmatmul.mubr.bf16.gmra.mxu0 %v2204
          %v4085 = vpop.f32.mrf.mxu0
          %v4086 = vadd.f32 %v4045, %v4085
          %v4087 = vpop.f32.mrf.mxu0
          %v4088 = vadd.f32 %v4047, %v4087
          %v4089 = vpop.f32.mrf.mxu0
          %v4090 = vpop.f32.mrf.mxu0
          %4091 = vdwg.mxu0
          %v4092 = vmax.f32 %v3922, 0.0
          %v4093 = vmax.f32 %v3924, 0.0
          %v4094 = vmax.f32 %v4086, 0.0
          %v4095 = vmax.f32 %v4088, 0.0
          %v4096 = vpack.c.bf16 %v4092, %v4092
          %v4097 = vpack.c.bf16 %v4093, %v4093
          %v4098 = vpack.c.bf16 %v4094, %v4094
          %v4099 = vpack.c.bf16 %v4095, %v4095
          %v4100 = vld [vmem:[#allocation8] sm:$0xff]
          %v4101 = vld [vmem:[#allocation8 + $0x8] sm:$0xff]
          %v4102 = vld [vmem:[#allocation8 + $0x10] sm:$0xff]
          %v4103 = vld [vmem:[#allocation8 + $0x18] sm:$0xff]
          %v4104 = vld [vmem:[#allocation8 + $0x20] sm:$0xff]
          %v4105 = vld [vmem:[#allocation8 + $0x28] sm:$0xff]
          %v4106 = vld [vmem:[#allocation8 + $0x30] sm:$0xff]
          %v4107 = vld [vmem:[#allocation8 + $0x38] sm:$0xff]
          %v4108 = vld [vmem:[#allocation8 + $0x40] sm:$0xff]
          %v4109 = vld [vmem:[#allocation8 + $0x48] sm:$0xff]
          %v4110 = vld [vmem:[#allocation8 + $0x50] sm:$0xff]
          %v4111 = vld [vmem:[#allocation8 + $0x58] sm:$0xff]
          %v4112 = vld [vmem:[#allocation8 + $0x60] sm:$0xff]
          %v4113 = vld [vmem:[#allocation8 + $0x68] sm:$0xff]
          %v4114 = vld [vmem:[#allocation8 + $0x70] sm:$0xff]
          %v4115 = vld [vmem:[#allocation8 + $0x78] sm:$0xff]
          %v4116 = vld [vmem:[#allocation8 + $0x80] sm:$0xff]
          %v4117 = vld [vmem:[#allocation8 + $0x88] sm:$0xff]
          %v4118 = vld [vmem:[#allocation8 + $0x90] sm:$0xff]
          %v4119 = vld [vmem:[#allocation8 + $0x98] sm:$0xff]
          %v4120 = vld [vmem:[#allocation8 + $0xa0] sm:$0xff]
          %v4121 = vld [vmem:[#allocation8 + $0xa8] sm:$0xff]
          %v4122 = vld [vmem:[#allocation8 + $0xb0] sm:$0xff]
          %v4123 = vld [vmem:[#allocation8 + $0xb8] sm:$0xff]
          %v4124 = vld [vmem:[#allocation8 + $0xc0] sm:$0xff]
          %v4125 = vld [vmem:[#allocation8 + $0xc8] sm:$0xff]
          %v4126 = vld [vmem:[#allocation8 + $0xd0] sm:$0xff]
          %v4127 = vld [vmem:[#allocation8 + $0xd8] sm:$0xff]
          %v4128 = vld [vmem:[#allocation8 + $0xe0] sm:$0xff]
          %v4129 = vld [vmem:[#allocation8 + $0xe8] sm:$0xff]
          %v4130 = vld [vmem:[#allocation8 + $0xf0] sm:$0xff]
          %v4131 = vld [vmem:[#allocation8 + $0xf8] sm:$0xff]
          %v4132 = vld [vmem:[#allocation8 + $0x100] sm:$0xff]
          %v4133 = vld [vmem:[#allocation8 + $0x108] sm:$0xff]
          %v4134 = vld [vmem:[#allocation8 + $0x110] sm:$0xff]
          %v4135 = vld [vmem:[#allocation8 + $0x118] sm:$0xff]
          %v4136 = vld [vmem:[#allocation8 + $0x120] sm:$0xff]
          %v4137 = vld [vmem:[#allocation8 + $0x128] sm:$0xff]
          %v4138 = vld [vmem:[#allocation8 + $0x130] sm:$0xff]
          %v4139 = vld [vmem:[#allocation8 + $0x138] sm:$0xff]
          %v4140 = vld [vmem:[#allocation8 + $0x140] sm:$0xff]
          %v4141 = vld [vmem:[#allocation8 + $0x148] sm:$0xff]
          %v4142 = vld [vmem:[#allocation8 + $0x150] sm:$0xff]
          %v4143 = vld [vmem:[#allocation8 + $0x158] sm:$0xff]
          %v4144 = vld [vmem:[#allocation8 + $0x160] sm:$0xff]
          %v4145 = vld [vmem:[#allocation8 + $0x168] sm:$0xff]
          %v4146 = vld [vmem:[#allocation8 + $0x170] sm:$0xff]
          %v4147 = vld [vmem:[#allocation8 + $0x178] sm:$0xff]
          %v4148 = vld [vmem:[#allocation8 + $0x180] sm:$0xff]
          %v4149 = vld [vmem:[#allocation8 + $0x188] sm:$0xff]
          %v4150 = vld [vmem:[#allocation8 + $0x190] sm:$0xff]
          %v4151 = vld [vmem:[#allocation8 + $0x198] sm:$0xff]
          %v4152 = vld [vmem:[#allocation8 + $0x1a0] sm:$0xff]
          %v4153 = vld [vmem:[#allocation8 + $0x1a8] sm:$0xff]
          %v4154 = vld [vmem:[#allocation8 + $0x1b0] sm:$0xff]
          %v4155 = vld [vmem:[#allocation8 + $0x1b8] sm:$0xff]
          %v4156 = vld [vmem:[#allocation8 + $0x1c0] sm:$0xff]
          %v4157 = vld [vmem:[#allocation8 + $0x1c8] sm:$0xff]
          %v4158 = vld [vmem:[#allocation8 + $0x1d0] sm:$0xff]
          %v4159 = vld [vmem:[#allocation8 + $0x1d8] sm:$0xff]
          %v4160 = vld [vmem:[#allocation8 + $0x1e0] sm:$0xff]
          %v4161 = vld [vmem:[#allocation8 + $0x1e8] sm:$0xff]
          %v4162 = vld [vmem:[#allocation8 + $0x1f0] sm:$0xff]
          %v4163 = vld [vmem:[#allocation8 + $0x1f8] sm:$0xff]
          %v4164 = vld [vmem:[%s10] sm:$0x3]
          %v4229 = vunpack.c.l.b16 %v4100
          %v4230 = vunpack.c.h.b16 %v4100
          %v4231 = vunpack.c.l.b16 %v4101
          %v4232 = vunpack.c.h.b16 %v4101
          %v4233 = vunpack.c.l.b16 %v4102
          %v4234 = vunpack.c.h.b16 %v4102
          %v4235 = vunpack.c.l.b16 %v4103
          %v4236 = vunpack.c.h.b16 %v4103
          %v4237 = vunpack.c.l.b16 %v4104
          %v4238 = vunpack.c.h.b16 %v4104
          %v4239 = vunpack.c.l.b16 %v4105
          %v4240 = vunpack.c.h.b16 %v4105
          %v4241 = vunpack.c.l.b16 %v4106
          %v4242 = vunpack.c.h.b16 %v4106
          %v4243 = vunpack.c.l.b16 %v4107
          %v4244 = vunpack.c.h.b16 %v4107
          %v4245 = vunpack.c.l.b16 %v4108
          %v4246 = vunpack.c.h.b16 %v4108
          %v4247 = vunpack.c.l.b16 %v4109
          %v4248 = vunpack.c.h.b16 %v4109
          %v4249 = vunpack.c.l.b16 %v4110
          %v4250 = vunpack.c.h.b16 %v4110
          %v4251 = vunpack.c.l.b16 %v4111
          %v4252 = vunpack.c.h.b16 %v4111
          %v4253 = vunpack.c.l.b16 %v4112
          %v4254 = vunpack.c.h.b16 %v4112
          %v4255 = vunpack.c.l.b16 %v4113
          %v4256 = vunpack.c.h.b16 %v4113
          %v4257 = vunpack.c.l.b16 %v4114
          %v4258 = vunpack.c.h.b16 %v4114
          %v4259 = vunpack.c.l.b16 %v4115
          %v4260 = vunpack.c.h.b16 %v4115
          %v4261 = vunpack.c.l.b16 %v4116
          %v4262 = vunpack.c.h.b16 %v4116
          %v4263 = vunpack.c.l.b16 %v4117
          %v4264 = vunpack.c.h.b16 %v4117
          %v4265 = vunpack.c.l.b16 %v4118
          %v4266 = vunpack.c.h.b16 %v4118
          %v4267 = vunpack.c.l.b16 %v4119
          %v4268 = vunpack.c.h.b16 %v4119
          %v4269 = vunpack.c.l.b16 %v4120
          %v4270 = vunpack.c.h.b16 %v4120
          %v4271 = vunpack.c.l.b16 %v4121
          %v4272 = vunpack.c.h.b16 %v4121
          %v4273 = vunpack.c.l.b16 %v4122
          %v4274 = vunpack.c.h.b16 %v4122
          %v4275 = vunpack.c.l.b16 %v4123
          %v4276 = vunpack.c.h.b16 %v4123
          %v4277 = vunpack.c.l.b16 %v4124
          %v4278 = vunpack.c.h.b16 %v4124
          %v4279 = vunpack.c.l.b16 %v4125
          %v4280 = vunpack.c.h.b16 %v4125
          %v4281 = vunpack.c.l.b16 %v4126
          %v4282 = vunpack.c.h.b16 %v4126
          %v4283 = vunpack.c.l.b16 %v4127
          %v4284 = vunpack.c.h.b16 %v4127
          %v4285 = vunpack.c.l.b16 %v4128
          %v4286 = vunpack.c.h.b16 %v4128
          %v4287 = vunpack.c.l.b16 %v4129
          %v4288 = vunpack.c.h.b16 %v4129
          %v4289 = vunpack.c.l.b16 %v4130
          %v4290 = vunpack.c.h.b16 %v4130
          %v4291 = vunpack.c.l.b16 %v4131
          %v4292 = vunpack.c.h.b16 %v4131
          %v4293 = vunpack.c.l.b16 %v4132
          %v4294 = vunpack.c.h.b16 %v4132
          %v4295 = vunpack.c.l.b16 %v4133
          %v4296 = vunpack.c.h.b16 %v4133
          %v4297 = vunpack.c.l.b16 %v4134
          %v4298 = vunpack.c.h.b16 %v4134
          %v4299 = vunpack.c.l.b16 %v4135
          %v4300 = vunpack.c.h.b16 %v4135
          %v4301 = vunpack.c.l.b16 %v4136
          %v4302 = vunpack.c.h.b16 %v4136
          %v4303 = vunpack.c.l.b16 %v4137
          %v4304 = vunpack.c.h.b16 %v4137
          %v4305 = vunpack.c.l.b16 %v4138
          %v4306 = vunpack.c.h.b16 %v4138
          %v4307 = vunpack.c.l.b16 %v4139
          %v4308 = vunpack.c.h.b16 %v4139
          %v4309 = vunpack.c.l.b16 %v4140
          %v4310 = vunpack.c.h.b16 %v4140
          %v4311 = vunpack.c.l.b16 %v4141
          %v4312 = vunpack.c.h.b16 %v4141
          %v4313 = vunpack.c.l.b16 %v4142
          %v4314 = vunpack.c.h.b16 %v4142
          %v4315 = vunpack.c.l.b16 %v4143
          %v4316 = vunpack.c.h.b16 %v4143
          %v4317 = vunpack.c.l.b16 %v4144
          %v4318 = vunpack.c.h.b16 %v4144
          %v4319 = vunpack.c.l.b16 %v4145
          %v4320 = vunpack.c.h.b16 %v4145
          %v4321 = vunpack.c.l.b16 %v4146
          %v4322 = vunpack.c.h.b16 %v4146
          %v4323 = vunpack.c.l.b16 %v4147
          %v4324 = vunpack.c.h.b16 %v4147
          %v4325 = vunpack.c.l.b16 %v4148
          %v4326 = vunpack.c.h.b16 %v4148
          %v4327 = vunpack.c.l.b16 %v4149
          %v4328 = vunpack.c.h.b16 %v4149
          %v4329 = vunpack.c.l.b16 %v4150
          %v4330 = vunpack.c.h.b16 %v4150
          %v4331 = vunpack.c.l.b16 %v4151
          %v4332 = vunpack.c.h.b16 %v4151
          %v4333 = vunpack.c.l.b16 %v4152
          %v4334 = vunpack.c.h.b16 %v4152
          %v4335 = vunpack.c.l.b16 %v4153
          %v4336 = vunpack.c.h.b16 %v4153
          %v4337 = vunpack.c.l.b16 %v4154
          %v4338 = vunpack.c.h.b16 %v4154
          %v4339 = vunpack.c.l.b16 %v4155
          %v4340 = vunpack.c.h.b16 %v4155
          %v4341 = vunpack.c.l.b16 %v4156
          %v4342 = vunpack.c.h.b16 %v4156
          %v4343 = vunpack.c.l.b16 %v4157
          %v4344 = vunpack.c.h.b16 %v4157
          %v4345 = vunpack.c.l.b16 %v4158
          %v4346 = vunpack.c.h.b16 %v4158
          %v4347 = vunpack.c.l.b16 %v4159
          %v4348 = vunpack.c.h.b16 %v4159
          %v4349 = vunpack.c.l.b16 %v4160
          %v4350 = vunpack.c.h.b16 %v4160
          %v4351 = vunpack.c.l.b16 %v4161
          %v4352 = vunpack.c.h.b16 %v4161
          %v4353 = vunpack.c.l.b16 %v4162
          %v4354 = vunpack.c.h.b16 %v4162
          %v4355 = vunpack.c.l.b16 %v4163
          %v4356 = vunpack.c.h.b16 %v4163
          %v4357 = vpack.c.b16 %v4231, %v4229
          %v4358 = vpack.c.b16 %v4232, %v4230
          %v4359 = vpack.c.b16 %v4235, %v4233
          %v4360 = vpack.c.b16 %v4236, %v4234
          %v4361 = vpack.c.b16 %v4239, %v4237
          %v4362 = vpack.c.b16 %v4240, %v4238
          %v4363 = vpack.c.b16 %v4243, %v4241
          %v4364 = vpack.c.b16 %v4244, %v4242
          %v4365 = vpack.c.b16 %v4247, %v4245
          %v4366 = vpack.c.b16 %v4248, %v4246
          %v4367 = vpack.c.b16 %v4251, %v4249
          %v4368 = vpack.c.b16 %v4252, %v4250
          %v4369 = vpack.c.b16 %v4255, %v4253
          %v4370 = vpack.c.b16 %v4256, %v4254
          %v4371 = vpack.c.b16 %v4259, %v4257
          %v4372 = vpack.c.b16 %v4260, %v4258
          %v4373 = vpack.c.b16 %v4263, %v4261
          %v4374 = vpack.c.b16 %v4264, %v4262
          %v4375 = vpack.c.b16 %v4267, %v4265
          %v4376 = vpack.c.b16 %v4268, %v4266
          %v4377 = vpack.c.b16 %v4271, %v4269
          %v4378 = vpack.c.b16 %v4272, %v4270
          %v4379 = vpack.c.b16 %v4275, %v4273
          %v4380 = vpack.c.b16 %v4276, %v4274
          %v4381 = vpack.c.b16 %v4279, %v4277
          %v4382 = vpack.c.b16 %v4280, %v4278
          %v4383 = vpack.c.b16 %v4283, %v4281
          %v4384 = vpack.c.b16 %v4284, %v4282
          %v4385 = vpack.c.b16 %v4287, %v4285
          %v4386 = vpack.c.b16 %v4288, %v4286
          %v4387 = vpack.c.b16 %v4291, %v4289
          %v4388 = vpack.c.b16 %v4292, %v4290
          %v4389 = vpack.c.b16 %v4295, %v4293
          %v4390 = vpack.c.b16 %v4296, %v4294
          %v4391 = vpack.c.b16 %v4299, %v4297
          %v4392 = vpack.c.b16 %v4300, %v4298
          %v4393 = vpack.c.b16 %v4303, %v4301
          %v4394 = vpack.c.b16 %v4304, %v4302
          %v4395 = vpack.c.b16 %v4307, %v4305
          %v4396 = vpack.c.b16 %v4308, %v4306
          %v4397 = vpack.c.b16 %v4311, %v4309
          %v4398 = vpack.c.b16 %v4312, %v4310
          %v4399 = vpack.c.b16 %v4315, %v4313
          %v4400 = vpack.c.b16 %v4316, %v4314
          %v4401 = vpack.c.b16 %v4319, %v4317
          %v4402 = vpack.c.b16 %v4320, %v4318
          %v4403 = vpack.c.b16 %v4323, %v4321
          %v4404 = vpack.c.b16 %v4324, %v4322
          %v4405 = vpack.c.b16 %v4327, %v4325
          %v4406 = vpack.c.b16 %v4328, %v4326
          %v4407 = vpack.c.b16 %v4331, %v4329
          %v4408 = vpack.c.b16 %v4332, %v4330
          %v4409 = vpack.c.b16 %v4335, %v4333
          %v4410 = vpack.c.b16 %v4336, %v4334
          %v4411 = vpack.c.b16 %v4339, %v4337
          %v4412 = vpack.c.b16 %v4340, %v4338
          %v4413 = vpack.c.b16 %v4343, %v4341
          %v4414 = vpack.c.b16 %v4344, %v4342
          %v4415 = vpack.c.b16 %v4347, %v4345
          %v4416 = vpack.c.b16 %v4348, %v4346
          %v4417 = vpack.c.b16 %v4351, %v4349
          %v4418 = vpack.c.b16 %v4352, %v4350
          %v4419 = vpack.c.b16 %v4355, %v4353
          %v4420 = vpack.c.b16 %v4356, %v4354
          %v4486 = vlaneseq
          %v4487 = vshrl.u32 %v4486, 7
          %v4488 = vsub.s32 0, %v4487
          %v4489 = vrot.slane %v4164, %v4488
          %v4490 = vlaneseq
          %v4491 = vshrl.u32 %v4490, 7
          %v4492 = vsub.s32 1, %v4491
          %v4493 = vrot.slane %v4164, %v4492
          %4496 = vmatprep.subr.bf16.mxu0 %v4372
          %4497 = vmatpush1.bf16.msra.mxu0 %v4371
          %4498 = vmatprep.subr.bf16.mxu0 %v4370
          %4499 = vmatpush1.bf16.msra.mxu0 %v4369
          %4500 = vmatprep.subr.bf16.mxu0 %v4368
          %4501 = vmatpush1.bf16.msra.mxu0 %v4367
          %4502 = vmatprep.subr.bf16.mxu0 %v4366
          %4503 = vmatpush1.bf16.msra.mxu0 %v4365
          %4504 = vmatprep.subr.bf16.mxu0 %v4364
          %4505 = vmatpush1.bf16.msra.mxu0 %v4363
          %4506 = vmatprep.subr.bf16.mxu0 %v4362
          %4507 = vmatpush1.bf16.msra.mxu0 %v4361
          %4508 = vmatprep.subr.bf16.mxu0 %v4360
          %4509 = vmatpush1.bf16.msra.mxu0 %v4359
          %4510 = vmatprep.subr.bf16.mxu0 %v4358
          %4511 = vmatpush1.bf16.msra.mxu0 %v4357
          %4512 = vmatprep.subr.bf16.mxu0 %v4388
          %4513 = vmatpush2.bf16.msra.mxu0 %v4387
          %4514 = vmatprep.subr.bf16.mxu0 %v4386
          %4515 = vmatpush2.bf16.msra.mxu0 %v4385
          %4516 = vmatprep.subr.bf16.mxu0 %v4384
          %4517 = vmatpush2.bf16.msra.mxu0 %v4383
          %4518 = vmatprep.subr.bf16.mxu0 %v4382
          %4519 = vmatpush2.bf16.msra.mxu0 %v4381
          %4520 = vmatprep.subr.bf16.mxu0 %v4380
          %4521 = vmatpush2.bf16.msra.mxu0 %v4379
          %4522 = vmatprep.subr.bf16.mxu0 %v4378
          %4523 = vmatpush2.bf16.msra.mxu0 %v4377
          %4524 = vmatprep.subr.bf16.mxu0 %v4376
          %4525 = vmatpush2.bf16.msra.mxu0 %v4375
          %4526 = vmatprep.subr.bf16.mxu0 %v4374
          %4527 = vmatpush2.bf16.msra.mxu0 %v4373
          %4528 = vmatprep.mubr.bf16.mxu0 %v4097
          %4529 = vmatmul.mubr.bf16.gmra.mxu0 %v4096
          %v4530 = vpop.f32.mrf.mxu0
          %v4531 = vadd.f32 %v4489, %v4530
          %v4532 = vpop.f32.mrf.mxu0
          %v4533 = vadd.f32 %v4493, %v4532
          %v4534 = vpop.f32.mrf.mxu0
          %v4535 = vpop.f32.mrf.mxu0
          %4536 = vdwg.mxu0
          %4537 = vmatprep.subr.bf16.mxu0 %v4404
          %4538 = vmatpush1.bf16.msra.mxu0 %v4403
          %4539 = vmatprep.subr.bf16.mxu0 %v4402
          %4540 = vmatpush1.bf16.msra.mxu0 %v4401
          %4541 = vmatprep.subr.bf16.mxu0 %v4400
          %4542 = vmatpush1.bf16.msra.mxu0 %v4399
          %4543 = vmatprep.subr.bf16.mxu0 %v4398
          %4544 = vmatpush1.bf16.msra.mxu0 %v4397
          %4545 = vmatprep.subr.bf16.mxu0 %v4396
          %4546 = vmatpush1.bf16.msra.mxu0 %v4395
          %4547 = vmatprep.subr.bf16.mxu0 %v4394
          %4548 = vmatpush1.bf16.msra.mxu0 %v4393
          %4549 = vmatprep.subr.bf16.mxu0 %v4392
          %4550 = vmatpush1.bf16.msra.mxu0 %v4391
          %4551 = vmatprep.subr.bf16.mxu0 %v4390
          %4552 = vmatpush1.bf16.msra.mxu0 %v4389
          %4553 = vmatprep.subr.bf16.mxu0 %v4420
          %4554 = vmatpush2.bf16.msra.mxu0 %v4419
          %4555 = vmatprep.subr.bf16.mxu0 %v4418
          %4556 = vmatpush2.bf16.msra.mxu0 %v4417
          %4557 = vmatprep.subr.bf16.mxu0 %v4416
          %4558 = vmatpush2.bf16.msra.mxu0 %v4415
          %4559 = vmatprep.subr.bf16.mxu0 %v4414
          %4560 = vmatpush2.bf16.msra.mxu0 %v4413
          %4561 = vmatprep.subr.bf16.mxu0 %v4412
          %4562 = vmatpush2.bf16.msra.mxu0 %v4411
          %4563 = vmatprep.subr.bf16.mxu0 %v4410
          %4564 = vmatpush2.bf16.msra.mxu0 %v4409
          %4565 = vmatprep.subr.bf16.mxu0 %v4408
          %4566 = vmatpush2.bf16.msra.mxu0 %v4407
          %4567 = vmatprep.subr.bf16.mxu0 %v4406
          %4568 = vmatpush2.bf16.msra.mxu0 %v4405
          %4569 = vmatprep.mubr.bf16.mxu0 %v4099
          %4570 = vmatmul.mubr.bf16.gmra.mxu0 %v4098
          %v4571 = vpop.f32.mrf.mxu0
          %v4572 = vadd.f32 %v4531, %v4571
          %v4573 = vpop.f32.mrf.mxu0
          %v4574 = vadd.f32 %v4533, %v4573
          %v4575 = vpop.f32.mrf.mxu0
          %v4576 = vpop.f32.mrf.mxu0
          %4577 = vdwg.mxu0
          %v4578 = vmax.f32 %v4572, 0.0
          %v4579 = vmax.f32 %v4574, 0.0
          %v4580 = vpack.c.bf16 %v4578, %v4578
          %v4581 = vpack.c.bf16 %v4579, %v4579
          %v4582 = vld [vmem:[%s11] sm:$0xf]
          %v4583 = vld [vmem:[%s11 + $0x4] sm:$0xf]
          %v4584 = vld [vmem:[%s11 + $0x8] sm:$0xf]
          %v4585 = vld [vmem:[%s11 + $0xc] sm:$0xf]
          %v4586 = vld [vmem:[%s11 + $0x10] sm:$0xf]
          %v4587 = vld [vmem:[%s11 + $0x14] sm:$0xf]
          %v4588 = vld [vmem:[%s11 + $0x18] sm:$0xf]
          %v4589 = vld [vmem:[%s11 + $0x1c] sm:$0xf]
          %v4590 = vld [vmem:[%s11 + $0x20] sm:$0xf]
          %v4591 = vld [vmem:[%s11 + $0x24] sm:$0xf]
          %v4592 = vld [vmem:[%s11 + $0x28] sm:$0xf]
          %v4593 = vld [vmem:[%s11 + $0x2c] sm:$0xf]
          %v4594 = vld [vmem:[%s11 + $0x30] sm:$0xf]
          %v4595 = vld [vmem:[%s11 + $0x34] sm:$0xf]
          %v4596 = vld [vmem:[%s11 + $0x38] sm:$0xf]
          %v4597 = vld [vmem:[%s11 + $0x3c] sm:$0xf]
          %v4598 = vld [vmem:[%s11 + $0x40] sm:$0xf]
          %v4599 = vld [vmem:[%s11 + $0x44] sm:$0xf]
          %v4600 = vld [vmem:[%s11 + $0x48] sm:$0xf]
          %v4601 = vld [vmem:[%s11 + $0x4c] sm:$0xf]
          %v4602 = vld [vmem:[%s11 + $0x50] sm:$0xf]
          %v4603 = vld [vmem:[%s11 + $0x54] sm:$0xf]
          %v4604 = vld [vmem:[%s11 + $0x58] sm:$0xf]
          %v4605 = vld [vmem:[%s11 + $0x5c] sm:$0xf]
          %v4606 = vld [vmem:[%s11 + $0x60] sm:$0xf]
          %v4607 = vld [vmem:[%s11 + $0x64] sm:$0xf]
          %v4608 = vld [vmem:[%s11 + $0x68] sm:$0xf]
          %v4609 = vld [vmem:[%s11 + $0x6c] sm:$0xf]
          %v4610 = vld [vmem:[%s11 + $0x70] sm:$0xf]
          %v4611 = vld [vmem:[%s11 + $0x74] sm:$0xf]
          %v4612 = vld [vmem:[%s11 + $0x78] sm:$0xf]
          %v4613 = vld [vmem:[%s11 + $0x7c] sm:$0xf]
          %v4614 = vld [vmem:[%s12] sm:$0x1]
          %v4647 = vunpack.c.l.b16 %v4582
          %v4648 = vunpack.c.l.b16 %v4583
          %v4649 = vunpack.c.l.b16 %v4584
          %v4650 = vunpack.c.l.b16 %v4585
          %v4651 = vunpack.c.l.b16 %v4586
          %v4652 = vunpack.c.l.b16 %v4587
          %v4653 = vunpack.c.l.b16 %v4588
          %v4654 = vunpack.c.l.b16 %v4589
          %v4655 = vunpack.c.l.b16 %v4590
          %v4656 = vunpack.c.l.b16 %v4591
          %v4657 = vunpack.c.l.b16 %v4592
          %v4658 = vunpack.c.l.b16 %v4593
          %v4659 = vunpack.c.l.b16 %v4594
          %v4660 = vunpack.c.l.b16 %v4595
          %v4661 = vunpack.c.l.b16 %v4596
          %v4662 = vunpack.c.l.b16 %v4597
          %v4663 = vunpack.c.l.b16 %v4598
          %v4664 = vunpack.c.l.b16 %v4599
          %v4665 = vunpack.c.l.b16 %v4600
          %v4666 = vunpack.c.l.b16 %v4601
          %v4667 = vunpack.c.l.b16 %v4602
          %v4668 = vunpack.c.l.b16 %v4603
          %v4669 = vunpack.c.l.b16 %v4604
          %v4670 = vunpack.c.l.b16 %v4605
          %v4671 = vunpack.c.l.b16 %v4606
          %v4672 = vunpack.c.l.b16 %v4607
          %v4673 = vunpack.c.l.b16 %v4608
          %v4674 = vunpack.c.l.b16 %v4609
          %v4675 = vunpack.c.l.b16 %v4610
          %v4676 = vunpack.c.l.b16 %v4611
          %v4677 = vunpack.c.l.b16 %v4612
          %v4678 = vunpack.c.l.b16 %v4613
          %v4679 = vpack.c.b16 %v4648, %v4647
          %v4680 = vpack.c.b16 %v4650, %v4649
          %v4681 = vpack.c.b16 %v4652, %v4651
          %v4682 = vpack.c.b16 %v4654, %v4653
          %v4683 = vpack.c.b16 %v4656, %v4655
          %v4684 = vpack.c.b16 %v4658, %v4657
          %v4685 = vpack.c.b16 %v4660, %v4659
          %v4686 = vpack.c.b16 %v4662, %v4661
          %v4687 = vpack.c.b16 %v4664, %v4663
          %v4688 = vpack.c.b16 %v4666, %v4665
          %v4689 = vpack.c.b16 %v4668, %v4667
          %v4690 = vpack.c.b16 %v4670, %v4669
          %v4691 = vpack.c.b16 %v4672, %v4671
          %v4692 = vpack.c.b16 %v4674, %v4673
          %v4693 = vpack.c.b16 %v4676, %v4675
          %v4694 = vpack.c.b16 %v4678, %v4677
          %4711 = vmatprep.subr.bf16.mxu0 0
          %4712 = vmatpush1.bf16.msra.mxu0 %v4686
          %4713 = vmatprep.subr.bf16.mxu0 0
          %4714 = vmatpush1.bf16.msra.mxu0 %v4685
          %4715 = vmatprep.subr.bf16.mxu0 0
          %4716 = vmatpush1.bf16.msra.mxu0 %v4684
          %4717 = vmatprep.subr.bf16.mxu0 0
          %4718 = vmatpush1.bf16.msra.mxu0 %v4683
          %4719 = vmatprep.subr.bf16.mxu0 0
          %4720 = vmatpush1.bf16.msra.mxu0 %v4682
          %4721 = vmatprep.subr.bf16.mxu0 0
          %4722 = vmatpush1.bf16.msra.mxu0 %v4681
          %4723 = vmatprep.subr.bf16.mxu0 0
          %4724 = vmatpush1.bf16.msra.mxu0 %v4680
          %4725 = vmatprep.subr.bf16.mxu0 0
          %4726 = vmatpush1.bf16.msra.mxu0 %v4679
          %4727 = vmatprep.subr.bf16.mxu0 0
          %4728 = vmatpush2.bf16.msra.mxu0 %v4694
          %4729 = vmatprep.subr.bf16.mxu0 0
          %4730 = vmatpush2.bf16.msra.mxu0 %v4693
          %4731 = vmatprep.subr.bf16.mxu0 0
          %4732 = vmatpush2.bf16.msra.mxu0 %v4692
          %4733 = vmatprep.subr.bf16.mxu0 0
          %4734 = vmatpush2.bf16.msra.mxu0 %v4691
          %4735 = vmatprep.subr.bf16.mxu0 0
          %4736 = vmatpush2.bf16.msra.mxu0 %v4690
          %4737 = vmatprep.subr.bf16.mxu0 0
          %4738 = vmatpush2.bf16.msra.mxu0 %v4689
          %4739 = vmatprep.subr.bf16.mxu0 0
          %4740 = vmatpush2.bf16.msra.mxu0 %v4688
          %4741 = vmatprep.subr.bf16.mxu0 0
          %4742 = vmatpush2.bf16.msra.mxu0 %v4687
          %4743 = vmatprep.mubr.bf16.mxu0 %v4581
          %4744 = vmatmul.mubr.bf16.gmra.mxu0 %v4580
          %v4745 = vpop.f32.mrf.mxu0
          %v4746 = vadd.f32 %v4614, %v4745
          %v4747 = vpop.f32.mrf.mxu0
          %v4748 = vpop.f32.mrf.mxu0
          %v4749 = vpop.f32.mrf.mxu0
          %4750 = vdwg.mxu0
          %vm4751 = vcmask 65536
          %4752 = vst.msk [vmem:[%s499] sm:$0x1] %vm4751, %v4746
        $region92: #{tpu_custom_call.1} parent=71 // pred_fallthru
          _
        %s4753 = sand.u32 %s329, 1
        %s4754 = scalar_lea.sflag [#allocation5], %s4753
        %s4755 = sand.u32 %s329, 1
        %s4756 = scalar_lea.vmem [#allocation9], %s4755
        // Predicated region
        $region93: #{tpu_custom_call.1} parent=71 // pred_check
          %p4757 = pneg %p339
        $region94: #{tpu_custom_call.1} parent=71 // pred_check_branch
          %4759 = sbr.rel (%p4757) target = $region96
        $region95: #{tpu_custom_call.1} parent=71 // pred_region
          %s4761 = ssub.s32 16, 16
          %4762 = vsyncadd %s4754, %s4761
          %s4763 = smul.addr %s33, 16
          %s4764 = scalar_lea.hbm %s13, %s4763
          %s4766 = sshll.u32 %s4756, 4
          %s4767 = int_to_ptr.vmem [resolvable:$true] %s4766
          %4769 = dma.vmem_to_hbm [thread:$0]  %s4767, 16, %s4764, %s4754
        $region96: #{tpu_custom_call.1} parent=71 // pred_fallthru
          _
      $region72: #{tpu_custom_call.1} parent=5 // pred_fallthru
        _
      %p4770 = scmp.le.s32.totalorder 2, %s24
      // Predicated region
      $region97: #{tpu_custom_call.1} parent=5 // pred_check
        %p4771 = pneg %p4770
      $region98: #{tpu_custom_call.1} parent=5 // pred_check_branch
        %4773 = sbr.rel (%p4771) target = $region100
      $region99: #{tpu_custom_call.1} parent=5 // pred_region
        %s4774 = ssub.s32 %s24, 2
        // Predicated region
        $region101: #{tpu_custom_call.1} parent=99 // pred_check
          %p4775 = pneg %p345
        $region102: #{tpu_custom_call.1} parent=99 // pred_check_branch
          %4777 = sbr.rel (%p4775) target = $region104
        $region103: #{tpu_custom_call.1} parent=99 // pred_region
          %s4778 = sand.u32 %s330, 1
          %s4779 = scalar_lea.sflag [#allocation5], %s4778
          %s4780 = sand.u32 %s330, 1
          %s4781 = scalar_lea.vmem [#allocation9], %s4780
          %4782 = dma.done %s4779, 16
        $region104: #{tpu_custom_call.1} parent=99 // pred_fallthru
          _
      $region100: #{tpu_custom_call.1} parent=5 // pred_fallthru
        _
    $region6: #{tpu_custom_call.1} parent=1 // loop_footer
      %s28 = sadd.s32 1, %s24
    $region7: #{tpu_custom_call.1} parent=1 // loop_footer_branch
      %23 = sbr.rel target = $region3
    $region8: #{tpu_custom_call.1} parent=1 // loop_exit
      _
    %4783 = vsyncpa [#allocation4], 1
    %s4784 = scalar_lea.sflag [#allocation4], 1
    %4785 = vsyncpa %s4784, 1
    %4786 = vsyncpa [#allocation7], 1
    %4787 = vsyncpa [#allocation5], 1
    %s4788 = scalar_lea.sflag [#allocation5], 1
    %4789 = vsyncpa %s4788, 1

</llo_original>
